<compile_context>
chip_gen: v6e
topology: v6e:2x2x1
jax: 0.10.0
libtpu: 0.0.40
codegen_flags: <defaults>
</compile_context>

<pallas_src>
import jax
import jax.numpy as jnp
from jax.experimental import pallas as pl
from jax.experimental.pallas import tpu as pltpu


def _round_up(x, m):
    return (x + m - 1) // m * m


def _row_spec(rows, cols):
    # Block that marches over rows with the 1-D grid.
    return pl.BlockSpec((rows, cols), lambda i: (i, 0))


def _const_spec(rows, cols):
    # Constant operand: same block every grid step, single-buffered.
    return pl.BlockSpec((rows, cols), lambda i: (0, 0),
                        pipeline_mode=pl.Buffered(1))


# ----------------------- gate projection (hoisted x @ W_ih) -----------------

def _proj_first_kernel(x_ref, wf_ref, wb_ref, bf_ref, bb_ref, gf_ref, gb_ref):
    x = x_ref[...]
    gf_ref[...] = (jnp.dot(x, wf_ref[...], preferred_element_type=jnp.float32)
                   + bf_ref[...]).astype(gf_ref.dtype)
    gb_ref[...] = (jnp.dot(x, wb_ref[...], preferred_element_type=jnp.float32)
                   + bb_ref[...]).astype(gb_ref.dtype)


def _proj_deep_kernel(xf_ref, xb_ref, wff_ref, wfb_ref, wbf_ref, wbb_ref,
                      bf_ref, bb_ref, gf_ref, gb_ref):
    xf = xf_ref[...]
    xb = xb_ref[...]
    gf_ref[...] = (jnp.dot(xf, wff_ref[...], preferred_element_type=jnp.float32)
                   + jnp.dot(xb, wfb_ref[...], preferred_element_type=jnp.float32)
                   + bf_ref[...]).astype(gf_ref.dtype)
    gb_ref[...] = (jnp.dot(xf, wbf_ref[...], preferred_element_type=jnp.float32)
                   + jnp.dot(xb, wbb_ref[...], preferred_element_type=jnp.float32)
                   + bb_ref[...]).astype(gb_ref.dtype)


def gates_proj_first(x2d, wf, wb, bf, bb, *, row_tile):
    N, D = x2d.shape
    G = wf.shape[1]
    return pl.pallas_call(
        _proj_first_kernel,
        out_shape=(jax.ShapeDtypeStruct((N, G), jnp.float32),
                   jax.ShapeDtypeStruct((N, G), jnp.float32)),
        grid_spec=pltpu.PrefetchScalarGridSpec(
            num_scalar_prefetch=0,
            grid=(N // row_tile,),
            in_specs=[_row_spec(row_tile, D),
                      _const_spec(D, G), _const_spec(D, G),
                      _const_spec(1, G), _const_spec(1, G)],
            out_specs=[_row_spec(row_tile, G), _row_spec(row_tile, G)],
        ),
        compiler_params=pltpu.CompilerParams(dimension_semantics=("parallel",)),
    )(x2d, wf, wb, bf, bb)


def gates_proj_deep(xf2d, xb2d, wff, wfb, wbf, wbb, bf, bb, *, row_tile):
    N, H = xf2d.shape
    G = wff.shape[1]
    return pl.pallas_call(
        _proj_deep_kernel,
        out_shape=(jax.ShapeDtypeStruct((N, G), jnp.float32),
                   jax.ShapeDtypeStruct((N, G), jnp.float32)),
        grid_spec=pltpu.PrefetchScalarGridSpec(
            num_scalar_prefetch=0,
            grid=(N // row_tile,),
            in_specs=[_row_spec(row_tile, H), _row_spec(row_tile, H),
                      _const_spec(H, G), _const_spec(H, G),
                      _const_spec(H, G), _const_spec(H, G),
                      _const_spec(1, G), _const_spec(1, G)],
            out_specs=[_row_spec(row_tile, G), _row_spec(row_tile, G)],
        ),
        compiler_params=pltpu.CompilerParams(dimension_semantics=("parallel",)),
    )(xf2d, xb2d, wff, wfb, wbf, wbb, bf, bb)


# --------------------- fused bidirectional recurrence -----------------------

def _bilstm_kernel(len_ref, gf_ref, gb_ref, whf_ref, whb_ref,
                   outf_ref, outb_ref, hf_sc, cf_sc, hb_sc, cb_sc):
    Tt = gf_ref.shape[0]
    H = hf_sc.shape[1]
    i = pl.program_id(0)
    nb = pl.num_programs(0)

    @pl.when(i == 0)
    def _():
        hf_sc[...] = jnp.zeros_like(hf_sc)
        cf_sc[...] = jnp.zeros_like(cf_sc)
        hb_sc[...] = jnp.zeros_like(hb_sc)
        cb_sc[...] = jnp.zeros_like(cb_sc)

    lengths = len_ref[...]          # (B, 1) int32, valid timesteps per row
    whf = whf_ref[...]              # (H, 4H)
    whb = whb_ref[...]              # (H, 4H)

    def cell(pre, h_prev, c_prev, w_hh):
        gates = pre + jnp.dot(h_prev, w_hh, preferred_element_type=jnp.float32)
        i_g = jax.nn.sigmoid(gates[:, 0 * H:1 * H])
        f_g = jax.nn.sigmoid(gates[:, 1 * H:2 * H])
        g_g = jnp.tanh(gates[:, 2 * H:3 * H])
        o_g = jax.nn.sigmoid(gates[:, 3 * H:4 * H])
        c_new = f_g * c_prev + i_g * g_g
        h_new = o_g * jnp.tanh(c_new)
        return h_new, c_new

    def step(s, carry):
        # ---- forward direction, global time t_f = i*Tt + s ----
        t_f = i * Tt + s
        h_new, c_new = cell(gf_ref[s], hf_sc[...], cf_sc[...], whf)
        m_f = t_f < lengths                              # (B, 1) bool
        hf_sc[...] = jnp.where(m_f, h_new, hf_sc[...])
        cf_sc[...] = jnp.where(m_f, c_new, cf_sc[...])
        outf_ref[s] = jnp.where(m_f, h_new, 0.0).astype(outf_ref.dtype)

        # ---- backward direction, global time t_b = T-1 - (i*Tt + s) ----
        sb = Tt - 1 - s
        t_b = (nb - 1 - i) * Tt + sb
        h_nb, c_nb = cell(gb_ref[sb], hb_sc[...], cb_sc[...], whb)
        m_b = t_b < lengths
        hb_sc[...] = jnp.where(m_b, h_nb, hb_sc[...])
        cb_sc[...] = jnp.where(m_b, c_nb, cb_sc[...])
        outb_ref[sb] = jnp.where(m_b, h_nb, 0.0).astype(outb_ref.dtype)
        return carry

    jax.lax.fori_loop(0, Tt, step, 0, unroll=True)


def bilstm_layer(lengths_col, gates_f, gates_b, w_hh_f, w_hh_b, *, tt):
    """Fused fwd+bwd recurrence. gates_*: (T, B, 4H) f32 -> two (T, B, H)."""
    T, B, G = gates_f.shape
    H = w_hh_f.shape[0]
    nb = T // tt
    return pl.pallas_call(
        _bilstm_kernel,
        out_shape=(jax.ShapeDtypeStruct((T, B, H), jnp.float32),
                   jax.ShapeDtypeStruct((T, B, H), jnp.float32)),
        grid_spec=pltpu.PrefetchScalarGridSpec(
            num_scalar_prefetch=0,
            grid=(nb,),
            in_specs=[
                _const_spec(B, 1),                                   # lengths
                pl.BlockSpec((tt, B, G), lambda i: (i, 0, 0)),       # gates fwd
                pl.BlockSpec((tt, B, G), lambda i: (nb - 1 - i, 0, 0)),  # gates bwd
                pl.BlockSpec((H, G), lambda i: (0, 0),
                             pipeline_mode=pl.Buffered(1)),          # W_hh fwd
                pl.BlockSpec((H, G), lambda i: (0, 0),
                             pipeline_mode=pl.Buffered(1)),          # W_hh bwd
            ],
            out_specs=[
                pl.BlockSpec((tt, B, H), lambda i: (i, 0, 0)),
                pl.BlockSpec((tt, B, H), lambda i: (nb - 1 - i, 0, 0)),
            ],
            scratch_shapes=[pltpu.VMEM((B, H), jnp.float32),   # h fwd
                            pltpu.VMEM((B, H), jnp.float32),   # c fwd
                            pltpu.VMEM((B, H), jnp.float32),   # h bwd
                            pltpu.VMEM((B, H), jnp.float32)],  # c bwd
        ),
        compiler_params=pltpu.CompilerParams(
            dimension_semantics=("arbitrary",)),
    )(lengths_col, gates_f, gates_b, w_hh_f, w_hh_b)


# ----------------------------- linear head ----------------------------------

def _head_kernel(xf_ref, xb_ref, wf_ref, wb_ref, b_ref, o_ref):
    o_ref[...] = (jnp.dot(xf_ref[...], wf_ref[...], preferred_element_type=jnp.float32)
                  + jnp.dot(xb_ref[...], wb_ref[...], preferred_element_type=jnp.float32)
                  + b_ref[...]).astype(o_ref.dtype)


def linear_head(xf2d, xb2d, wf, wb, b, *, row_tile):
    N, H = xf2d.shape
    O = wf.shape[1]
    return pl.pallas_call(
        _head_kernel,
        out_shape=jax.ShapeDtypeStruct((N, O), jnp.float32),
        grid_spec=pltpu.PrefetchScalarGridSpec(
            num_scalar_prefetch=0,
            grid=(N // row_tile,),
            in_specs=[_row_spec(row_tile, H), _row_spec(row_tile, H),
                      _const_spec(H, O), _const_spec(H, O), _const_spec(1, O)],
            out_specs=_row_spec(row_tile, O),
        ),
        compiler_params=pltpu.CompilerParams(dimension_semantics=("parallel",)),
    )(xf2d, xb2d, wf, wb, b)


# ----------------------------- params & forward ------------------------------

def init_params(key, vocab, emb_dim, hidden, num_layers, out_dim):
    params = {}
    key, k_emb = jax.random.split(key)
    # nn.Embedding default init: N(0, 1).
    # TODO(synk): reference loads pretrained ChineseFastText.pth; synthetic init here.
    params["embedding"] = jax.random.normal(k_emb, (vocab, emb_dim), jnp.float32)

    stdv = 1.0 / float(jnp.sqrt(jnp.float32(hidden)))
    lstm = []
    for layer in range(num_layers):
        in_dim = emb_dim if layer == 0 else 2 * hidden
        dirs = []
        for _d in range(2):  # forward, backward
            key, k1, k2, k3, k4 = jax.random.split(key, 5)
            w_ih = jax.random.uniform(k1, (in_dim, 4 * hidden), jnp.float32, -stdv, stdv)
            w_hh = jax.random.uniform(k2, (hidden, 4 * hidden), jnp.float32, -stdv, stdv)
            b_ih = jax.random.uniform(k3, (4 * hidden,), jnp.float32, -stdv, stdv)
            b_hh = jax.random.uniform(k4, (4 * hidden,), jnp.float32, -stdv, stdv)
            dirs.append((w_ih, w_hh, (b_ih + b_hh)[None, :]))
        lstm.append(dirs)
    params["lstm"] = lstm

    key, k1, k2 = jax.random.split(key, 3)
    bound = 1.0 / float(jnp.sqrt(jnp.float32(2 * hidden)))
    params["lin_w"] = jax.random.uniform(k1, (2 * hidden, out_dim), jnp.float32, -bound, bound)
    params["lin_b"] = jax.random.uniform(k2, (1, out_dim), jnp.float32, -bound, bound)
    return params


def bi_lstm_forward(params, tokens, lengths):
    """tokens: (B, T) int32; lengths: (B,) int32 (descending, as
    pack_padded_sequence(enforce_sorted=True) requires).  Returns (B, T, O)."""
    B, T = tokens.shape
    H = params["lstm"][0][0][1].shape[0]          # w_hh: (H, 4H)
    O = params["lin_w"].shape[1]

    # Embedding lookup = pure gather -> JAX glue (no matmul hot path).
    emb = jnp.take(params["embedding"], tokens, axis=0)          # (B, T, E)
    x = jnp.transpose(emb, (1, 0, 2)).astype(jnp.float32)        # (T, B, E)

    # Pad batch to the f32 sublane granule and T to a multiple of the time block.
    B_pad = _round_up(B, 8)
    tt = T if T <= 16 else 16
    T_pad = _round_up(T, tt)
    if (T_pad, B_pad) != (T, B):
        x = jnp.pad(x, ((0, T_pad - T), (0, B_pad - B), (0, 0)))
    lengths_col = jnp.pad(lengths.astype(jnp.int32), (0, B_pad - B)).reshape(B_pad, 1)

    N = T_pad * B_pad
    row_tile = B_pad * tt      # always divides N

    cur_f = cur_b = None
    for li, ((wf_ih, wf_hh, bf), (wb_ih, wb_hh, bb)) in enumerate(params["lstm"]):
        if li == 0:
            gf2d, gb2d = gates_proj_first(x.reshape(N, -1), wf_ih, wb_ih, bf, bb,
                                          row_tile=row_tile)
        else:
            gf2d, gb2d = gates_proj_deep(cur_f.reshape(N, H), cur_b.reshape(N, H),
                                         wf_ih[:H], wf_ih[H:], wb_ih[:H], wb_ih[H:],
                                         bf, bb, row_tile=row_tile)
        gf = gf2d.reshape(T_pad, B_pad, 4 * H)
        gb = gb2d.reshape(T_pad, B_pad, 4 * H)
        cur_f, cur_b = bilstm_layer(lengths_col, gf, gb, wf_hh, wb_hh, tt=tt)

    lin_w = params["lin_w"]
    y2d = linear_head(cur_f.reshape(N, H), cur_b.reshape(N, H),
                      lin_w[:H], lin_w[H:], params["lin_b"], row_tile=row_tile)
    y = y2d.reshape(T_pad, B_pad, O)[:T, :B]
    return jnp.transpose(y, (1, 0, 2))                           # (B, T, O) batch-first


if __name__ == "__main__":
    vocab, emb_dim, hidden, num_layers, out_dim = 50, 32, 32, 2, 8
    B, T = 2, 8

    params = init_params(jax.random.PRNGKey(0), vocab, emb_dim, hidden,
                         num_layers, out_dim)

    tokens = jax.random.randint(jax.random.PRNGKey(1), (B, T), 0, vocab,
                                dtype=jnp.int32)
    lengths = jnp.array([8, 5], dtype=jnp.int32)   # descending (sorted) lengths

    out = jax.jit(bi_lstm_forward)(params, tokens, lengths)
    jax.block_until_ready(out)
    assert out.shape == (B, T, out_dim), out.shape
    print("KERNEL_OK")
</pallas_src>

<mosaic_0001>
module attributes {stable_mosaic.version = 11 : i64} {
  func.func @_proj_first_kernel(%arg0: i32, %arg1: memref<64x32xf32, #tpu.memory_space<vmem>>, %arg2: memref<32x128xf32, #tpu.memory_space<vmem>>, %arg3: memref<32x128xf32, #tpu.memory_space<vmem>>, %arg4: memref<1x128xf32, #tpu.memory_space<vmem>>, %arg5: memref<1x128xf32, #tpu.memory_space<vmem>>, %arg6: memref<64x128xf32, #tpu.memory_space<vmem>>, %arg7: memref<64x128xf32, #tpu.memory_space<vmem>>) attributes {dimension_semantics = [#tpu.dimension_semantics<parallel>], iteration_bounds = array<i64: 1>, scalar_prefetch = 0 : i64, scratch_operands = 0 : i64, tpu.core_type = #tpu.core_type<tc>, window_params = [{transform_indices = @transform_0, window_bounds = array<i64: 64, 32>}, {pipeline_mode = #tpu.pipeline_mode<synchronous>, transform_indices = @transform_1, window_bounds = array<i64: 32, 128>}, {pipeline_mode = #tpu.pipeline_mode<synchronous>, transform_indices = @transform_2, window_bounds = array<i64: 32, 128>}, {pipeline_mode = #tpu.pipeline_mode<synchronous>, transform_indices = @transform_3, window_bounds = array<i64: 1, 128>}, {pipeline_mode = #tpu.pipeline_mode<synchronous>, transform_indices = @transform_4, window_bounds = array<i64: 1, 128>}, {transform_indices = @transform_5, window_bounds = array<i64: 64, 128>}, {transform_indices = @transform_6, window_bounds = array<i64: 64, 128>}]} {
    %c0 = arith.constant 0 : index
    %c0_0 = arith.constant 0 : index
    %0 = vector.load %arg1[%c0, %c0_0] : memref<64x32xf32, #tpu.memory_space<vmem>>, vector<64x32xf32>
    %c0_1 = arith.constant 0 : index
    %c0_2 = arith.constant 0 : index
    %1 = vector.load %arg2[%c0_1, %c0_2] : memref<32x128xf32, #tpu.memory_space<vmem>>, vector<32x128xf32>
    %cst = arith.constant dense<0.000000e+00> : vector<64x128xf32>
    %2 = tpu.matmul %0, %1, %cst {dimension_numbers = #tpu.dot_dimension_numbers<[1], [0], [0], [1], [0, 0, 1, 1], [], []>} : vector<64x32xf32>, vector<32x128xf32>, vector<64x128xf32> -> vector<64x128xf32>
    %c0_3 = arith.constant 0 : index
    %c0_4 = arith.constant 0 : index
    %3 = vector.load %arg4[%c0_3, %c0_4] : memref<1x128xf32, #tpu.memory_space<vmem>>, vector<1x128xf32>
    %4 = vector.broadcast %3 : vector<1x128xf32> to vector<64x128xf32>
    %5 = arith.addf %2, %4 : vector<64x128xf32>
    %c0_5 = arith.constant 0 : index
    %c0_6 = arith.constant 0 : index
    %6 = vector.load %arg6[%c0_5, %c0_6] : memref<64x128xf32, #tpu.memory_space<vmem>>, vector<64x128xf32>
    tpu.vector_store %arg6[%c0_5, %c0_6], %5 {strides = array<i32>} : memref<64x128xf32, #tpu.memory_space<vmem>>, vector<64x128xf32>,
    %c0_7 = arith.constant 0 : index
    %c0_8 = arith.constant 0 : index
    %7 = vector.load %arg3[%c0_7, %c0_8] : memref<32x128xf32, #tpu.memory_space<vmem>>, vector<32x128xf32>
    %cst_9 = arith.constant dense<0.000000e+00> : vector<64x128xf32>
    %8 = tpu.matmul %0, %7, %cst_9 {dimension_numbers = #tpu.dot_dimension_numbers<[1], [0], [0], [1], [0, 0, 1, 1], [], []>} : vector<64x32xf32>, vector<32x128xf32>, vector<64x128xf32> -> vector<64x128xf32>
    %c0_10 = arith.constant 0 : index
    %c0_11 = arith.constant 0 : index
    %9 = vector.load %arg5[%c0_10, %c0_11] : memref<1x128xf32, #tpu.memory_space<vmem>>, vector<1x128xf32>
    %10 = vector.broadcast %9 : vector<1x128xf32> to vector<64x128xf32>
    %11 = arith.addf %8, %10 : vector<64x128xf32>
    %c0_12 = arith.constant 0 : index
    %c0_13 = arith.constant 0 : index
    %12 = vector.load %arg7[%c0_12, %c0_13] : memref<64x128xf32, #tpu.memory_space<vmem>>, vector<64x128xf32>
    tpu.vector_store %arg7[%c0_12, %c0_13], %11 {strides = array<i32>} : memref<64x128xf32, #tpu.memory_space<vmem>>, vector<64x128xf32>,
    return
  }
  func.func @transform_0(%arg0: i32) -> (i32, i32) {
    %c0_i32 = arith.constant 0 : i32
    %c0_i32_0 = arith.constant 0 : i32
    return %arg0, %c0_i32 : i32, i32
  }
  func.func @transform_1(%arg0: i32) -> (i32, i32) {
    %c0_i32 = arith.constant 0 : i32
    %c0_i32_0 = arith.constant 0 : i32
    %c0_i32_1 = arith.constant 0 : i32
    return %c0_i32, %c0_i32_0 : i32, i32
  }
  func.func @transform_2(%arg0: i32) -> (i32, i32) {
    %c0_i32 = arith.constant 0 : i32
    %c0_i32_0 = arith.constant 0 : i32
    %c0_i32_1 = arith.constant 0 : i32
    return %c0_i32, %c0_i32_0 : i32, i32
  }
  func.func @transform_3(%arg0: i32) -> (i32, i32) {
    %c0_i32 = arith.constant 0 : i32
    %c0_i32_0 = arith.constant 0 : i32
    %c0_i32_1 = arith.constant 0 : i32
    return %c0_i32, %c0_i32_0 : i32, i32
  }
  func.func @transform_4(%arg0: i32) -> (i32, i32) {
    %c0_i32 = arith.constant 0 : i32
    %c0_i32_0 = arith.constant 0 : i32
    %c0_i32_1 = arith.constant 0 : i32
    return %c0_i32, %c0_i32_0 : i32, i32
  }
  func.func @transform_5(%arg0: i32) -> (i32, i32) {
    %c0_i32 = arith.constant 0 : i32
    %c0_i32_0 = arith.constant 0 : i32
    return %arg0, %c0_i32 : i32, i32
  }
  func.func @transform_6(%arg0: i32) -> (i32, i32) {
    %c0_i32 = arith.constant 0 : i32
    %c0_i32_0 = arith.constant 0 : i32
    return %arg0, %c0_i32 : i32, i32
  }
}

module attributes {stable_mosaic.version = 11 : i64} {
  func.func @_proj_deep_kernel(%arg0: i32, %arg1: memref<64x32xf32, #tpu.memory_space<vmem>>, %arg2: memref<64x32xf32, #tpu.memory_space<vmem>>, %arg3: memref<32x128xf32, #tpu.memory_space<vmem>>, %arg4: memref<32x128xf32, #tpu.memory_space<vmem>>, %arg5: memref<32x128xf32, #tpu.memory_space<vmem>>, %arg6: memref<32x128xf32, #tpu.memory_space<vmem>>, %arg7: memref<1x128xf32, #tpu.memory_space<vmem>>, %arg8: memref<1x128xf32, #tpu.memory_space<vmem>>, %arg9: memref<64x128xf32, #tpu.memory_space<vmem>>, %arg10: memref<64x128xf32, #tpu.memory_space<vmem>>) attributes {dimension_semantics = [#tpu.dimension_semantics<parallel>], iteration_bounds = array<i64: 1>, scalar_prefetch = 0 : i64, scratch_operands = 0 : i64, tpu.core_type = #tpu.core_type<tc>, window_params = [{transform_indices = @transform_0, window_bounds = array<i64: 64, 32>}, {transform_indices = @transform_1, window_bounds = array<i64: 64, 32>}, {pipeline_mode = #tpu.pipeline_mode<synchronous>, transform_indices = @transform_2, window_bounds = array<i64: 32, 128>}, {pipeline_mode = #tpu.pipeline_mode<synchronous>, transform_indices = @transform_3, window_bounds = array<i64: 32, 128>}, {pipeline_mode = #tpu.pipeline_mode<synchronous>, transform_indices = @transform_4, window_bounds = array<i64: 32, 128>}, {pipeline_mode = #tpu.pipeline_mode<synchronous>, transform_indices = @transform_5, window_bounds = array<i64: 32, 128>}, {pipeline_mode = #tpu.pipeline_mode<synchronous>, transform_indices = @transform_6, window_bounds = array<i64: 1, 128>}, {pipeline_mode = #tpu.pipeline_mode<synchronous>, transform_indices = @transform_7, window_bounds = array<i64: 1, 128>}, {transform_indices = @transform_8, window_bounds = array<i64: 64, 128>}, {transform_indices = @transform_9, window_bounds = array<i64: 64, 128>}]} {
    %c0 = arith.constant 0 : index
    %c0_0 = arith.constant 0 : index
    %0 = vector.load %arg1[%c0, %c0_0] : memref<64x32xf32, #tpu.memory_space<vmem>>, vector<64x32xf32>
    %c0_1 = arith.constant 0 : index
    %c0_2 = arith.constant 0 : index
    %1 = vector.load %arg2[%c0_1, %c0_2] : memref<64x32xf32, #tpu.memory_space<vmem>>, vector<64x32xf32>
    %c0_3 = arith.constant 0 : index
    %c0_4 = arith.constant 0 : index
    %2 = vector.load %arg3[%c0_3, %c0_4] : memref<32x128xf32, #tpu.memory_space<vmem>>, vector<32x128xf32>
    %cst = arith.constant dense<0.000000e+00> : vector<64x128xf32>
    %3 = tpu.matmul %0, %2, %cst {dimension_numbers = #tpu.dot_dimension_numbers<[1], [0], [0], [1], [0, 0, 1, 1], [], []>} : vector<64x32xf32>, vector<32x128xf32>, vector<64x128xf32> -> vector<64x128xf32>
    %c0_5 = arith.constant 0 : index
    %c0_6 = arith.constant 0 : index
    %4 = vector.load %arg4[%c0_5, %c0_6] : memref<32x128xf32, #tpu.memory_space<vmem>>, vector<32x128xf32>
    %cst_7 = arith.constant dense<0.000000e+00> : vector<64x128xf32>
    %5 = tpu.matmul %1, %4, %cst_7 {dimension_numbers = #tpu.dot_dimension_numbers<[1], [0], [0], [1], [0, 0, 1, 1], [], []>} : vector<64x32xf32>, vector<32x128xf32>, vector<64x128xf32> -> vector<64x128xf32>
    %6 = arith.addf %3, %5 : vector<64x128xf32>
    %c0_8 = arith.constant 0 : index
    %c0_9 = arith.constant 0 : index
    %7 = vector.load %arg7[%c0_8, %c0_9] : memref<1x128xf32, #tpu.memory_space<vmem>>, vector<1x128xf32>
    %8 = vector.broadcast %7 : vector<1x128xf32> to vector<64x128xf32>
    %9 = arith.addf %6, %8 : vector<64x128xf32>
    %c0_10 = arith.constant 0 : index
    %c0_11 = arith.constant 0 : index
    %10 = vector.load %arg9[%c0_10, %c0_11] : memref<64x128xf32, #tpu.memory_space<vmem>>, vector<64x128xf32>
    tpu.vector_store %arg9[%c0_10, %c0_11], %9 {strides = array<i32>} : memref<64x128xf32, #tpu.memory_space<vmem>>, vector<64x128xf32>,
    %c0_12 = arith.constant 0 : index
    %c0_13 = arith.constant 0 : index
    %11 = vector.load %arg5[%c0_12, %c0_13] : memref<32x128xf32, #tpu.memory_space<vmem>>, vector<32x128xf32>
    %cst_14 = arith.constant dense<0.000000e+00> : vector<64x128xf32>
    %12 = tpu.matmul %0, %11, %cst_14 {dimension_numbers = #tpu.dot_dimension_numbers<[1], [0], [0], [1], [0, 0, 1, 1], [], []>} : vector<64x32xf32>, vector<32x128xf32>, vector<64x128xf32> -> vector<64x128xf32>
    %c0_15 = arith.constant 0 : index
    %c0_16 = arith.constant 0 : index
    %13 = vector.load %arg6[%c0_15, %c0_16] : memref<32x128xf32, #tpu.memory_space<vmem>>, vector<32x128xf32>
    %cst_17 = arith.constant dense<0.000000e+00> : vector<64x128xf32>
    %14 = tpu.matmul %1, %13, %cst_17 {dimension_numbers = #tpu.dot_dimension_numbers<[1], [0], [0], [1], [0, 0, 1, 1], [], []>} : vector<64x32xf32>, vector<32x128xf32>, vector<64x128xf32> -> vector<64x128xf32>
    %15 = arith.addf %12, %14 : vector<64x128xf32>
    %c0_18 = arith.constant 0 : index
    %c0_19 = arith.constant 0 : index
    %16 = vector.load %arg8[%c0_18, %c0_19] : memref<1x128xf32, #tpu.memory_space<vmem>>, vector<1x128xf32>
    %17 = vector.broadcast %16 : vector<1x128xf32> to vector<64x128xf32>
    %18 = arith.addf %15, %17 : vector<64x128xf32>
    %c0_20 = arith.constant 0 : index
    %c0_21 = arith.constant 0 : index
    %19 = vector.load %arg10[%c0_20, %c0_21] : memref<64x128xf32, #tpu.memory_space<vmem>>, vector<64x128xf32>
    tpu.vector_store %arg10[%c0_20, %c0_21], %18 {strides = array<i32>} : memref<64x128xf32, #tpu.memory_space<vmem>>, vector<64x128xf32>,
    return
  }
  func.func @transform_0(%arg0: i32) -> (i32, i32) {
    %c0_i32 = arith.constant 0 : i32
    %c0_i32_0 = arith.constant 0 : i32
    return %arg0, %c0_i32 : i32, i32
  }
  func.func @transform_1(%arg0: i32) -> (i32, i32) {
    %c0_i32 = arith.constant 0 : i32
    %c0_i32_0 = arith.constant 0 : i32
    return %arg0, %c0_i32 : i32, i32
  }
  func.func @transform_2(%arg0: i32) -> (i32, i32) {
    %c0_i32 = arith.constant 0 : i32
    %c0_i32_0 = arith.constant 0 : i32
    %c0_i32_1 = arith.constant 0 : i32
    return %c0_i32, %c0_i32_0 : i32, i32
  }
  func.func @transform_3(%arg0: i32) -> (i32, i32) {
    %c0_i32 = arith.constant 0 : i32
    %c0_i32_0 = arith.constant 0 : i32
    %c0_i32_1 = arith.constant 0 : i32
    return %c0_i32, %c0_i32_0 : i32, i32
  }
  func.func @transform_4(%arg0: i32) -> (i32, i32) {
    %c0_i32 = arith.constant 0 : i32
    %c0_i32_0 = arith.constant 0 : i32
    %c0_i32_1 = arith.constant 0 : i32
    return %c0_i32, %c0_i32_0 : i32, i32
  }
  func.func @transform_5(%arg0: i32) -> (i32, i32) {
    %c0_i32 = arith.constant 0 : i32
    %c0_i32_0 = arith.constant 0 : i32
    %c0_i32_1 = arith.constant 0 : i32
    return %c0_i32, %c0_i32_0 : i32, i32
  }
  func.func @transform_6(%arg0: i32) -> (i32, i32) {
    %c0_i32 = arith.constant 0 : i32
    %c0_i32_0 = arith.constant 0 : i32
    %c0_i32_1 = arith.constant 0 : i32
    return %c0_i32, %c0_i32_0 : i32, i32
  }
  func.func @transform_7(%arg0: i32) -> (i32, i32) {
    %c0_i32 = arith.constant 0 : i32
    %c0_i32_0 = arith.constant 0 : i32
    %c0_i32_1 = arith.constant 0 : i32
    return %c0_i32, %c0_i32_0 : i32, i32
  }
  func.func @transform_8(%arg0: i32) -> (i32, i32) {
    %c0_i32 = arith.constant 0 : i32
    %c0_i32_0 = arith.constant 0 : i32
    return %arg0, %c0_i32 : i32, i32
  }
  func.func @transform_9(%arg0: i32) -> (i32, i32) {
    %c0_i32 = arith.constant 0 : i32
    %c0_i32_0 = arith.constant 0 : i32
    return %arg0, %c0_i32 : i32, i32
  }
}

module attributes {stable_mosaic.version = 11 : i64} {
  func.func @_head_kernel(%arg0: i32, %arg1: memref<64x32xf32, #tpu.memory_space<vmem>>, %arg2: memref<64x32xf32, #tpu.memory_space<vmem>>, %arg3: memref<32x8xf32, #tpu.memory_space<vmem>>, %arg4: memref<32x8xf32, #tpu.memory_space<vmem>>, %arg5: memref<1x8xf32, #tpu.memory_space<vmem>>, %arg6: memref<64x8xf32, #tpu.memory_space<vmem>>) attributes {dimension_semantics = [#tpu.dimension_semantics<parallel>], iteration_bounds = array<i64: 1>, scalar_prefetch = 0 : i64, scratch_operands = 0 : i64, tpu.core_type = #tpu.core_type<tc>, window_params = [{transform_indices = @transform_0, window_bounds = array<i64: 64, 32>}, {transform_indices = @transform_1, window_bounds = array<i64: 64, 32>}, {pipeline_mode = #tpu.pipeline_mode<synchronous>, transform_indices = @transform_2, window_bounds = array<i64: 32, 8>}, {pipeline_mode = #tpu.pipeline_mode<synchronous>, transform_indices = @transform_3, window_bounds = array<i64: 32, 8>}, {pipeline_mode = #tpu.pipeline_mode<synchronous>, transform_indices = @transform_4, window_bounds = array<i64: 1, 8>}, {transform_indices = @transform_5, window_bounds = array<i64: 64, 8>}]} {
    %c0 = arith.constant 0 : index
    %c0_0 = arith.constant 0 : index
    %0 = vector.load %arg1[%c0, %c0_0] : memref<64x32xf32, #tpu.memory_space<vmem>>, vector<64x32xf32>
    %c0_1 = arith.constant 0 : index
    %c0_2 = arith.constant 0 : index
    %1 = vector.load %arg3[%c0_1, %c0_2] : memref<32x8xf32, #tpu.memory_space<vmem>>, vector<32x8xf32>
    %cst = arith.constant dense<0.000000e+00> : vector<64x8xf32>
    %2 = tpu.matmul %0, %1, %cst {dimension_numbers = #tpu.dot_dimension_numbers<[1], [0], [0], [1], [0, 0, 1, 1], [], []>} : vector<64x32xf32>, vector<32x8xf32>, vector<64x8xf32> -> vector<64x8xf32>
    %c0_3 = arith.constant 0 : index
    %c0_4 = arith.constant 0 : index
    %3 = vector.load %arg2[%c0_3, %c0_4] : memref<64x32xf32, #tpu.memory_space<vmem>>, vector<64x32xf32>
    %c0_5 = arith.constant 0 : index
    %c0_6 = arith.constant 0 : index
    %4 = vector.load %arg4[%c0_5, %c0_6] : memref<32x8xf32, #tpu.memory_space<vmem>>, vector<32x8xf32>
    %cst_7 = arith.constant dense<0.000000e+00> : vector<64x8xf32>
    %5 = tpu.matmul %3, %4, %cst_7 {dimension_numbers = #tpu.dot_dimension_numbers<[1], [0], [0], [1], [0, 0, 1, 1], [], []>} : vector<64x32xf32>, vector<32x8xf32>, vector<64x8xf32> -> vector<64x8xf32>
    %6 = arith.addf %2, %5 : vector<64x8xf32>
    %c0_8 = arith.constant 0 : index
    %c0_9 = arith.constant 0 : index
    %7 = vector.load %arg5[%c0_8, %c0_9] : memref<1x8xf32, #tpu.memory_space<vmem>>, vector<1x8xf32>
    %8 = vector.broadcast %7 : vector<1x8xf32> to vector<64x8xf32>
    %9 = arith.addf %6, %8 : vector<64x8xf32>
    %c0_10 = arith.constant 0 : index
    %c0_11 = arith.constant 0 : index
    %10 = vector.load %arg6[%c0_10, %c0_11] : memref<64x8xf32, #tpu.memory_space<vmem>>, vector<64x8xf32>
    tpu.vector_store %arg6[%c0_10, %c0_11], %9 {strides = array<i32>} : memref<64x8xf32, #tpu.memory_space<vmem>>, vector<64x8xf32>,
    return
  }
  func.func @transform_0(%arg0: i32) -> (i32, i32) {
    %c0_i32 = arith.constant 0 : i32
    %c0_i32_0 = arith.constant 0 : i32
    return %arg0, %c0_i32 : i32, i32
  }
  func.func @transform_1(%arg0: i32) -> (i32, i32) {
    %c0_i32 = arith.constant 0 : i32
    %c0_i32_0 = arith.constant 0 : i32
    return %arg0, %c0_i32 : i32, i32
  }
  func.func @transform_2(%arg0: i32) -> (i32, i32) {
    %c0_i32 = arith.constant 0 : i32
    %c0_i32_0 = arith.constant 0 : i32
    %c0_i32_1 = arith.constant 0 : i32
    return %c0_i32, %c0_i32_0 : i32, i32
  }
  func.func @transform_3(%arg0: i32) -> (i32, i32) {
    %c0_i32 = arith.constant 0 : i32
    %c0_i32_0 = arith.constant 0 : i32
    %c0_i32_1 = arith.constant 0 : i32
    return %c0_i32, %c0_i32_0 : i32, i32
  }
  func.func @transform_4(%arg0: i32) -> (i32, i32) {
    %c0_i32 = arith.constant 0 : i32
    %c0_i32_0 = arith.constant 0 : i32
    %c0_i32_1 = arith.constant 0 : i32
    return %c0_i32, %c0_i32_0 : i32, i32
  }
  func.func @transform_5(%arg0: i32) -> (i32, i32) {
    %c0_i32 = arith.constant 0 : i32
    %c0_i32_0 = arith.constant 0 : i32
    return %arg0, %c0_i32 : i32, i32
  }
}

module attributes {stable_mosaic.version = 11 : i64} {
  func.func @_bilstm_kernel(%arg0: i32, %arg1: memref<8x1xi32, #tpu.memory_space<vmem>>, %arg2: memref<8x8x128xf32, #tpu.memory_space<vmem>>, %arg3: memref<8x8x128xf32, #tpu.memory_space<vmem>>, %arg4: memref<32x128xf32, #tpu.memory_space<vmem>>, %arg5: memref<32x128xf32, #tpu.memory_space<vmem>>, %arg6: memref<8x8x32xf32, #tpu.memory_space<vmem>>, %arg7: memref<8x8x32xf32, #tpu.memory_space<vmem>>, %arg8: memref<8x32xf32, #tpu.memory_space<vmem>>, %arg9: memref<8x32xf32, #tpu.memory_space<vmem>>, %arg10: memref<8x32xf32, #tpu.memory_space<vmem>>, %arg11: memref<8x32xf32, #tpu.memory_space<vmem>>) attributes {dimension_semantics = [#tpu.dimension_semantics<arbitrary>], iteration_bounds = array<i64: 1>, scalar_prefetch = 0 : i64, scratch_operands = 4 : i64, tpu.core_type = #tpu.core_type<tc>, window_params = [{pipeline_mode = #tpu.pipeline_mode<synchronous>, transform_indices = @transform_0, window_bounds = array<i64: 8, 1>}, {transform_indices = @transform_1, window_bounds = array<i64: 8, 8, 128>}, {transform_indices = @transform_2, window_bounds = array<i64: 8, 8, 128>}, {pipeline_mode = #tpu.pipeline_mode<synchronous>, transform_indices = @transform_3, window_bounds = array<i64: 32, 128>}, {pipeline_mode = #tpu.pipeline_mode<synchronous>, transform_indices = @transform_4, window_bounds = array<i64: 32, 128>}, {transform_indices = @transform_5, window_bounds = array<i64: 8, 8, 32>}, {transform_indices = @transform_6, window_bounds = array<i64: 8, 8, 32>}]} {
    %c0_i32 = arith.constant 0 : i32
    %0 = arith.cmpi eq, %arg0, %c0_i32 : i32
    %1 = arith.extui %0 : i1 to i32
    %c0_i32_0 = arith.constant 0 : i32
    %2 = arith.cmpi ne, %1, %c0_i32_0 : i32
    scf.if %2 {
      %cst_374 = arith.constant 0.000000e+00 : f32
      %886 = vector.broadcast %cst_374 : f32 to vector<8x32xf32>
      %c0_375 = arith.constant 0 : index
      %c0_376 = arith.constant 0 : index
      %887 = vector.load %arg8[%c0_375, %c0_376] : memref<8x32xf32, #tpu.memory_space<vmem>>, vector<8x32xf32>
      tpu.vector_store %arg8[%c0_375, %c0_376], %886 {strides = array<i32>} : memref<8x32xf32, #tpu.memory_space<vmem>>, vector<8x32xf32>,
      %cst_377 = arith.constant 0.000000e+00 : f32
      %888 = vector.broadcast %cst_377 : f32 to vector<8x32xf32>
      %c0_378 = arith.constant 0 : index
      %c0_379 = arith.constant 0 : index
      %889 = vector.load %arg9[%c0_378, %c0_379] : memref<8x32xf32, #tpu.memory_space<vmem>>, vector<8x32xf32>
      tpu.vector_store %arg9[%c0_378, %c0_379], %888 {strides = array<i32>} : memref<8x32xf32, #tpu.memory_space<vmem>>, vector<8x32xf32>,
      %cst_380 = arith.constant 0.000000e+00 : f32
      %890 = vector.broadcast %cst_380 : f32 to vector<8x32xf32>
      %c0_381 = arith.constant 0 : index
      %c0_382 = arith.constant 0 : index
      %891 = vector.load %arg10[%c0_381, %c0_382] : memref<8x32xf32, #tpu.memory_space<vmem>>, vector<8x32xf32>
      tpu.vector_store %arg10[%c0_381, %c0_382], %890 {strides = array<i32>} : memref<8x32xf32, #tpu.memory_space<vmem>>, vector<8x32xf32>,
      %cst_383 = arith.constant 0.000000e+00 : f32
      %892 = vector.broadcast %cst_383 : f32 to vector<8x32xf32>
      %c0_384 = arith.constant 0 : index
      %c0_385 = arith.constant 0 : index
      %893 = vector.load %arg11[%c0_384, %c0_385] : memref<8x32xf32, #tpu.memory_space<vmem>>, vector<8x32xf32>
      tpu.vector_store %arg11[%c0_384, %c0_385], %892 {strides = array<i32>} : memref<8x32xf32, #tpu.memory_space<vmem>>, vector<8x32xf32>,
    } else {
    }
    %c0 = arith.constant 0 : index
    %c0_1 = arith.constant 0 : index
    %3 = vector.load %arg1[%c0, %c0_1] : memref<8x1xi32, #tpu.memory_space<vmem>>, vector<8x1xi32>
    %c0_2 = arith.constant 0 : index
    %c0_3 = arith.constant 0 : index
    %4 = vector.load %arg4[%c0_2, %c0_3] : memref<32x128xf32, #tpu.memory_space<vmem>>, vector<32x128xf32>
    %c0_4 = arith.constant 0 : index
    %c0_5 = arith.constant 0 : index
    %5 = vector.load %arg5[%c0_4, %c0_5] : memref<32x128xf32, #tpu.memory_space<vmem>>, vector<32x128xf32>
    %c0_i32_6 = arith.constant 0 : i32
    %c8_i32 = arith.constant 8 : i32
    %6 = arith.muli %arg0, %c8_i32 : i32
    %7 = arith.addi %6, %c0_i32_6 : i32
    %8 = arith.index_cast %c0_i32_6 : i32 to index
    %c0_7 = arith.constant 0 : index
    %c0_8 = arith.constant 0 : index
    %9 = vector.load %arg2[%8, %c0_7, %c0_8] : memref<8x8x128xf32, #tpu.memory_space<vmem>>, vector<1x8x128xf32>
    %10 = vector.shape_cast %9 : vector<1x8x128xf32> to vector<8x128xf32>
    %c0_9 = arith.constant 0 : index
    %c0_10 = arith.constant 0 : index
    %11 = vector.load %arg8[%c0_9, %c0_10] : memref<8x32xf32, #tpu.memory_space<vmem>>, vector<8x32xf32>
    %c0_11 = arith.constant 0 : index
    %c0_12 = arith.constant 0 : index
    %12 = vector.load %arg9[%c0_11, %c0_12] : memref<8x32xf32, #tpu.memory_space<vmem>>, vector<8x32xf32>
    %cst = arith.constant dense<0.000000e+00> : vector<8x128xf32>
    %13 = tpu.matmul %11, %4, %cst {dimension_numbers = #tpu.dot_dimension_numbers<[1], [0], [0], [1], [0, 0, 1, 1], [], []>} : vector<8x32xf32>, vector<32x128xf32>, vector<8x128xf32> -> vector<8x128xf32>
    %14 = arith.addf %10, %13 : vector<8x128xf32>
    %15 = vector.extract_strided_slice %14 {offsets = [0, 0], sizes = [8, 32], strides = [1, 1]} : vector<8x128xf32> to vector<8x32xf32>
    %16 = arith.negf %15 : vector<8x32xf32>
    %17 = math.exp %16 : vector<8x32xf32>
    %cst_13 = arith.constant 1.000000e+00 : f32
    %18 = vector.broadcast %cst_13 : f32 to vector<8x32xf32>
    %19 = arith.addf %18, %17 : vector<8x32xf32>
    %20 = arith.divf %18, %19 : vector<8x32xf32>
    %21 = vector.extract_strided_slice %14 {offsets = [0, 32], sizes = [8, 32], strides = [1, 1]} : vector<8x128xf32> to vector<8x32xf32>
    %22 = arith.negf %21 : vector<8x32xf32>
    %23 = math.exp %22 : vector<8x32xf32>
    %cst_14 = arith.constant 1.000000e+00 : f32
    %24 = vector.broadcast %cst_14 : f32 to vector<8x32xf32>
    %25 = arith.addf %24, %23 : vector<8x32xf32>
    %26 = arith.divf %24, %25 : vector<8x32xf32>
    %27 = vector.extract_strided_slice %14 {offsets = [0, 64], sizes = [8, 32], strides = [1, 1]} : vector<8x128xf32> to vector<8x32xf32>
    %28 = math.tanh %27 : vector<8x32xf32>
    %29 = vector.extract_strided_slice %14 {offsets = [0, 96], sizes = [8, 32], strides = [1, 1]} : vector<8x128xf32> to vector<8x32xf32>
    %30 = arith.negf %29 : vector<8x32xf32>
    %31 = math.exp %30 : vector<8x32xf32>
    %cst_15 = arith.constant 1.000000e+00 : f32
    %32 = vector.broadcast %cst_15 : f32 to vector<8x32xf32>
    %33 = arith.addf %32, %31 : vector<8x32xf32>
    %34 = arith.divf %32, %33 : vector<8x32xf32>
    %35 = arith.mulf %26, %12 : vector<8x32xf32>
    %36 = arith.mulf %20, %28 : vector<8x32xf32>
    %37 = arith.addf %35, %36 : vector<8x32xf32>
    %38 = math.tanh %37 : vector<8x32xf32>
    %39 = arith.mulf %34, %38 : vector<8x32xf32>
    %40 = vector.broadcast %7 : i32 to vector<8x1xi32>
    %41 = arith.cmpi slt, %40, %3 : vector<8x1xi32>
    %c0_16 = arith.constant 0 : index
    %c0_17 = arith.constant 0 : index
    %42 = vector.load %arg8[%c0_16, %c0_17] : memref<8x32xf32, #tpu.memory_space<vmem>>, vector<8x32xf32>
    %43 = vector.shape_cast %41 : vector<8x1xi1> to vector<8x1xi1>
    %44 = vector.broadcast %43 : vector<8x1xi1> to vector<8x32xi1>
    %45 = arith.select %44, %39, %42 : vector<8x32xi1>, vector<8x32xf32>
    %c0_18 = arith.constant 0 : index
    %c0_19 = arith.constant 0 : index
    %46 = vector.load %arg8[%c0_18, %c0_19] : memref<8x32xf32, #tpu.memory_space<vmem>>, vector<8x32xf32>
    tpu.vector_store %arg8[%c0_18, %c0_19], %45 {strides = array<i32>} : memref<8x32xf32, #tpu.memory_space<vmem>>, vector<8x32xf32>,
    %c0_20 = arith.constant 0 : index
    %c0_21 = arith.constant 0 : index
    %47 = vector.load %arg9[%c0_20, %c0_21] : memref<8x32xf32, #tpu.memory_space<vmem>>, vector<8x32xf32>
    %48 = vector.shape_cast %41 : vector<8x1xi1> to vector<8x1xi1>
    %49 = vector.broadcast %48 : vector<8x1xi1> to vector<8x32xi1>
    %50 = arith.select %49, %37, %47 : vector<8x32xi1>, vector<8x32xf32>
    %c0_22 = arith.constant 0 : index
    %c0_23 = arith.constant 0 : index
    %51 = vector.load %arg9[%c0_22, %c0_23] : memref<8x32xf32, #tpu.memory_space<vmem>>, vector<8x32xf32>
    tpu.vector_store %arg9[%c0_22, %c0_23], %50 {strides = array<i32>} : memref<8x32xf32, #tpu.memory_space<vmem>>, vector<8x32xf32>,
    %cst_24 = arith.constant 0.000000e+00 : f32
    %52 = vector.shape_cast %41 : vector<8x1xi1> to vector<8x1xi1>
    %53 = vector.broadcast %52 : vector<8x1xi1> to vector<8x32xi1>
    %54 = vector.broadcast %cst_24 : f32 to vector<8x32xf32>
    %55 = arith.select %53, %39, %54 : vector<8x32xi1>, vector<8x32xf32>
    %56 = arith.index_cast %c0_i32_6 : i32 to index
    %c0_25 = arith.constant 0 : index
    %c0_26 = arith.constant 0 : index
    %57 = vector.load %arg6[%56, %c0_25, %c0_26] : memref<8x8x32xf32, #tpu.memory_space<vmem>>, vector<1x8x32xf32>
    %58 = vector.shape_cast %57 : vector<1x8x32xf32> to vector<8x32xf32>
    %59 = vector.shape_cast %55 : vector<8x32xf32> to vector<1x8x32xf32>
    tpu.vector_store %arg6[%56, %c0_25, %c0_26], %59 {strides = array<i32>} : memref<8x8x32xf32, #tpu.memory_space<vmem>>, vector<1x8x32xf32>,
    %c7_i32 = arith.constant 7 : i32
    %60 = arith.subi %c7_i32, %c0_i32_6 : i32
    %c0_i32_27 = arith.constant 0 : i32
    %61 = arith.subi %c0_i32_27, %arg0 : i32
    %c8_i32_28 = arith.constant 8 : i32
    %62 = arith.muli %61, %c8_i32_28 : i32
    %63 = arith.addi %62, %60 : i32
    %64 = arith.index_cast %60 : i32 to index
    %c0_29 = arith.constant 0 : index
    %c0_30 = arith.constant 0 : index
    %65 = vector.load %arg3[%64, %c0_29, %c0_30] : memref<8x8x128xf32, #tpu.memory_space<vmem>>, vector<1x8x128xf32>
    %66 = vector.shape_cast %65 : vector<1x8x128xf32> to vector<8x128xf32>
    %c0_31 = arith.constant 0 : index
    %c0_32 = arith.constant 0 : index
    %67 = vector.load %arg10[%c0_31, %c0_32] : memref<8x32xf32, #tpu.memory_space<vmem>>, vector<8x32xf32>
    %c0_33 = arith.constant 0 : index
    %c0_34 = arith.constant 0 : index
    %68 = vector.load %arg11[%c0_33, %c0_34] : memref<8x32xf32, #tpu.memory_space<vmem>>, vector<8x32xf32>
    %cst_35 = arith.constant dense<0.000000e+00> : vector<8x128xf32>
    %69 = tpu.matmul %67, %5, %cst_35 {dimension_numbers = #tpu.dot_dimension_numbers<[1], [0], [0], [1], [0, 0, 1, 1], [], []>} : vector<8x32xf32>, vector<32x128xf32>, vector<8x128xf32> -> vector<8x128xf32>
    %70 = arith.addf %66, %69 : vector<8x128xf32>
    %71 = vector.extract_strided_slice %70 {offsets = [0, 0], sizes = [8, 32], strides = [1, 1]} : vector<8x128xf32> to vector<8x32xf32>
    %72 = arith.negf %71 : vector<8x32xf32>
    %73 = math.exp %72 : vector<8x32xf32>
    %cst_36 = arith.constant 1.000000e+00 : f32
    %74 = vector.broadcast %cst_36 : f32 to vector<8x32xf32>
    %75 = arith.addf %74, %73 : vector<8x32xf32>
    %76 = arith.divf %74, %75 : vector<8x32xf32>
    %77 = vector.extract_strided_slice %70 {offsets = [0, 32], sizes = [8, 32], strides = [1, 1]} : vector<8x128xf32> to vector<8x32xf32>
    %78 = arith.negf %77 : vector<8x32xf32>
    %79 = math.exp %78 : vector<8x32xf32>
    %cst_37 = arith.constant 1.000000e+00 : f32
    %80 = vector.broadcast %cst_37 : f32 to vector<8x32xf32>
    %81 = arith.addf %80, %79 : vector<8x32xf32>
    %82 = arith.divf %80, %81 : vector<8x32xf32>
    %83 = vector.extract_strided_slice %70 {offsets = [0, 64], sizes = [8, 32], strides = [1, 1]} : vector<8x128xf32> to vector<8x32xf32>
    %84 = math.tanh %83 : vector<8x32xf32>
    %85 = vector.extract_strided_slice %70 {offsets = [0, 96], sizes = [8, 32], strides = [1, 1]} : vector<8x128xf32> to vector<8x32xf32>
    %86 = arith.negf %85 : vector<8x32xf32>
    %87 = math.exp %86 : vector<8x32xf32>
    %cst_38 = arith.constant 1.000000e+00 : f32
    %88 = vector.broadcast %cst_38 : f32 to vector<8x32xf32>
    %89 = arith.addf %88, %87 : vector<8x32xf32>
    %90 = arith.divf %88, %89 : vector<8x32xf32>
    %91 = arith.mulf %82, %68 : vector<8x32xf32>
    %92 = arith.mulf %76, %84 : vector<8x32xf32>
    %93 = arith.addf %91, %92 : vector<8x32xf32>
    %94 = math.tanh %93 : vector<8x32xf32>
    %95 = arith.mulf %90, %94 : vector<8x32xf32>
    %96 = vector.broadcast %63 : i32 to vector<8x1xi32>
    %97 = arith.cmpi slt, %96, %3 : vector<8x1xi32>
    %c0_39 = arith.constant 0 : index
    %c0_40 = arith.constant 0 : index
    %98 = vector.load %arg10[%c0_39, %c0_40] : memref<8x32xf32, #tpu.memory_space<vmem>>, vector<8x32xf32>
    %99 = vector.shape_cast %97 : vector<8x1xi1> to vector<8x1xi1>
    %100 = vector.broadcast %99 : vector<8x1xi1> to vector<8x32xi1>
    %101 = arith.select %100, %95, %98 : vector<8x32xi1>, vector<8x32xf32>
    %c0_41 = arith.constant 0 : index
    %c0_42 = arith.constant 0 : index
    %102 = vector.load %arg10[%c0_41, %c0_42] : memref<8x32xf32, #tpu.memory_space<vmem>>, vector<8x32xf32>
    tpu.vector_store %arg10[%c0_41, %c0_42], %101 {strides = array<i32>} : memref<8x32xf32, #tpu.memory_space<vmem>>, vector<8x32xf32>,
    %c0_43 = arith.constant 0 : index
    %c0_44 = arith.constant 0 : index
    %103 = vector.load %arg11[%c0_43, %c0_44] : memref<8x32xf32, #tpu.memory_space<vmem>>, vector<8x32xf32>
    %104 = vector.shape_cast %97 : vector<8x1xi1> to vector<8x1xi1>
    %105 = vector.broadcast %104 : vector<8x1xi1> to vector<8x32xi1>
    %106 = arith.select %105, %93, %103 : vector<8x32xi1>, vector<8x32xf32>
    %c0_45 = arith.constant 0 : index
    %c0_46 = arith.constant 0 : index
    %107 = vector.load %arg11[%c0_45, %c0_46] : memref<8x32xf32, #tpu.memory_space<vmem>>, vector<8x32xf32>
    tpu.vector_store %arg11[%c0_45, %c0_46], %106 {strides = array<i32>} : memref<8x32xf32, #tpu.memory_space<vmem>>, vector<8x32xf32>,
    %cst_47 = arith.constant 0.000000e+00 : f32
    %108 = vector.shape_cast %97 : vector<8x1xi1> to vector<8x1xi1>
    %109 = vector.broadcast %108 : vector<8x1xi1> to vector<8x32xi1>
    %110 = vector.broadcast %cst_47 : f32 to vector<8x32xf32>
    %111 = arith.select %109, %95, %110 : vector<8x32xi1>, vector<8x32xf32>
    %112 = arith.index_cast %60 : i32 to index
    %c0_48 = arith.constant 0 : index
    %c0_49 = arith.constant 0 : index
    %113 = vector.load %arg7[%112, %c0_48, %c0_49] : memref<8x8x32xf32, #tpu.memory_space<vmem>>, vector<1x8x32xf32>
    %114 = vector.shape_cast %113 : vector<1x8x32xf32> to vector<8x32xf32>
    %115 = vector.shape_cast %111 : vector<8x32xf32> to vector<1x8x32xf32>
    tpu.vector_store %arg7[%112, %c0_48, %c0_49], %115 {strides = array<i32>} : memref<8x8x32xf32, #tpu.memory_space<vmem>>, vector<1x8x32xf32>,
    %c1_i32 = arith.constant 1 : i32
    %c8_i32_50 = arith.constant 8 : i32
    %116 = arith.muli %arg0, %c8_i32_50 : i32
    %117 = arith.addi %116, %c1_i32 : i32
    %118 = arith.index_cast %c1_i32 : i32 to index
    %c0_51 = arith.constant 0 : index
    %c0_52 = arith.constant 0 : index
    %119 = vector.load %arg2[%118, %c0_51, %c0_52] : memref<8x8x128xf32, #tpu.memory_space<vmem>>, vector<1x8x128xf32>
    %120 = vector.shape_cast %119 : vector<1x8x128xf32> to vector<8x128xf32>
    %c0_53 = arith.constant 0 : index
    %c0_54 = arith.constant 0 : index
    %121 = vector.load %arg8[%c0_53, %c0_54] : memref<8x32xf32, #tpu.memory_space<vmem>>, vector<8x32xf32>
    %c0_55 = arith.constant 0 : index
    %c0_56 = arith.constant 0 : index
    %122 = vector.load %arg9[%c0_55, %c0_56] : memref<8x32xf32, #tpu.memory_space<vmem>>, vector<8x32xf32>
    %cst_57 = arith.constant dense<0.000000e+00> : vector<8x128xf32>
    %123 = tpu.matmul %121, %4, %cst_57 {dimension_numbers = #tpu.dot_dimension_numbers<[1], [0], [0], [1], [0, 0, 1, 1], [], []>} : vector<8x32xf32>, vector<32x128xf32>, vector<8x128xf32> -> vector<8x128xf32>
    %124 = arith.addf %120, %123 : vector<8x128xf32>
    %125 = vector.extract_strided_slice %124 {offsets = [0, 0], sizes = [8, 32], strides = [1, 1]} : vector<8x128xf32> to vector<8x32xf32>
    %126 = arith.negf %125 : vector<8x32xf32>
    %127 = math.exp %126 : vector<8x32xf32>
    %cst_58 = arith.constant 1.000000e+00 : f32
    %128 = vector.broadcast %cst_58 : f32 to vector<8x32xf32>
    %129 = arith.addf %128, %127 : vector<8x32xf32>
    %130 = arith.divf %128, %129 : vector<8x32xf32>
    %131 = vector.extract_strided_slice %124 {offsets = [0, 32], sizes = [8, 32], strides = [1, 1]} : vector<8x128xf32> to vector<8x32xf32>
    %132 = arith.negf %131 : vector<8x32xf32>
    %133 = math.exp %132 : vector<8x32xf32>
    %cst_59 = arith.constant 1.000000e+00 : f32
    %134 = vector.broadcast %cst_59 : f32 to vector<8x32xf32>
    %135 = arith.addf %134, %133 : vector<8x32xf32>
    %136 = arith.divf %134, %135 : vector<8x32xf32>
    %137 = vector.extract_strided_slice %124 {offsets = [0, 64], sizes = [8, 32], strides = [1, 1]} : vector<8x128xf32> to vector<8x32xf32>
    %138 = math.tanh %137 : vector<8x32xf32>
    %139 = vector.extract_strided_slice %124 {offsets = [0, 96], sizes = [8, 32], strides = [1, 1]} : vector<8x128xf32> to vector<8x32xf32>
    %140 = arith.negf %139 : vector<8x32xf32>
    %141 = math.exp %140 : vector<8x32xf32>
    %cst_60 = arith.constant 1.000000e+00 : f32
    %142 = vector.broadcast %cst_60 : f32 to vector<8x32xf32>
    %143 = arith.addf %142, %141 : vector<8x32xf32>
    %144 = arith.divf %142, %143 : vector<8x32xf32>
    %145 = arith.mulf %136, %122 : vector<8x32xf32>
    %146 = arith.mulf %130, %138 : vector<8x32xf32>
    %147 = arith.addf %145, %146 : vector<8x32xf32>
    %148 = math.tanh %147 : vector<8x32xf32>
    %149 = arith.mulf %144, %148 : vector<8x32xf32>
    %150 = vector.broadcast %117 : i32 to vector<8x1xi32>
    %151 = arith.cmpi slt, %150, %3 : vector<8x1xi32>
    %c0_61 = arith.constant 0 : index
    %c0_62 = arith.constant 0 : index
    %152 = vector.load %arg8[%c0_61, %c0_62] : memref<8x32xf32, #tpu.memory_space<vmem>>, vector<8x32xf32>
    %153 = vector.shape_cast %151 : vector<8x1xi1> to vector<8x1xi1>
    %154 = vector.broadcast %153 : vector<8x1xi1> to vector<8x32xi1>
    %155 = arith.select %154, %149, %152 : vector<8x32xi1>, vector<8x32xf32>
    %c0_63 = arith.constant 0 : index
    %c0_64 = arith.constant 0 : index
    %156 = vector.load %arg8[%c0_63, %c0_64] : memref<8x32xf32, #tpu.memory_space<vmem>>, vector<8x32xf32>
    tpu.vector_store %arg8[%c0_63, %c0_64], %155 {strides = array<i32>} : memref<8x32xf32, #tpu.memory_space<vmem>>, vector<8x32xf32>,
    %c0_65 = arith.constant 0 : index
    %c0_66 = arith.constant 0 : index
    %157 = vector.load %arg9[%c0_65, %c0_66] : memref<8x32xf32, #tpu.memory_space<vmem>>, vector<8x32xf32>
    %158 = vector.shape_cast %151 : vector<8x1xi1> to vector<8x1xi1>
    %159 = vector.broadcast %158 : vector<8x1xi1> to vector<8x32xi1>
    %160 = arith.select %159, %147, %157 : vector<8x32xi1>, vector<8x32xf32>
    %c0_67 = arith.constant 0 : index
    %c0_68 = arith.constant 0 : index
    %161 = vector.load %arg9[%c0_67, %c0_68] : memref<8x32xf32, #tpu.memory_space<vmem>>, vector<8x32xf32>
    tpu.vector_store %arg9[%c0_67, %c0_68], %160 {strides = array<i32>} : memref<8x32xf32, #tpu.memory_space<vmem>>, vector<8x32xf32>,
    %cst_69 = arith.constant 0.000000e+00 : f32
    %162 = vector.shape_cast %151 : vector<8x1xi1> to vector<8x1xi1>
    %163 = vector.broadcast %162 : vector<8x1xi1> to vector<8x32xi1>
    %164 = vector.broadcast %cst_69 : f32 to vector<8x32xf32>
    %165 = arith.select %163, %149, %164 : vector<8x32xi1>, vector<8x32xf32>
    %166 = arith.index_cast %c1_i32 : i32 to index
    %c0_70 = arith.constant 0 : index
    %c0_71 = arith.constant 0 : index
    %167 = vector.load %arg6[%166, %c0_70, %c0_71] : memref<8x8x32xf32, #tpu.memory_space<vmem>>, vector<1x8x32xf32>
    %168 = vector.shape_cast %167 : vector<1x8x32xf32> to vector<8x32xf32>
    %169 = vector.shape_cast %165 : vector<8x32xf32> to vector<1x8x32xf32>
    tpu.vector_store %arg6[%166, %c0_70, %c0_71], %169 {strides = array<i32>} : memref<8x8x32xf32, #tpu.memory_space<vmem>>, vector<1x8x32xf32>,
    %c7_i32_72 = arith.constant 7 : i32
    %170 = arith.subi %c7_i32_72, %c1_i32 : i32
    %c0_i32_73 = arith.constant 0 : i32
    %171 = arith.subi %c0_i32_73, %arg0 : i32
    %c8_i32_74 = arith.constant 8 : i32
    %172 = arith.muli %171, %c8_i32_74 : i32
    %173 = arith.addi %172, %170 : i32
    %174 = arith.index_cast %170 : i32 to index
    %c0_75 = arith.constant 0 : index
    %c0_76 = arith.constant 0 : index
    %175 = vector.load %arg3[%174, %c0_75, %c0_76] : memref<8x8x128xf32, #tpu.memory_space<vmem>>, vector<1x8x128xf32>
    %176 = vector.shape_cast %175 : vector<1x8x128xf32> to vector<8x128xf32>
    %c0_77 = arith.constant 0 : index
    %c0_78 = arith.constant 0 : index
    %177 = vector.load %arg10[%c0_77, %c0_78] : memref<8x32xf32, #tpu.memory_space<vmem>>, vector<8x32xf32>
    %c0_79 = arith.constant 0 : index
    %c0_80 = arith.constant 0 : index
    %178 = vector.load %arg11[%c0_79, %c0_80] : memref<8x32xf32, #tpu.memory_space<vmem>>, vector<8x32xf32>
    %cst_81 = arith.constant dense<0.000000e+00> : vector<8x128xf32>
    %179 = tpu.matmul %177, %5, %cst_81 {dimension_numbers = #tpu.dot_dimension_numbers<[1], [0], [0], [1], [0, 0, 1, 1], [], []>} : vector<8x32xf32>, vector<32x128xf32>, vector<8x128xf32> -> vector<8x128xf32>
    %180 = arith.addf %176, %179 : vector<8x128xf32>
    %181 = vector.extract_strided_slice %180 {offsets = [0, 0], sizes = [8, 32], strides = [1, 1]} : vector<8x128xf32> to vector<8x32xf32>
    %182 = arith.negf %181 : vector<8x32xf32>
    %183 = math.exp %182 : vector<8x32xf32>
    %cst_82 = arith.constant 1.000000e+00 : f32
    %184 = vector.broadcast %cst_82 : f32 to vector<8x32xf32>
    %185 = arith.addf %184, %183 : vector<8x32xf32>
    %186 = arith.divf %184, %185 : vector<8x32xf32>
    %187 = vector.extract_strided_slice %180 {offsets = [0, 32], sizes = [8, 32], strides = [1, 1]} : vector<8x128xf32> to vector<8x32xf32>
    %188 = arith.negf %187 : vector<8x32xf32>
    %189 = math.exp %188 : vector<8x32xf32>
    %cst_83 = arith.constant 1.000000e+00 : f32
    %190 = vector.broadcast %cst_83 : f32 to vector<8x32xf32>
    %191 = arith.addf %190, %189 : vector<8x32xf32>
    %192 = arith.divf %190, %191 : vector<8x32xf32>
    %193 = vector.extract_strided_slice %180 {offsets = [0, 64], sizes = [8, 32], strides = [1, 1]} : vector<8x128xf32> to vector<8x32xf32>
    %194 = math.tanh %193 : vector<8x32xf32>
    %195 = vector.extract_strided_slice %180 {offsets = [0, 96], sizes = [8, 32], strides = [1, 1]} : vector<8x128xf32> to vector<8x32xf32>
    %196 = arith.negf %195 : vector<8x32xf32>
    %197 = math.exp %196 : vector<8x32xf32>
    %cst_84 = arith.constant 1.000000e+00 : f32
    %198 = vector.broadcast %cst_84 : f32 to vector<8x32xf32>
    %199 = arith.addf %198, %197 : vector<8x32xf32>
    %200 = arith.divf %198, %199 : vector<8x32xf32>
    %201 = arith.mulf %192, %178 : vector<8x32xf32>
    %202 = arith.mulf %186, %194 : vector<8x32xf32>
    %203 = arith.addf %201, %202 : vector<8x32xf32>
    %204 = math.tanh %203 : vector<8x32xf32>
    %205 = arith.mulf %200, %204 : vector<8x32xf32>
    %206 = vector.broadcast %173 : i32 to vector<8x1xi32>
    %207 = arith.cmpi slt, %206, %3 : vector<8x1xi32>
    %c0_85 = arith.constant 0 : index
    %c0_86 = arith.constant 0 : index
    %208 = vector.load %arg10[%c0_85, %c0_86] : memref<8x32xf32, #tpu.memory_space<vmem>>, vector<8x32xf32>
    %209 = vector.shape_cast %207 : vector<8x1xi1> to vector<8x1xi1>
    %210 = vector.broadcast %209 : vector<8x1xi1> to vector<8x32xi1>
    %211 = arith.select %210, %205, %208 : vector<8x32xi1>, vector<8x32xf32>
    %c0_87 = arith.constant 0 : index
    %c0_88 = arith.constant 0 : index
    %212 = vector.load %arg10[%c0_87, %c0_88] : memref<8x32xf32, #tpu.memory_space<vmem>>, vector<8x32xf32>
    tpu.vector_store %arg10[%c0_87, %c0_88], %211 {strides = array<i32>} : memref<8x32xf32, #tpu.memory_space<vmem>>, vector<8x32xf32>,
    %c0_89 = arith.constant 0 : index
    %c0_90 = arith.constant 0 : index
    %213 = vector.load %arg11[%c0_89, %c0_90] : memref<8x32xf32, #tpu.memory_space<vmem>>, vector<8x32xf32>
    %214 = vector.shape_cast %207 : vector<8x1xi1> to vector<8x1xi1>
    %215 = vector.broadcast %214 : vector<8x1xi1> to vector<8x32xi1>
    %216 = arith.select %215, %203, %213 : vector<8x32xi1>, vector<8x32xf32>
    %c0_91 = arith.constant 0 : index
    %c0_92 = arith.constant 0 : index
    %217 = vector.load %arg11[%c0_91, %c0_92] : memref<8x32xf32, #tpu.memory_space<vmem>>, vector<8x32xf32>
    tpu.vector_store %arg11[%c0_91, %c0_92], %216 {strides = array<i32>} : memref<8x32xf32, #tpu.memory_space<vmem>>, vector<8x32xf32>,
    %cst_93 = arith.constant 0.000000e+00 : f32
    %218 = vector.shape_cast %207 : vector<8x1xi1> to vector<8x1xi1>
    %219 = vector.broadcast %218 : vector<8x1xi1> to vector<8x32xi1>
    %220 = vector.broadcast %cst_93 : f32 to vector<8x32xf32>
    %221 = arith.select %219, %205, %220 : vector<8x32xi1>, vector<8x32xf32>
    %222 = arith.index_cast %170 : i32 to index
    %c0_94 = arith.constant 0 : index
    %c0_95 = arith.constant 0 : index
    %223 = vector.load %arg7[%222, %c0_94, %c0_95] : memref<8x8x32xf32, #tpu.memory_space<vmem>>, vector<1x8x32xf32>
    %224 = vector.shape_cast %223 : vector<1x8x32xf32> to vector<8x32xf32>
    %225 = vector.shape_cast %221 : vector<8x32xf32> to vector<1x8x32xf32>
    tpu.vector_store %arg7[%222, %c0_94, %c0_95], %225 {strides = array<i32>} : memref<8x8x32xf32, #tpu.memory_space<vmem>>, vector<1x8x32xf32>,
    %c2_i32 = arith.constant 2 : i32
    %c8_i32_96 = arith.constant 8 : i32
    %226 = arith.muli %arg0, %c8_i32_96 : i32
    %227 = arith.addi %226, %c2_i32 : i32
    %228 = arith.index_cast %c2_i32 : i32 to index
    %c0_97 = arith.constant 0 : index
    %c0_98 = arith.constant 0 : index
    %229 = vector.load %arg2[%228, %c0_97, %c0_98] : memref<8x8x128xf32, #tpu.memory_space<vmem>>, vector<1x8x128xf32>
    %230 = vector.shape_cast %229 : vector<1x8x128xf32> to vector<8x128xf32>
    %c0_99 = arith.constant 0 : index
    %c0_100 = arith.constant 0 : index
    %231 = vector.load %arg8[%c0_99, %c0_100] : memref<8x32xf32, #tpu.memory_space<vmem>>, vector<8x32xf32>
    %c0_101 = arith.constant 0 : index
    %c0_102 = arith.constant 0 : index
    %232 = vector.load %arg9[%c0_101, %c0_102] : memref<8x32xf32, #tpu.memory_space<vmem>>, vector<8x32xf32>
    %cst_103 = arith.constant dense<0.000000e+00> : vector<8x128xf32>
    %233 = tpu.matmul %231, %4, %cst_103 {dimension_numbers = #tpu.dot_dimension_numbers<[1], [0], [0], [1], [0, 0, 1, 1], [], []>} : vector<8x32xf32>, vector<32x128xf32>, vector<8x128xf32> -> vector<8x128xf32>
    %234 = arith.addf %230, %233 : vector<8x128xf32>
    %235 = vector.extract_strided_slice %234 {offsets = [0, 0], sizes = [8, 32], strides = [1, 1]} : vector<8x128xf32> to vector<8x32xf32>
    %236 = arith.negf %235 : vector<8x32xf32>
    %237 = math.exp %236 : vector<8x32xf32>
    %cst_104 = arith.constant 1.000000e+00 : f32
    %238 = vector.broadcast %cst_104 : f32 to vector<8x32xf32>
    %239 = arith.addf %238, %237 : vector<8x32xf32>
    %240 = arith.divf %238, %239 : vector<8x32xf32>
    %241 = vector.extract_strided_slice %234 {offsets = [0, 32], sizes = [8, 32], strides = [1, 1]} : vector<8x128xf32> to vector<8x32xf32>
    %242 = arith.negf %241 : vector<8x32xf32>
    %243 = math.exp %242 : vector<8x32xf32>
    %cst_105 = arith.constant 1.000000e+00 : f32
    %244 = vector.broadcast %cst_105 : f32 to vector<8x32xf32>
    %245 = arith.addf %244, %243 : vector<8x32xf32>
    %246 = arith.divf %244, %245 : vector<8x32xf32>
    %247 = vector.extract_strided_slice %234 {offsets = [0, 64], sizes = [8, 32], strides = [1, 1]} : vector<8x128xf32> to vector<8x32xf32>
    %248 = math.tanh %247 : vector<8x32xf32>
    %249 = vector.extract_strided_slice %234 {offsets = [0, 96], sizes = [8, 32], strides = [1, 1]} : vector<8x128xf32> to vector<8x32xf32>
    %250 = arith.negf %249 : vector<8x32xf32>
    %251 = math.exp %250 : vector<8x32xf32>
    %cst_106 = arith.constant 1.000000e+00 : f32
    %252 = vector.broadcast %cst_106 : f32 to vector<8x32xf32>
    %253 = arith.addf %252, %251 : vector<8x32xf32>
    %254 = arith.divf %252, %253 : vector<8x32xf32>
    %255 = arith.mulf %246, %232 : vector<8x32xf32>
    %256 = arith.mulf %240, %248 : vector<8x32xf32>
    %257 = arith.addf %255, %256 : vector<8x32xf32>
    %258 = math.tanh %257 : vector<8x32xf32>
    %259 = arith.mulf %254, %258 : vector<8x32xf32>
    %260 = vector.broadcast %227 : i32 to vector<8x1xi32>
    %261 = arith.cmpi slt, %260, %3 : vector<8x1xi32>
    %c0_107 = arith.constant 0 : index
    %c0_108 = arith.constant 0 : index
    %262 = vector.load %arg8[%c0_107, %c0_108] : memref<8x32xf32, #tpu.memory_space<vmem>>, vector<8x32xf32>
    %263 = vector.shape_cast %261 : vector<8x1xi1> to vector<8x1xi1>
    %264 = vector.broadcast %263 : vector<8x1xi1> to vector<8x32xi1>
    %265 = arith.select %264, %259, %262 : vector<8x32xi1>, vector<8x32xf32>
    %c0_109 = arith.constant 0 : index
    %c0_110 = arith.constant 0 : index
    %266 = vector.load %arg8[%c0_109, %c0_110] : memref<8x32xf32, #tpu.memory_space<vmem>>, vector<8x32xf32>
    tpu.vector_store %arg8[%c0_109, %c0_110], %265 {strides = array<i32>} : memref<8x32xf32, #tpu.memory_space<vmem>>, vector<8x32xf32>,
    %c0_111 = arith.constant 0 : index
    %c0_112 = arith.constant 0 : index
    %267 = vector.load %arg9[%c0_111, %c0_112] : memref<8x32xf32, #tpu.memory_space<vmem>>, vector<8x32xf32>
    %268 = vector.shape_cast %261 : vector<8x1xi1> to vector<8x1xi1>
    %269 = vector.broadcast %268 : vector<8x1xi1> to vector<8x32xi1>
    %270 = arith.select %269, %257, %267 : vector<8x32xi1>, vector<8x32xf32>
    %c0_113 = arith.constant 0 : index
    %c0_114 = arith.constant 0 : index
    %271 = vector.load %arg9[%c0_113, %c0_114] : memref<8x32xf32, #tpu.memory_space<vmem>>, vector<8x32xf32>
    tpu.vector_store %arg9[%c0_113, %c0_114], %270 {strides = array<i32>} : memref<8x32xf32, #tpu.memory_space<vmem>>, vector<8x32xf32>,
    %cst_115 = arith.constant 0.000000e+00 : f32
    %272 = vector.shape_cast %261 : vector<8x1xi1> to vector<8x1xi1>
    %273 = vector.broadcast %272 : vector<8x1xi1> to vector<8x32xi1>
    %274 = vector.broadcast %cst_115 : f32 to vector<8x32xf32>
    %275 = arith.select %273, %259, %274 : vector<8x32xi1>, vector<8x32xf32>
    %276 = arith.index_cast %c2_i32 : i32 to index
    %c0_116 = arith.constant 0 : index
    %c0_117 = arith.constant 0 : index
    %277 = vector.load %arg6[%276, %c0_116, %c0_117] : memref<8x8x32xf32, #tpu.memory_space<vmem>>, vector<1x8x32xf32>
    %278 = vector.shape_cast %277 : vector<1x8x32xf32> to vector<8x32xf32>
    %279 = vector.shape_cast %275 : vector<8x32xf32> to vector<1x8x32xf32>
    tpu.vector_store %arg6[%276, %c0_116, %c0_117], %279 {strides = array<i32>} : memref<8x8x32xf32, #tpu.memory_space<vmem>>, vector<1x8x32xf32>,
    %c7_i32_118 = arith.constant 7 : i32
    %280 = arith.subi %c7_i32_118, %c2_i32 : i32
    %c0_i32_119 = arith.constant 0 : i32
    %281 = arith.subi %c0_i32_119, %arg0 : i32
    %c8_i32_120 = arith.constant 8 : i32
    %282 = arith.muli %281, %c8_i32_120 : i32
    %283 = arith.addi %282, %280 : i32
    %284 = arith.index_cast %280 : i32 to index
    %c0_121 = arith.constant 0 : index
    %c0_122 = arith.constant 0 : index
    %285 = vector.load %arg3[%284, %c0_121, %c0_122] : memref<8x8x128xf32, #tpu.memory_space<vmem>>, vector<1x8x128xf32>
    %286 = vector.shape_cast %285 : vector<1x8x128xf32> to vector<8x128xf32>
    %c0_123 = arith.constant 0 : index
    %c0_124 = arith.constant 0 : index
    %287 = vector.load %arg10[%c0_123, %c0_124] : memref<8x32xf32, #tpu.memory_space<vmem>>, vector<8x32xf32>
    %c0_125 = arith.constant 0 : index
    %c0_126 = arith.constant 0 : index
    %288 = vector.load %arg11[%c0_125, %c0_126] : memref<8x32xf32, #tpu.memory_space<vmem>>, vector<8x32xf32>
    %cst_127 = arith.constant dense<0.000000e+00> : vector<8x128xf32>
    %289 = tpu.matmul %287, %5, %cst_127 {dimension_numbers = #tpu.dot_dimension_numbers<[1], [0], [0], [1], [0, 0, 1, 1], [], []>} : vector<8x32xf32>, vector<32x128xf32>, vector<8x128xf32> -> vector<8x128xf32>
    %290 = arith.addf %286, %289 : vector<8x128xf32>
    %291 = vector.extract_strided_slice %290 {offsets = [0, 0], sizes = [8, 32], strides = [1, 1]} : vector<8x128xf32> to vector<8x32xf32>
    %292 = arith.negf %291 : vector<8x32xf32>
    %293 = math.exp %292 : vector<8x32xf32>
    %cst_128 = arith.constant 1.000000e+00 : f32
    %294 = vector.broadcast %cst_128 : f32 to vector<8x32xf32>
    %295 = arith.addf %294, %293 : vector<8x32xf32>
    %296 = arith.divf %294, %295 : vector<8x32xf32>
    %297 = vector.extract_strided_slice %290 {offsets = [0, 32], sizes = [8, 32], strides = [1, 1]} : vector<8x128xf32> to vector<8x32xf32>
    %298 = arith.negf %297 : vector<8x32xf32>
    %299 = math.exp %298 : vector<8x32xf32>
    %cst_129 = arith.constant 1.000000e+00 : f32
    %300 = vector.broadcast %cst_129 : f32 to vector<8x32xf32>
    %301 = arith.addf %300, %299 : vector<8x32xf32>
    %302 = arith.divf %300, %301 : vector<8x32xf32>
    %303 = vector.extract_strided_slice %290 {offsets = [0, 64], sizes = [8, 32], strides = [1, 1]} : vector<8x128xf32> to vector<8x32xf32>
    %304 = math.tanh %303 : vector<8x32xf32>
    %305 = vector.extract_strided_slice %290 {offsets = [0, 96], sizes = [8, 32], strides = [1, 1]} : vector<8x128xf32> to vector<8x32xf32>
    %306 = arith.negf %305 : vector<8x32xf32>
    %307 = math.exp %306 : vector<8x32xf32>
    %cst_130 = arith.constant 1.000000e+00 : f32
    %308 = vector.broadcast %cst_130 : f32 to vector<8x32xf32>
    %309 = arith.addf %308, %307 : vector<8x32xf32>
    %310 = arith.divf %308, %309 : vector<8x32xf32>
    %311 = arith.mulf %302, %288 : vector<8x32xf32>
    %312 = arith.mulf %296, %304 : vector<8x32xf32>
    %313 = arith.addf %311, %312 : vector<8x32xf32>
    %314 = math.tanh %313 : vector<8x32xf32>
    %315 = arith.mulf %310, %314 : vector<8x32xf32>
    %316 = vector.broadcast %283 : i32 to vector<8x1xi32>
    %317 = arith.cmpi slt, %316, %3 : vector<8x1xi32>
    %c0_131 = arith.constant 0 : index
    %c0_132 = arith.constant 0 : index
    %318 = vector.load %arg10[%c0_131, %c0_132] : memref<8x32xf32, #tpu.memory_space<vmem>>, vector<8x32xf32>
    %319 = vector.shape_cast %317 : vector<8x1xi1> to vector<8x1xi1>
    %320 = vector.broadcast %319 : vector<8x1xi1> to vector<8x32xi1>
    %321 = arith.select %320, %315, %318 : vector<8x32xi1>, vector<8x32xf32>
    %c0_133 = arith.constant 0 : index
    %c0_134 = arith.constant 0 : index
    %322 = vector.load %arg10[%c0_133, %c0_134] : memref<8x32xf32, #tpu.memory_space<vmem>>, vector<8x32xf32>
    tpu.vector_store %arg10[%c0_133, %c0_134], %321 {strides = array<i32>} : memref<8x32xf32, #tpu.memory_space<vmem>>, vector<8x32xf32>,
    %c0_135 = arith.constant 0 : index
    %c0_136 = arith.constant 0 : index
    %323 = vector.load %arg11[%c0_135, %c0_136] : memref<8x32xf32, #tpu.memory_space<vmem>>, vector<8x32xf32>
    %324 = vector.shape_cast %317 : vector<8x1xi1> to vector<8x1xi1>
    %325 = vector.broadcast %324 : vector<8x1xi1> to vector<8x32xi1>
    %326 = arith.select %325, %313, %323 : vector<8x32xi1>, vector<8x32xf32>
    %c0_137 = arith.constant 0 : index
    %c0_138 = arith.constant 0 : index
    %327 = vector.load %arg11[%c0_137, %c0_138] : memref<8x32xf32, #tpu.memory_space<vmem>>, vector<8x32xf32>
    tpu.vector_store %arg11[%c0_137, %c0_138], %326 {strides = array<i32>} : memref<8x32xf32, #tpu.memory_space<vmem>>, vector<8x32xf32>,
    %cst_139 = arith.constant 0.000000e+00 : f32
    %328 = vector.shape_cast %317 : vector<8x1xi1> to vector<8x1xi1>
    %329 = vector.broadcast %328 : vector<8x1xi1> to vector<8x32xi1>
    %330 = vector.broadcast %cst_139 : f32 to vector<8x32xf32>
    %331 = arith.select %329, %315, %330 : vector<8x32xi1>, vector<8x32xf32>
    %332 = arith.index_cast %280 : i32 to index
    %c0_140 = arith.constant 0 : index
    %c0_141 = arith.constant 0 : index
    %333 = vector.load %arg7[%332, %c0_140, %c0_141] : memref<8x8x32xf32, #tpu.memory_space<vmem>>, vector<1x8x32xf32>
    %334 = vector.shape_cast %333 : vector<1x8x32xf32> to vector<8x32xf32>
    %335 = vector.shape_cast %331 : vector<8x32xf32> to vector<1x8x32xf32>
    tpu.vector_store %arg7[%332, %c0_140, %c0_141], %335 {strides = array<i32>} : memref<8x8x32xf32, #tpu.memory_space<vmem>>, vector<1x8x32xf32>,
    %c3_i32 = arith.constant 3 : i32
    %c8_i32_142 = arith.constant 8 : i32
    %336 = arith.muli %arg0, %c8_i32_142 : i32
    %337 = arith.addi %336, %c3_i32 : i32
    %338 = arith.index_cast %c3_i32 : i32 to index
    %c0_143 = arith.constant 0 : index
    %c0_144 = arith.constant 0 : index
    %339 = vector.load %arg2[%338, %c0_143, %c0_144] : memref<8x8x128xf32, #tpu.memory_space<vmem>>, vector<1x8x128xf32>
    %340 = vector.shape_cast %339 : vector<1x8x128xf32> to vector<8x128xf32>
    %c0_145 = arith.constant 0 : index
    %c0_146 = arith.constant 0 : index
    %341 = vector.load %arg8[%c0_145, %c0_146] : memref<8x32xf32, #tpu.memory_space<vmem>>, vector<8x32xf32>
    %c0_147 = arith.constant 0 : index
    %c0_148 = arith.constant 0 : index
    %342 = vector.load %arg9[%c0_147, %c0_148] : memref<8x32xf32, #tpu.memory_space<vmem>>, vector<8x32xf32>
    %cst_149 = arith.constant dense<0.000000e+00> : vector<8x128xf32>
    %343 = tpu.matmul %341, %4, %cst_149 {dimension_numbers = #tpu.dot_dimension_numbers<[1], [0], [0], [1], [0, 0, 1, 1], [], []>} : vector<8x32xf32>, vector<32x128xf32>, vector<8x128xf32> -> vector<8x128xf32>
    %344 = arith.addf %340, %343 : vector<8x128xf32>
    %345 = vector.extract_strided_slice %344 {offsets = [0, 0], sizes = [8, 32], strides = [1, 1]} : vector<8x128xf32> to vector<8x32xf32>
    %346 = arith.negf %345 : vector<8x32xf32>
    %347 = math.exp %346 : vector<8x32xf32>
    %cst_150 = arith.constant 1.000000e+00 : f32
    %348 = vector.broadcast %cst_150 : f32 to vector<8x32xf32>
    %349 = arith.addf %348, %347 : vector<8x32xf32>
    %350 = arith.divf %348, %349 : vector<8x32xf32>
    %351 = vector.extract_strided_slice %344 {offsets = [0, 32], sizes = [8, 32], strides = [1, 1]} : vector<8x128xf32> to vector<8x32xf32>
    %352 = arith.negf %351 : vector<8x32xf32>
    %353 = math.exp %352 : vector<8x32xf32>
    %cst_151 = arith.constant 1.000000e+00 : f32
    %354 = vector.broadcast %cst_151 : f32 to vector<8x32xf32>
    %355 = arith.addf %354, %353 : vector<8x32xf32>
    %356 = arith.divf %354, %355 : vector<8x32xf32>
    %357 = vector.extract_strided_slice %344 {offsets = [0, 64], sizes = [8, 32], strides = [1, 1]} : vector<8x128xf32> to vector<8x32xf32>
    %358 = math.tanh %357 : vector<8x32xf32>
    %359 = vector.extract_strided_slice %344 {offsets = [0, 96], sizes = [8, 32], strides = [1, 1]} : vector<8x128xf32> to vector<8x32xf32>
    %360 = arith.negf %359 : vector<8x32xf32>
    %361 = math.exp %360 : vector<8x32xf32>
    %cst_152 = arith.constant 1.000000e+00 : f32
    %362 = vector.broadcast %cst_152 : f32 to vector<8x32xf32>
    %363 = arith.addf %362, %361 : vector<8x32xf32>
    %364 = arith.divf %362, %363 : vector<8x32xf32>
    %365 = arith.mulf %356, %342 : vector<8x32xf32>
    %366 = arith.mulf %350, %358 : vector<8x32xf32>
    %367 = arith.addf %365, %366 : vector<8x32xf32>
    %368 = math.tanh %367 : vector<8x32xf32>
    %369 = arith.mulf %364, %368 : vector<8x32xf32>
    %370 = vector.broadcast %337 : i32 to vector<8x1xi32>
    %371 = arith.cmpi slt, %370, %3 : vector<8x1xi32>
    %c0_153 = arith.constant 0 : index
    %c0_154 = arith.constant 0 : index
    %372 = vector.load %arg8[%c0_153, %c0_154] : memref<8x32xf32, #tpu.memory_space<vmem>>, vector<8x32xf32>
    %373 = vector.shape_cast %371 : vector<8x1xi1> to vector<8x1xi1>
    %374 = vector.broadcast %373 : vector<8x1xi1> to vector<8x32xi1>
    %375 = arith.select %374, %369, %372 : vector<8x32xi1>, vector<8x32xf32>
    %c0_155 = arith.constant 0 : index
    %c0_156 = arith.constant 0 : index
    %376 = vector.load %arg8[%c0_155, %c0_156] : memref<8x32xf32, #tpu.memory_space<vmem>>, vector<8x32xf32>
    tpu.vector_store %arg8[%c0_155, %c0_156], %375 {strides = array<i32>} : memref<8x32xf32, #tpu.memory_space<vmem>>, vector<8x32xf32>,
    %c0_157 = arith.constant 0 : index
    %c0_158 = arith.constant 0 : index
    %377 = vector.load %arg9[%c0_157, %c0_158] : memref<8x32xf32, #tpu.memory_space<vmem>>, vector<8x32xf32>
    %378 = vector.shape_cast %371 : vector<8x1xi1> to vector<8x1xi1>
    %379 = vector.broadcast %378 : vector<8x1xi1> to vector<8x32xi1>
    %380 = arith.select %379, %367, %377 : vector<8x32xi1>, vector<8x32xf32>
    %c0_159 = arith.constant 0 : index
    %c0_160 = arith.constant 0 : index
    %381 = vector.load %arg9[%c0_159, %c0_160] : memref<8x32xf32, #tpu.memory_space<vmem>>, vector<8x32xf32>
    tpu.vector_store %arg9[%c0_159, %c0_160], %380 {strides = array<i32>} : memref<8x32xf32, #tpu.memory_space<vmem>>, vector<8x32xf32>,
    %cst_161 = arith.constant 0.000000e+00 : f32
    %382 = vector.shape_cast %371 : vector<8x1xi1> to vector<8x1xi1>
    %383 = vector.broadcast %382 : vector<8x1xi1> to vector<8x32xi1>
    %384 = vector.broadcast %cst_161 : f32 to vector<8x32xf32>
    %385 = arith.select %383, %369, %384 : vector<8x32xi1>, vector<8x32xf32>
    %386 = arith.index_cast %c3_i32 : i32 to index
    %c0_162 = arith.constant 0 : index
    %c0_163 = arith.constant 0 : index
    %387 = vector.load %arg6[%386, %c0_162, %c0_163] : memref<8x8x32xf32, #tpu.memory_space<vmem>>, vector<1x8x32xf32>
    %388 = vector.shape_cast %387 : vector<1x8x32xf32> to vector<8x32xf32>
    %389 = vector.shape_cast %385 : vector<8x32xf32> to vector<1x8x32xf32>
    tpu.vector_store %arg6[%386, %c0_162, %c0_163], %389 {strides = array<i32>} : memref<8x8x32xf32, #tpu.memory_space<vmem>>, vector<1x8x32xf32>,
    %c7_i32_164 = arith.constant 7 : i32
    %390 = arith.subi %c7_i32_164, %c3_i32 : i32
    %c0_i32_165 = arith.constant 0 : i32
    %391 = arith.subi %c0_i32_165, %arg0 : i32
    %c8_i32_166 = arith.constant 8 : i32
    %392 = arith.muli %391, %c8_i32_166 : i32
    %393 = arith.addi %392, %390 : i32
    %394 = arith.index_cast %390 : i32 to index
    %c0_167 = arith.constant 0 : index
    %c0_168 = arith.constant 0 : index
    %395 = vector.load %arg3[%394, %c0_167, %c0_168] : memref<8x8x128xf32, #tpu.memory_space<vmem>>, vector<1x8x128xf32>
    %396 = vector.shape_cast %395 : vector<1x8x128xf32> to vector<8x128xf32>
    %c0_169 = arith.constant 0 : index
    %c0_170 = arith.constant 0 : index
    %397 = vector.load %arg10[%c0_169, %c0_170] : memref<8x32xf32, #tpu.memory_space<vmem>>, vector<8x32xf32>
    %c0_171 = arith.constant 0 : index
    %c0_172 = arith.constant 0 : index
    %398 = vector.load %arg11[%c0_171, %c0_172] : memref<8x32xf32, #tpu.memory_space<vmem>>, vector<8x32xf32>
    %cst_173 = arith.constant dense<0.000000e+00> : vector<8x128xf32>
    %399 = tpu.matmul %397, %5, %cst_173 {dimension_numbers = #tpu.dot_dimension_numbers<[1], [0], [0], [1], [0, 0, 1, 1], [], []>} : vector<8x32xf32>, vector<32x128xf32>, vector<8x128xf32> -> vector<8x128xf32>
    %400 = arith.addf %396, %399 : vector<8x128xf32>
    %401 = vector.extract_strided_slice %400 {offsets = [0, 0], sizes = [8, 32], strides = [1, 1]} : vector<8x128xf32> to vector<8x32xf32>
    %402 = arith.negf %401 : vector<8x32xf32>
    %403 = math.exp %402 : vector<8x32xf32>
    %cst_174 = arith.constant 1.000000e+00 : f32
    %404 = vector.broadcast %cst_174 : f32 to vector<8x32xf32>
    %405 = arith.addf %404, %403 : vector<8x32xf32>
    %406 = arith.divf %404, %405 : vector<8x32xf32>
    %407 = vector.extract_strided_slice %400 {offsets = [0, 32], sizes = [8, 32], strides = [1, 1]} : vector<8x128xf32> to vector<8x32xf32>
    %408 = arith.negf %407 : vector<8x32xf32>
    %409 = math.exp %408 : vector<8x32xf32>
    %cst_175 = arith.constant 1.000000e+00 : f32
    %410 = vector.broadcast %cst_175 : f32 to vector<8x32xf32>
    %411 = arith.addf %410, %409 : vector<8x32xf32>
    %412 = arith.divf %410, %411 : vector<8x32xf32>
    %413 = vector.extract_strided_slice %400 {offsets = [0, 64], sizes = [8, 32], strides = [1, 1]} : vector<8x128xf32> to vector<8x32xf32>
    %414 = math.tanh %413 : vector<8x32xf32>
    %415 = vector.extract_strided_slice %400 {offsets = [0, 96], sizes = [8, 32], strides = [1, 1]} : vector<8x128xf32> to vector<8x32xf32>
    %416 = arith.negf %415 : vector<8x32xf32>
    %417 = math.exp %416 : vector<8x32xf32>
    %cst_176 = arith.constant 1.000000e+00 : f32
    %418 = vector.broadcast %cst_176 : f32 to vector<8x32xf32>
    %419 = arith.addf %418, %417 : vector<8x32xf32>
    %420 = arith.divf %418, %419 : vector<8x32xf32>
    %421 = arith.mulf %412, %398 : vector<8x32xf32>
    %422 = arith.mulf %406, %414 : vector<8x32xf32>
    %423 = arith.addf %421, %422 : vector<8x32xf32>
    %424 = math.tanh %423 : vector<8x32xf32>
    %425 = arith.mulf %420, %424 : vector<8x32xf32>
    %426 = vector.broadcast %393 : i32 to vector<8x1xi32>
    %427 = arith.cmpi slt, %426, %3 : vector<8x1xi32>
    %c0_177 = arith.constant 0 : index
    %c0_178 = arith.constant 0 : index
    %428 = vector.load %arg10[%c0_177, %c0_178] : memref<8x32xf32, #tpu.memory_space<vmem>>, vector<8x32xf32>
    %429 = vector.shape_cast %427 : vector<8x1xi1> to vector<8x1xi1>
    %430 = vector.broadcast %429 : vector<8x1xi1> to vector<8x32xi1>
    %431 = arith.select %430, %425, %428 : vector<8x32xi1>, vector<8x32xf32>
    %c0_179 = arith.constant 0 : index
    %c0_180 = arith.constant 0 : index
    %432 = vector.load %arg10[%c0_179, %c0_180] : memref<8x32xf32, #tpu.memory_space<vmem>>, vector<8x32xf32>
    tpu.vector_store %arg10[%c0_179, %c0_180], %431 {strides = array<i32>} : memref<8x32xf32, #tpu.memory_space<vmem>>, vector<8x32xf32>,
    %c0_181 = arith.constant 0 : index
    %c0_182 = arith.constant 0 : index
    %433 = vector.load %arg11[%c0_181, %c0_182] : memref<8x32xf32, #tpu.memory_space<vmem>>, vector<8x32xf32>
    %434 = vector.shape_cast %427 : vector<8x1xi1> to vector<8x1xi1>
    %435 = vector.broadcast %434 : vector<8x1xi1> to vector<8x32xi1>
    %436 = arith.select %435, %423, %433 : vector<8x32xi1>, vector<8x32xf32>
    %c0_183 = arith.constant 0 : index
    %c0_184 = arith.constant 0 : index
    %437 = vector.load %arg11[%c0_183, %c0_184] : memref<8x32xf32, #tpu.memory_space<vmem>>, vector<8x32xf32>
    tpu.vector_store %arg11[%c0_183, %c0_184], %436 {strides = array<i32>} : memref<8x32xf32, #tpu.memory_space<vmem>>, vector<8x32xf32>,
    %cst_185 = arith.constant 0.000000e+00 : f32
    %438 = vector.shape_cast %427 : vector<8x1xi1> to vector<8x1xi1>
    %439 = vector.broadcast %438 : vector<8x1xi1> to vector<8x32xi1>
    %440 = vector.broadcast %cst_185 : f32 to vector<8x32xf32>
    %441 = arith.select %439, %425, %440 : vector<8x32xi1>, vector<8x32xf32>
    %442 = arith.index_cast %390 : i32 to index
    %c0_186 = arith.constant 0 : index
    %c0_187 = arith.constant 0 : index
    %443 = vector.load %arg7[%442, %c0_186, %c0_187] : memref<8x8x32xf32, #tpu.memory_space<vmem>>, vector<1x8x32xf32>
    %444 = vector.shape_cast %443 : vector<1x8x32xf32> to vector<8x32xf32>
    %445 = vector.shape_cast %441 : vector<8x32xf32> to vector<1x8x32xf32>
    tpu.vector_store %arg7[%442, %c0_186, %c0_187], %445 {strides = array<i32>} : memref<8x8x32xf32, #tpu.memory_space<vmem>>, vector<1x8x32xf32>,
    %c4_i32 = arith.constant 4 : i32
    %c8_i32_188 = arith.constant 8 : i32
    %446 = arith.muli %arg0, %c8_i32_188 : i32
    %447 = arith.addi %446, %c4_i32 : i32
    %448 = arith.index_cast %c4_i32 : i32 to index
    %c0_189 = arith.constant 0 : index
    %c0_190 = arith.constant 0 : index
    %449 = vector.load %arg2[%448, %c0_189, %c0_190] : memref<8x8x128xf32, #tpu.memory_space<vmem>>, vector<1x8x128xf32>
    %450 = vector.shape_cast %449 : vector<1x8x128xf32> to vector<8x128xf32>
    %c0_191 = arith.constant 0 : index
    %c0_192 = arith.constant 0 : index
    %451 = vector.load %arg8[%c0_191, %c0_192] : memref<8x32xf32, #tpu.memory_space<vmem>>, vector<8x32xf32>
    %c0_193 = arith.constant 0 : index
    %c0_194 = arith.constant 0 : index
    %452 = vector.load %arg9[%c0_193, %c0_194] : memref<8x32xf32, #tpu.memory_space<vmem>>, vector<8x32xf32>
    %cst_195 = arith.constant dense<0.000000e+00> : vector<8x128xf32>
    %453 = tpu.matmul %451, %4, %cst_195 {dimension_numbers = #tpu.dot_dimension_numbers<[1], [0], [0], [1], [0, 0, 1, 1], [], []>} : vector<8x32xf32>, vector<32x128xf32>, vector<8x128xf32> -> vector<8x128xf32>
    %454 = arith.addf %450, %453 : vector<8x128xf32>
    %455 = vector.extract_strided_slice %454 {offsets = [0, 0], sizes = [8, 32], strides = [1, 1]} : vector<8x128xf32> to vector<8x32xf32>
    %456 = arith.negf %455 : vector<8x32xf32>
    %457 = math.exp %456 : vector<8x32xf32>
    %cst_196 = arith.constant 1.000000e+00 : f32
    %458 = vector.broadcast %cst_196 : f32 to vector<8x32xf32>
    %459 = arith.addf %458, %457 : vector<8x32xf32>
    %460 = arith.divf %458, %459 : vector<8x32xf32>
    %461 = vector.extract_strided_slice %454 {offsets = [0, 32], sizes = [8, 32], strides = [1, 1]} : vector<8x128xf32> to vector<8x32xf32>
    %462 = arith.negf %461 : vector<8x32xf32>
    %463 = math.exp %462 : vector<8x32xf32>
    %cst_197 = arith.constant 1.000000e+00 : f32
    %464 = vector.broadcast %cst_197 : f32 to vector<8x32xf32>
    %465 = arith.addf %464, %463 : vector<8x32xf32>
    %466 = arith.divf %464, %465 : vector<8x32xf32>
    %467 = vector.extract_strided_slice %454 {offsets = [0, 64], sizes = [8, 32], strides = [1, 1]} : vector<8x128xf32> to vector<8x32xf32>
    %468 = math.tanh %467 : vector<8x32xf32>
    %469 = vector.extract_strided_slice %454 {offsets = [0, 96], sizes = [8, 32], strides = [1, 1]} : vector<8x128xf32> to vector<8x32xf32>
    %470 = arith.negf %469 : vector<8x32xf32>
    %471 = math.exp %470 : vector<8x32xf32>
    %cst_198 = arith.constant 1.000000e+00 : f32
    %472 = vector.broadcast %cst_198 : f32 to vector<8x32xf32>
    %473 = arith.addf %472, %471 : vector<8x32xf32>
    %474 = arith.divf %472, %473 : vector<8x32xf32>
    %475 = arith.mulf %466, %452 : vector<8x32xf32>
    %476 = arith.mulf %460, %468 : vector<8x32xf32>
    %477 = arith.addf %475, %476 : vector<8x32xf32>
    %478 = math.tanh %477 : vector<8x32xf32>
    %479 = arith.mulf %474, %478 : vector<8x32xf32>
    %480 = vector.broadcast %447 : i32 to vector<8x1xi32>
    %481 = arith.cmpi slt, %480, %3 : vector<8x1xi32>
    %c0_199 = arith.constant 0 : index
    %c0_200 = arith.constant 0 : index
    %482 = vector.load %arg8[%c0_199, %c0_200] : memref<8x32xf32, #tpu.memory_space<vmem>>, vector<8x32xf32>
    %483 = vector.shape_cast %481 : vector<8x1xi1> to vector<8x1xi1>
    %484 = vector.broadcast %483 : vector<8x1xi1> to vector<8x32xi1>
    %485 = arith.select %484, %479, %482 : vector<8x32xi1>, vector<8x32xf32>
    %c0_201 = arith.constant 0 : index
    %c0_202 = arith.constant 0 : index
    %486 = vector.load %arg8[%c0_201, %c0_202] : memref<8x32xf32, #tpu.memory_space<vmem>>, vector<8x32xf32>
    tpu.vector_store %arg8[%c0_201, %c0_202], %485 {strides = array<i32>} : memref<8x32xf32, #tpu.memory_space<vmem>>, vector<8x32xf32>,
    %c0_203 = arith.constant 0 : index
    %c0_204 = arith.constant 0 : index
    %487 = vector.load %arg9[%c0_203, %c0_204] : memref<8x32xf32, #tpu.memory_space<vmem>>, vector<8x32xf32>
    %488 = vector.shape_cast %481 : vector<8x1xi1> to vector<8x1xi1>
    %489 = vector.broadcast %488 : vector<8x1xi1> to vector<8x32xi1>
    %490 = arith.select %489, %477, %487 : vector<8x32xi1>, vector<8x32xf32>
    %c0_205 = arith.constant 0 : index
    %c0_206 = arith.constant 0 : index
    %491 = vector.load %arg9[%c0_205, %c0_206] : memref<8x32xf32, #tpu.memory_space<vmem>>, vector<8x32xf32>
    tpu.vector_store %arg9[%c0_205, %c0_206], %490 {strides = array<i32>} : memref<8x32xf32, #tpu.memory_space<vmem>>, vector<8x32xf32>,
    %cst_207 = arith.constant 0.000000e+00 : f32
    %492 = vector.shape_cast %481 : vector<8x1xi1> to vector<8x1xi1>
    %493 = vector.broadcast %492 : vector<8x1xi1> to vector<8x32xi1>
    %494 = vector.broadcast %cst_207 : f32 to vector<8x32xf32>
    %495 = arith.select %493, %479, %494 : vector<8x32xi1>, vector<8x32xf32>
    %496 = arith.index_cast %c4_i32 : i32 to index
    %c0_208 = arith.constant 0 : index
    %c0_209 = arith.constant 0 : index
    %497 = vector.load %arg6[%496, %c0_208, %c0_209] : memref<8x8x32xf32, #tpu.memory_space<vmem>>, vector<1x8x32xf32>
    %498 = vector.shape_cast %497 : vector<1x8x32xf32> to vector<8x32xf32>
    %499 = vector.shape_cast %495 : vector<8x32xf32> to vector<1x8x32xf32>
    tpu.vector_store %arg6[%496, %c0_208, %c0_209], %499 {strides = array<i32>} : memref<8x8x32xf32, #tpu.memory_space<vmem>>, vector<1x8x32xf32>,
    %c7_i32_210 = arith.constant 7 : i32
    %500 = arith.subi %c7_i32_210, %c4_i32 : i32
    %c0_i32_211 = arith.constant 0 : i32
    %501 = arith.subi %c0_i32_211, %arg0 : i32
    %c8_i32_212 = arith.constant 8 : i32
    %502 = arith.muli %501, %c8_i32_212 : i32
    %503 = arith.addi %502, %500 : i32
    %504 = arith.index_cast %500 : i32 to index
    %c0_213 = arith.constant 0 : index
    %c0_214 = arith.constant 0 : index
    %505 = vector.load %arg3[%504, %c0_213, %c0_214] : memref<8x8x128xf32, #tpu.memory_space<vmem>>, vector<1x8x128xf32>
    %506 = vector.shape_cast %505 : vector<1x8x128xf32> to vector<8x128xf32>
    %c0_215 = arith.constant 0 : index
    %c0_216 = arith.constant 0 : index
    %507 = vector.load %arg10[%c0_215, %c0_216] : memref<8x32xf32, #tpu.memory_space<vmem>>, vector<8x32xf32>
    %c0_217 = arith.constant 0 : index
    %c0_218 = arith.constant 0 : index
    %508 = vector.load %arg11[%c0_217, %c0_218] : memref<8x32xf32, #tpu.memory_space<vmem>>, vector<8x32xf32>
    %cst_219 = arith.constant dense<0.000000e+00> : vector<8x128xf32>
    %509 = tpu.matmul %507, %5, %cst_219 {dimension_numbers = #tpu.dot_dimension_numbers<[1], [0], [0], [1], [0, 0, 1, 1], [], []>} : vector<8x32xf32>, vector<32x128xf32>, vector<8x128xf32> -> vector<8x128xf32>
    %510 = arith.addf %506, %509 : vector<8x128xf32>
    %511 = vector.extract_strided_slice %510 {offsets = [0, 0], sizes = [8, 32], strides = [1, 1]} : vector<8x128xf32> to vector<8x32xf32>
    %512 = arith.negf %511 : vector<8x32xf32>
    %513 = math.exp %512 : vector<8x32xf32>
    %cst_220 = arith.constant 1.000000e+00 : f32
    %514 = vector.broadcast %cst_220 : f32 to vector<8x32xf32>
    %515 = arith.addf %514, %513 : vector<8x32xf32>
    %516 = arith.divf %514, %515 : vector<8x32xf32>
    %517 = vector.extract_strided_slice %510 {offsets = [0, 32], sizes = [8, 32], strides = [1, 1]} : vector<8x128xf32> to vector<8x32xf32>
    %518 = arith.negf %517 : vector<8x32xf32>
    %519 = math.exp %518 : vector<8x32xf32>
    %cst_221 = arith.constant 1.000000e+00 : f32
    %520 = vector.broadcast %cst_221 : f32 to vector<8x32xf32>
    %521 = arith.addf %520, %519 : vector<8x32xf32>
    %522 = arith.divf %520, %521 : vector<8x32xf32>
    %523 = vector.extract_strided_slice %510 {offsets = [0, 64], sizes = [8, 32], strides = [1, 1]} : vector<8x128xf32> to vector<8x32xf32>
    %524 = math.tanh %523 : vector<8x32xf32>
    %525 = vector.extract_strided_slice %510 {offsets = [0, 96], sizes = [8, 32], strides = [1, 1]} : vector<8x128xf32> to vector<8x32xf32>
    %526 = arith.negf %525 : vector<8x32xf32>
    %527 = math.exp %526 : vector<8x32xf32>
    %cst_222 = arith.constant 1.000000e+00 : f32
    %528 = vector.broadcast %cst_222 : f32 to vector<8x32xf32>
    %529 = arith.addf %528, %527 : vector<8x32xf32>
    %530 = arith.divf %528, %529 : vector<8x32xf32>
    %531 = arith.mulf %522, %508 : vector<8x32xf32>
    %532 = arith.mulf %516, %524 : vector<8x32xf32>
    %533 = arith.addf %531, %532 : vector<8x32xf32>
    %534 = math.tanh %533 : vector<8x32xf32>
    %535 = arith.mulf %530, %534 : vector<8x32xf32>
    %536 = vector.broadcast %503 : i32 to vector<8x1xi32>
    %537 = arith.cmpi slt, %536, %3 : vector<8x1xi32>
    %c0_223 = arith.constant 0 : index
    %c0_224 = arith.constant 0 : index
    %538 = vector.load %arg10[%c0_223, %c0_224] : memref<8x32xf32, #tpu.memory_space<vmem>>, vector<8x32xf32>
    %539 = vector.shape_cast %537 : vector<8x1xi1> to vector<8x1xi1>
    %540 = vector.broadcast %539 : vector<8x1xi1> to vector<8x32xi1>
    %541 = arith.select %540, %535, %538 : vector<8x32xi1>, vector<8x32xf32>
    %c0_225 = arith.constant 0 : index
    %c0_226 = arith.constant 0 : index
    %542 = vector.load %arg10[%c0_225, %c0_226] : memref<8x32xf32, #tpu.memory_space<vmem>>, vector<8x32xf32>
    tpu.vector_store %arg10[%c0_225, %c0_226], %541 {strides = array<i32>} : memref<8x32xf32, #tpu.memory_space<vmem>>, vector<8x32xf32>,
    %c0_227 = arith.constant 0 : index
    %c0_228 = arith.constant 0 : index
    %543 = vector.load %arg11[%c0_227, %c0_228] : memref<8x32xf32, #tpu.memory_space<vmem>>, vector<8x32xf32>
    %544 = vector.shape_cast %537 : vector<8x1xi1> to vector<8x1xi1>
    %545 = vector.broadcast %544 : vector<8x1xi1> to vector<8x32xi1>
    %546 = arith.select %545, %533, %543 : vector<8x32xi1>, vector<8x32xf32>
    %c0_229 = arith.constant 0 : index
    %c0_230 = arith.constant 0 : index
    %547 = vector.load %arg11[%c0_229, %c0_230] : memref<8x32xf32, #tpu.memory_space<vmem>>, vector<8x32xf32>
    tpu.vector_store %arg11[%c0_229, %c0_230], %546 {strides = array<i32>} : memref<8x32xf32, #tpu.memory_space<vmem>>, vector<8x32xf32>,
    %cst_231 = arith.constant 0.000000e+00 : f32
    %548 = vector.shape_cast %537 : vector<8x1xi1> to vector<8x1xi1>
    %549 = vector.broadcast %548 : vector<8x1xi1> to vector<8x32xi1>
    %550 = vector.broadcast %cst_231 : f32 to vector<8x32xf32>
    %551 = arith.select %549, %535, %550 : vector<8x32xi1>, vector<8x32xf32>
    %552 = arith.index_cast %500 : i32 to index
    %c0_232 = arith.constant 0 : index
    %c0_233 = arith.constant 0 : index
    %553 = vector.load %arg7[%552, %c0_232, %c0_233] : memref<8x8x32xf32, #tpu.memory_space<vmem>>, vector<1x8x32xf32>
    %554 = vector.shape_cast %553 : vector<1x8x32xf32> to vector<8x32xf32>
    %555 = vector.shape_cast %551 : vector<8x32xf32> to vector<1x8x32xf32>
    tpu.vector_store %arg7[%552, %c0_232, %c0_233], %555 {strides = array<i32>} : memref<8x8x32xf32, #tpu.memory_space<vmem>>, vector<1x8x32xf32>,
    %c5_i32 = arith.constant 5 : i32
    %c8_i32_234 = arith.constant 8 : i32
    %556 = arith.muli %arg0, %c8_i32_234 : i32
    %557 = arith.addi %556, %c5_i32 : i32
    %558 = arith.index_cast %c5_i32 : i32 to index
    %c0_235 = arith.constant 0 : index
    %c0_236 = arith.constant 0 : index
    %559 = vector.load %arg2[%558, %c0_235, %c0_236] : memref<8x8x128xf32, #tpu.memory_space<vmem>>, vector<1x8x128xf32>
    %560 = vector.shape_cast %559 : vector<1x8x128xf32> to vector<8x128xf32>
    %c0_237 = arith.constant 0 : index
    %c0_238 = arith.constant 0 : index
    %561 = vector.load %arg8[%c0_237, %c0_238] : memref<8x32xf32, #tpu.memory_space<vmem>>, vector<8x32xf32>
    %c0_239 = arith.constant 0 : index
    %c0_240 = arith.constant 0 : index
    %562 = vector.load %arg9[%c0_239, %c0_240] : memref<8x32xf32, #tpu.memory_space<vmem>>, vector<8x32xf32>
    %cst_241 = arith.constant dense<0.000000e+00> : vector<8x128xf32>
    %563 = tpu.matmul %561, %4, %cst_241 {dimension_numbers = #tpu.dot_dimension_numbers<[1], [0], [0], [1], [0, 0, 1, 1], [], []>} : vector<8x32xf32>, vector<32x128xf32>, vector<8x128xf32> -> vector<8x128xf32>
    %564 = arith.addf %560, %563 : vector<8x128xf32>
    %565 = vector.extract_strided_slice %564 {offsets = [0, 0], sizes = [8, 32], strides = [1, 1]} : vector<8x128xf32> to vector<8x32xf32>
    %566 = arith.negf %565 : vector<8x32xf32>
    %567 = math.exp %566 : vector<8x32xf32>
    %cst_242 = arith.constant 1.000000e+00 : f32
    %568 = vector.broadcast %cst_242 : f32 to vector<8x32xf32>
    %569 = arith.addf %568, %567 : vector<8x32xf32>
    %570 = arith.divf %568, %569 : vector<8x32xf32>
    %571 = vector.extract_strided_slice %564 {offsets = [0, 32], sizes = [8, 32], strides = [1, 1]} : vector<8x128xf32> to vector<8x32xf32>
    %572 = arith.negf %571 : vector<8x32xf32>
    %573 = math.exp %572 : vector<8x32xf32>
    %cst_243 = arith.constant 1.000000e+00 : f32
    %574 = vector.broadcast %cst_243 : f32 to vector<8x32xf32>
    %575 = arith.addf %574, %573 : vector<8x32xf32>
    %576 = arith.divf %574, %575 : vector<8x32xf32>
    %577 = vector.extract_strided_slice %564 {offsets = [0, 64], sizes = [8, 32], strides = [1, 1]} : vector<8x128xf32> to vector<8x32xf32>
    %578 = math.tanh %577 : vector<8x32xf32>
    %579 = vector.extract_strided_slice %564 {offsets = [0, 96], sizes = [8, 32], strides = [1, 1]} : vector<8x128xf32> to vector<8x32xf32>
    %580 = arith.negf %579 : vector<8x32xf32>
    %581 = math.exp %580 : vector<8x32xf32>
    %cst_244 = arith.constant 1.000000e+00 : f32
    %582 = vector.broadcast %cst_244 : f32 to vector<8x32xf32>
    %583 = arith.addf %582, %581 : vector<8x32xf32>
    %584 = arith.divf %582, %583 : vector<8x32xf32>
    %585 = arith.mulf %576, %562 : vector<8x32xf32>
    %586 = arith.mulf %570, %578 : vector<8x32xf32>
    %587 = arith.addf %585, %586 : vector<8x32xf32>
    %588 = math.tanh %587 : vector<8x32xf32>
    %589 = arith.mulf %584, %588 : vector<8x32xf32>
    %590 = vector.broadcast %557 : i32 to vector<8x1xi32>
    %591 = arith.cmpi slt, %590, %3 : vector<8x1xi32>
    %c0_245 = arith.constant 0 : index
    %c0_246 = arith.constant 0 : index
    %592 = vector.load %arg8[%c0_245, %c0_246] : memref<8x32xf32, #tpu.memory_space<vmem>>, vector<8x32xf32>
    %593 = vector.shape_cast %591 : vector<8x1xi1> to vector<8x1xi1>
    %594 = vector.broadcast %593 : vector<8x1xi1> to vector<8x32xi1>
    %595 = arith.select %594, %589, %592 : vector<8x32xi1>, vector<8x32xf32>
    %c0_247 = arith.constant 0 : index
    %c0_248 = arith.constant 0 : index
    %596 = vector.load %arg8[%c0_247, %c0_248] : memref<8x32xf32, #tpu.memory_space<vmem>>, vector<8x32xf32>
    tpu.vector_store %arg8[%c0_247, %c0_248], %595 {strides = array<i32>} : memref<8x32xf32, #tpu.memory_space<vmem>>, vector<8x32xf32>,
    %c0_249 = arith.constant 0 : index
    %c0_250 = arith.constant 0 : index
    %597 = vector.load %arg9[%c0_249, %c0_250] : memref<8x32xf32, #tpu.memory_space<vmem>>, vector<8x32xf32>
    %598 = vector.shape_cast %591 : vector<8x1xi1> to vector<8x1xi1>
    %599 = vector.broadcast %598 : vector<8x1xi1> to vector<8x32xi1>
    %600 = arith.select %599, %587, %597 : vector<8x32xi1>, vector<8x32xf32>
    %c0_251 = arith.constant 0 : index
    %c0_252 = arith.constant 0 : index
    %601 = vector.load %arg9[%c0_251, %c0_252] : memref<8x32xf32, #tpu.memory_space<vmem>>, vector<8x32xf32>
    tpu.vector_store %arg9[%c0_251, %c0_252], %600 {strides = array<i32>} : memref<8x32xf32, #tpu.memory_space<vmem>>, vector<8x32xf32>,
    %cst_253 = arith.constant 0.000000e+00 : f32
    %602 = vector.shape_cast %591 : vector<8x1xi1> to vector<8x1xi1>
    %603 = vector.broadcast %602 : vector<8x1xi1> to vector<8x32xi1>
    %604 = vector.broadcast %cst_253 : f32 to vector<8x32xf32>
    %605 = arith.select %603, %589, %604 : vector<8x32xi1>, vector<8x32xf32>
    %606 = arith.index_cast %c5_i32 : i32 to index
    %c0_254 = arith.constant 0 : index
    %c0_255 = arith.constant 0 : index
    %607 = vector.load %arg6[%606, %c0_254, %c0_255] : memref<8x8x32xf32, #tpu.memory_space<vmem>>, vector<1x8x32xf32>
    %608 = vector.shape_cast %607 : vector<1x8x32xf32> to vector<8x32xf32>
    %609 = vector.shape_cast %605 : vector<8x32xf32> to vector<1x8x32xf32>
    tpu.vector_store %arg6[%606, %c0_254, %c0_255], %609 {strides = array<i32>} : memref<8x8x32xf32, #tpu.memory_space<vmem>>, vector<1x8x32xf32>,
    %c7_i32_256 = arith.constant 7 : i32
    %610 = arith.subi %c7_i32_256, %c5_i32 : i32
    %c0_i32_257 = arith.constant 0 : i32
    %611 = arith.subi %c0_i32_257, %arg0 : i32
    %c8_i32_258 = arith.constant 8 : i32
    %612 = arith.muli %611, %c8_i32_258 : i32
    %613 = arith.addi %612, %610 : i32
    %614 = arith.index_cast %610 : i32 to index
    %c0_259 = arith.constant 0 : index
    %c0_260 = arith.constant 0 : index
    %615 = vector.load %arg3[%614, %c0_259, %c0_260] : memref<8x8x128xf32, #tpu.memory_space<vmem>>, vector<1x8x128xf32>
    %616 = vector.shape_cast %615 : vector<1x8x128xf32> to vector<8x128xf32>
    %c0_261 = arith.constant 0 : index
    %c0_262 = arith.constant 0 : index
    %617 = vector.load %arg10[%c0_261, %c0_262] : memref<8x32xf32, #tpu.memory_space<vmem>>, vector<8x32xf32>
    %c0_263 = arith.constant 0 : index
    %c0_264 = arith.constant 0 : index
    %618 = vector.load %arg11[%c0_263, %c0_264] : memref<8x32xf32, #tpu.memory_space<vmem>>, vector<8x32xf32>
    %cst_265 = arith.constant dense<0.000000e+00> : vector<8x128xf32>
    %619 = tpu.matmul %617, %5, %cst_265 {dimension_numbers = #tpu.dot_dimension_numbers<[1], [0], [0], [1], [0, 0, 1, 1], [], []>} : vector<8x32xf32>, vector<32x128xf32>, vector<8x128xf32> -> vector<8x128xf32>
    %620 = arith.addf %616, %619 : vector<8x128xf32>
    %621 = vector.extract_strided_slice %620 {offsets = [0, 0], sizes = [8, 32], strides = [1, 1]} : vector<8x128xf32> to vector<8x32xf32>
    %622 = arith.negf %621 : vector<8x32xf32>
    %623 = math.exp %622 : vector<8x32xf32>
    %cst_266 = arith.constant 1.000000e+00 : f32
    %624 = vector.broadcast %cst_266 : f32 to vector<8x32xf32>
    %625 = arith.addf %624, %623 : vector<8x32xf32>
    %626 = arith.divf %624, %625 : vector<8x32xf32>
    %627 = vector.extract_strided_slice %620 {offsets = [0, 32], sizes = [8, 32], strides = [1, 1]} : vector<8x128xf32> to vector<8x32xf32>
    %628 = arith.negf %627 : vector<8x32xf32>
    %629 = math.exp %628 : vector<8x32xf32>
    %cst_267 = arith.constant 1.000000e+00 : f32
    %630 = vector.broadcast %cst_267 : f32 to vector<8x32xf32>
    %631 = arith.addf %630, %629 : vector<8x32xf32>
    %632 = arith.divf %630, %631 : vector<8x32xf32>
    %633 = vector.extract_strided_slice %620 {offsets = [0, 64], sizes = [8, 32], strides = [1, 1]} : vector<8x128xf32> to vector<8x32xf32>
    %634 = math.tanh %633 : vector<8x32xf32>
    %635 = vector.extract_strided_slice %620 {offsets = [0, 96], sizes = [8, 32], strides = [1, 1]} : vector<8x128xf32> to vector<8x32xf32>
    %636 = arith.negf %635 : vector<8x32xf32>
    %637 = math.exp %636 : vector<8x32xf32>
    %cst_268 = arith.constant 1.000000e+00 : f32
    %638 = vector.broadcast %cst_268 : f32 to vector<8x32xf32>
    %639 = arith.addf %638, %637 : vector<8x32xf32>
    %640 = arith.divf %638, %639 : vector<8x32xf32>
    %641 = arith.mulf %632, %618 : vector<8x32xf32>
    %642 = arith.mulf %626, %634 : vector<8x32xf32>
    %643 = arith.addf %641, %642 : vector<8x32xf32>
    %644 = math.tanh %643 : vector<8x32xf32>
    %645 = arith.mulf %640, %644 : vector<8x32xf32>
    %646 = vector.broadcast %613 : i32 to vector<8x1xi32>
    %647 = arith.cmpi slt, %646, %3 : vector<8x1xi32>
    %c0_269 = arith.constant 0 : index
    %c0_270 = arith.constant 0 : index
    %648 = vector.load %arg10[%c0_269, %c0_270] : memref<8x32xf32, #tpu.memory_space<vmem>>, vector<8x32xf32>
    %649 = vector.shape_cast %647 : vector<8x1xi1> to vector<8x1xi1>
    %650 = vector.broadcast %649 : vector<8x1xi1> to vector<8x32xi1>
    %651 = arith.select %650, %645, %648 : vector<8x32xi1>, vector<8x32xf32>
    %c0_271 = arith.constant 0 : index
    %c0_272 = arith.constant 0 : index
    %652 = vector.load %arg10[%c0_271, %c0_272] : memref<8x32xf32, #tpu.memory_space<vmem>>, vector<8x32xf32>
    tpu.vector_store %arg10[%c0_271, %c0_272], %651 {strides = array<i32>} : memref<8x32xf32, #tpu.memory_space<vmem>>, vector<8x32xf32>,
    %c0_273 = arith.constant 0 : index
    %c0_274 = arith.constant 0 : index
    %653 = vector.load %arg11[%c0_273, %c0_274] : memref<8x32xf32, #tpu.memory_space<vmem>>, vector<8x32xf32>
    %654 = vector.shape_cast %647 : vector<8x1xi1> to vector<8x1xi1>
    %655 = vector.broadcast %654 : vector<8x1xi1> to vector<8x32xi1>
    %656 = arith.select %655, %643, %653 : vector<8x32xi1>, vector<8x32xf32>
    %c0_275 = arith.constant 0 : index
    %c0_276 = arith.constant 0 : index
    %657 = vector.load %arg11[%c0_275, %c0_276] : memref<8x32xf32, #tpu.memory_space<vmem>>, vector<8x32xf32>
    tpu.vector_store %arg11[%c0_275, %c0_276], %656 {strides = array<i32>} : memref<8x32xf32, #tpu.memory_space<vmem>>, vector<8x32xf32>,
    %cst_277 = arith.constant 0.000000e+00 : f32
    %658 = vector.shape_cast %647 : vector<8x1xi1> to vector<8x1xi1>
    %659 = vector.broadcast %658 : vector<8x1xi1> to vector<8x32xi1>
    %660 = vector.broadcast %cst_277 : f32 to vector<8x32xf32>
    %661 = arith.select %659, %645, %660 : vector<8x32xi1>, vector<8x32xf32>
    %662 = arith.index_cast %610 : i32 to index
    %c0_278 = arith.constant 0 : index
    %c0_279 = arith.constant 0 : index
    %663 = vector.load %arg7[%662, %c0_278, %c0_279] : memref<8x8x32xf32, #tpu.memory_space<vmem>>, vector<1x8x32xf32>
    %664 = vector.shape_cast %663 : vector<1x8x32xf32> to vector<8x32xf32>
    %665 = vector.shape_cast %661 : vector<8x32xf32> to vector<1x8x32xf32>
    tpu.vector_store %arg7[%662, %c0_278, %c0_279], %665 {strides = array<i32>} : memref<8x8x32xf32, #tpu.memory_space<vmem>>, vector<1x8x32xf32>,
    %c6_i32 = arith.constant 6 : i32
    %c8_i32_280 = arith.constant 8 : i32
    %666 = arith.muli %arg0, %c8_i32_280 : i32
    %667 = arith.addi %666, %c6_i32 : i32
    %668 = arith.index_cast %c6_i32 : i32 to index
    %c0_281 = arith.constant 0 : index
    %c0_282 = arith.constant 0 : index
    %669 = vector.load %arg2[%668, %c0_281, %c0_282] : memref<8x8x128xf32, #tpu.memory_space<vmem>>, vector<1x8x128xf32>
    %670 = vector.shape_cast %669 : vector<1x8x128xf32> to vector<8x128xf32>
    %c0_283 = arith.constant 0 : index
    %c0_284 = arith.constant 0 : index
    %671 = vector.load %arg8[%c0_283, %c0_284] : memref<8x32xf32, #tpu.memory_space<vmem>>, vector<8x32xf32>
    %c0_285 = arith.constant 0 : index
    %c0_286 = arith.constant 0 : index
    %672 = vector.load %arg9[%c0_285, %c0_286] : memref<8x32xf32, #tpu.memory_space<vmem>>, vector<8x32xf32>
    %cst_287 = arith.constant dense<0.000000e+00> : vector<8x128xf32>
    %673 = tpu.matmul %671, %4, %cst_287 {dimension_numbers = #tpu.dot_dimension_numbers<[1], [0], [0], [1], [0, 0, 1, 1], [], []>} : vector<8x32xf32>, vector<32x128xf32>, vector<8x128xf32> -> vector<8x128xf32>
    %674 = arith.addf %670, %673 : vector<8x128xf32>
    %675 = vector.extract_strided_slice %674 {offsets = [0, 0], sizes = [8, 32], strides = [1, 1]} : vector<8x128xf32> to vector<8x32xf32>
    %676 = arith.negf %675 : vector<8x32xf32>
    %677 = math.exp %676 : vector<8x32xf32>
    %cst_288 = arith.constant 1.000000e+00 : f32
    %678 = vector.broadcast %cst_288 : f32 to vector<8x32xf32>
    %679 = arith.addf %678, %677 : vector<8x32xf32>
    %680 = arith.divf %678, %679 : vector<8x32xf32>
    %681 = vector.extract_strided_slice %674 {offsets = [0, 32], sizes = [8, 32], strides = [1, 1]} : vector<8x128xf32> to vector<8x32xf32>
    %682 = arith.negf %681 : vector<8x32xf32>
    %683 = math.exp %682 : vector<8x32xf32>
    %cst_289 = arith.constant 1.000000e+00 : f32
    %684 = vector.broadcast %cst_289 : f32 to vector<8x32xf32>
    %685 = arith.addf %684, %683 : vector<8x32xf32>
    %686 = arith.divf %684, %685 : vector<8x32xf32>
    %687 = vector.extract_strided_slice %674 {offsets = [0, 64], sizes = [8, 32], strides = [1, 1]} : vector<8x128xf32> to vector<8x32xf32>
    %688 = math.tanh %687 : vector<8x32xf32>
    %689 = vector.extract_strided_slice %674 {offsets = [0, 96], sizes = [8, 32], strides = [1, 1]} : vector<8x128xf32> to vector<8x32xf32>
    %690 = arith.negf %689 : vector<8x32xf32>
    %691 = math.exp %690 : vector<8x32xf32>
    %cst_290 = arith.constant 1.000000e+00 : f32
    %692 = vector.broadcast %cst_290 : f32 to vector<8x32xf32>
    %693 = arith.addf %692, %691 : vector<8x32xf32>
    %694 = arith.divf %692, %693 : vector<8x32xf32>
    %695 = arith.mulf %686, %672 : vector<8x32xf32>
    %696 = arith.mulf %680, %688 : vector<8x32xf32>
    %697 = arith.addf %695, %696 : vector<8x32xf32>
    %698 = math.tanh %697 : vector<8x32xf32>
    %699 = arith.mulf %694, %698 : vector<8x32xf32>
    %700 = vector.broadcast %667 : i32 to vector<8x1xi32>
    %701 = arith.cmpi slt, %700, %3 : vector<8x1xi32>
    %c0_291 = arith.constant 0 : index
    %c0_292 = arith.constant 0 : index
    %702 = vector.load %arg8[%c0_291, %c0_292] : memref<8x32xf32, #tpu.memory_space<vmem>>, vector<8x32xf32>
    %703 = vector.shape_cast %701 : vector<8x1xi1> to vector<8x1xi1>
    %704 = vector.broadcast %703 : vector<8x1xi1> to vector<8x32xi1>
    %705 = arith.select %704, %699, %702 : vector<8x32xi1>, vector<8x32xf32>
    %c0_293 = arith.constant 0 : index
    %c0_294 = arith.constant 0 : index
    %706 = vector.load %arg8[%c0_293, %c0_294] : memref<8x32xf32, #tpu.memory_space<vmem>>, vector<8x32xf32>
    tpu.vector_store %arg8[%c0_293, %c0_294], %705 {strides = array<i32>} : memref<8x32xf32, #tpu.memory_space<vmem>>, vector<8x32xf32>,
    %c0_295 = arith.constant 0 : index
    %c0_296 = arith.constant 0 : index
    %707 = vector.load %arg9[%c0_295, %c0_296] : memref<8x32xf32, #tpu.memory_space<vmem>>, vector<8x32xf32>
    %708 = vector.shape_cast %701 : vector<8x1xi1> to vector<8x1xi1>
    %709 = vector.broadcast %708 : vector<8x1xi1> to vector<8x32xi1>
    %710 = arith.select %709, %697, %707 : vector<8x32xi1>, vector<8x32xf32>
    %c0_297 = arith.constant 0 : index
    %c0_298 = arith.constant 0 : index
    %711 = vector.load %arg9[%c0_297, %c0_298] : memref<8x32xf32, #tpu.memory_space<vmem>>, vector<8x32xf32>
    tpu.vector_store %arg9[%c0_297, %c0_298], %710 {strides = array<i32>} : memref<8x32xf32, #tpu.memory_space<vmem>>, vector<8x32xf32>,
    %cst_299 = arith.constant 0.000000e+00 : f32
    %712 = vector.shape_cast %701 : vector<8x1xi1> to vector<8x1xi1>
    %713 = vector.broadcast %712 : vector<8x1xi1> to vector<8x32xi1>
    %714 = vector.broadcast %cst_299 : f32 to vector<8x32xf32>
    %715 = arith.select %713, %699, %714 : vector<8x32xi1>, vector<8x32xf32>
    %716 = arith.index_cast %c6_i32 : i32 to index
    %c0_300 = arith.constant 0 : index
    %c0_301 = arith.constant 0 : index
    %717 = vector.load %arg6[%716, %c0_300, %c0_301] : memref<8x8x32xf32, #tpu.memory_space<vmem>>, vector<1x8x32xf32>
    %718 = vector.shape_cast %717 : vector<1x8x32xf32> to vector<8x32xf32>
    %719 = vector.shape_cast %715 : vector<8x32xf32> to vector<1x8x32xf32>
    tpu.vector_store %arg6[%716, %c0_300, %c0_301], %719 {strides = array<i32>} : memref<8x8x32xf32, #tpu.memory_space<vmem>>, vector<1x8x32xf32>,
    %c7_i32_302 = arith.constant 7 : i32
    %720 = arith.subi %c7_i32_302, %c6_i32 : i32
    %c0_i32_303 = arith.constant 0 : i32
    %721 = arith.subi %c0_i32_303, %arg0 : i32
    %c8_i32_304 = arith.constant 8 : i32
    %722 = arith.muli %721, %c8_i32_304 : i32
    %723 = arith.addi %722, %720 : i32
    %724 = arith.index_cast %720 : i32 to index
    %c0_305 = arith.constant 0 : index
    %c0_306 = arith.constant 0 : index
    %725 = vector.load %arg3[%724, %c0_305, %c0_306] : memref<8x8x128xf32, #tpu.memory_space<vmem>>, vector<1x8x128xf32>
    %726 = vector.shape_cast %725 : vector<1x8x128xf32> to vector<8x128xf32>
    %c0_307 = arith.constant 0 : index
    %c0_308 = arith.constant 0 : index
    %727 = vector.load %arg10[%c0_307, %c0_308] : memref<8x32xf32, #tpu.memory_space<vmem>>, vector<8x32xf32>
    %c0_309 = arith.constant 0 : index
    %c0_310 = arith.constant 0 : index
    %728 = vector.load %arg11[%c0_309, %c0_310] : memref<8x32xf32, #tpu.memory_space<vmem>>, vector<8x32xf32>
    %cst_311 = arith.constant dense<0.000000e+00> : vector<8x128xf32>
    %729 = tpu.matmul %727, %5, %cst_311 {dimension_numbers = #tpu.dot_dimension_numbers<[1], [0], [0], [1], [0, 0, 1, 1], [], []>} : vector<8x32xf32>, vector<32x128xf32>, vector<8x128xf32> -> vector<8x128xf32>
    %730 = arith.addf %726, %729 : vector<8x128xf32>
    %731 = vector.extract_strided_slice %730 {offsets = [0, 0], sizes = [8, 32], strides = [1, 1]} : vector<8x128xf32> to vector<8x32xf32>
    %732 = arith.negf %731 : vector<8x32xf32>
    %733 = math.exp %732 : vector<8x32xf32>
    %cst_312 = arith.constant 1.000000e+00 : f32
    %734 = vector.broadcast %cst_312 : f32 to vector<8x32xf32>
    %735 = arith.addf %734, %733 : vector<8x32xf32>
    %736 = arith.divf %734, %735 : vector<8x32xf32>
    %737 = vector.extract_strided_slice %730 {offsets = [0, 32], sizes = [8, 32], strides = [1, 1]} : vector<8x128xf32> to vector<8x32xf32>
    %738 = arith.negf %737 : vector<8x32xf32>
    %739 = math.exp %738 : vector<8x32xf32>
    %cst_313 = arith.constant 1.000000e+00 : f32
    %740 = vector.broadcast %cst_313 : f32 to vector<8x32xf32>
    %741 = arith.addf %740, %739 : vector<8x32xf32>
    %742 = arith.divf %740, %741 : vector<8x32xf32>
    %743 = vector.extract_strided_slice %730 {offsets = [0, 64], sizes = [8, 32], strides = [1, 1]} : vector<8x128xf32> to vector<8x32xf32>
    %744 = math.tanh %743 : vector<8x32xf32>
    %745 = vector.extract_strided_slice %730 {offsets = [0, 96], sizes = [8, 32], strides = [1, 1]} : vector<8x128xf32> to vector<8x32xf32>
    %746 = arith.negf %745 : vector<8x32xf32>
    %747 = math.exp %746 : vector<8x32xf32>
    %cst_314 = arith.constant 1.000000e+00 : f32
    %748 = vector.broadcast %cst_314 : f32 to vector<8x32xf32>
    %749 = arith.addf %748, %747 : vector<8x32xf32>
    %750 = arith.divf %748, %749 : vector<8x32xf32>
    %751 = arith.mulf %742, %728 : vector<8x32xf32>
    %752 = arith.mulf %736, %744 : vector<8x32xf32>
    %753 = arith.addf %751, %752 : vector<8x32xf32>
    %754 = math.tanh %753 : vector<8x32xf32>
    %755 = arith.mulf %750, %754 : vector<8x32xf32>
    %756 = vector.broadcast %723 : i32 to vector<8x1xi32>
    %757 = arith.cmpi slt, %756, %3 : vector<8x1xi32>
    %c0_315 = arith.constant 0 : index
    %c0_316 = arith.constant 0 : index
    %758 = vector.load %arg10[%c0_315, %c0_316] : memref<8x32xf32, #tpu.memory_space<vmem>>, vector<8x32xf32>
    %759 = vector.shape_cast %757 : vector<8x1xi1> to vector<8x1xi1>
    %760 = vector.broadcast %759 : vector<8x1xi1> to vector<8x32xi1>
    %761 = arith.select %760, %755, %758 : vector<8x32xi1>, vector<8x32xf32>
    %c0_317 = arith.constant 0 : index
    %c0_318 = arith.constant 0 : index
    %762 = vector.load %arg10[%c0_317, %c0_318] : memref<8x32xf32, #tpu.memory_space<vmem>>, vector<8x32xf32>
    tpu.vector_store %arg10[%c0_317, %c0_318], %761 {strides = array<i32>} : memref<8x32xf32, #tpu.memory_space<vmem>>, vector<8x32xf32>,
    %c0_319 = arith.constant 0 : index
    %c0_320 = arith.constant 0 : index
    %763 = vector.load %arg11[%c0_319, %c0_320] : memref<8x32xf32, #tpu.memory_space<vmem>>, vector<8x32xf32>
    %764 = vector.shape_cast %757 : vector<8x1xi1> to vector<8x1xi1>
    %765 = vector.broadcast %764 : vector<8x1xi1> to vector<8x32xi1>
    %766 = arith.select %765, %753, %763 : vector<8x32xi1>, vector<8x32xf32>
    %c0_321 = arith.constant 0 : index
    %c0_322 = arith.constant 0 : index
    %767 = vector.load %arg11[%c0_321, %c0_322] : memref<8x32xf32, #tpu.memory_space<vmem>>, vector<8x32xf32>
    tpu.vector_store %arg11[%c0_321, %c0_322], %766 {strides = array<i32>} : memref<8x32xf32, #tpu.memory_space<vmem>>, vector<8x32xf32>,
    %cst_323 = arith.constant 0.000000e+00 : f32
    %768 = vector.shape_cast %757 : vector<8x1xi1> to vector<8x1xi1>
    %769 = vector.broadcast %768 : vector<8x1xi1> to vector<8x32xi1>
    %770 = vector.broadcast %cst_323 : f32 to vector<8x32xf32>
    %771 = arith.select %769, %755, %770 : vector<8x32xi1>, vector<8x32xf32>
    %772 = arith.index_cast %720 : i32 to index
    %c0_324 = arith.constant 0 : index
    %c0_325 = arith.constant 0 : index
    %773 = vector.load %arg7[%772, %c0_324, %c0_325] : memref<8x8x32xf32, #tpu.memory_space<vmem>>, vector<1x8x32xf32>
    %774 = vector.shape_cast %773 : vector<1x8x32xf32> to vector<8x32xf32>
    %775 = vector.shape_cast %771 : vector<8x32xf32> to vector<1x8x32xf32>
    tpu.vector_store %arg7[%772, %c0_324, %c0_325], %775 {strides = array<i32>} : memref<8x8x32xf32, #tpu.memory_space<vmem>>, vector<1x8x32xf32>,
    %c7_i32_326 = arith.constant 7 : i32
    %c8_i32_327 = arith.constant 8 : i32
    %776 = arith.muli %arg0, %c8_i32_327 : i32
    %777 = arith.addi %776, %c7_i32_326 : i32
    %778 = arith.index_cast %c7_i32_326 : i32 to index
    %c0_328 = arith.constant 0 : index
    %c0_329 = arith.constant 0 : index
    %779 = vector.load %arg2[%778, %c0_328, %c0_329] : memref<8x8x128xf32, #tpu.memory_space<vmem>>, vector<1x8x128xf32>
    %780 = vector.shape_cast %779 : vector<1x8x128xf32> to vector<8x128xf32>
    %c0_330 = arith.constant 0 : index
    %c0_331 = arith.constant 0 : index
    %781 = vector.load %arg8[%c0_330, %c0_331] : memref<8x32xf32, #tpu.memory_space<vmem>>, vector<8x32xf32>
    %c0_332 = arith.constant 0 : index
    %c0_333 = arith.constant 0 : index
    %782 = vector.load %arg9[%c0_332, %c0_333] : memref<8x32xf32, #tpu.memory_space<vmem>>, vector<8x32xf32>
    %cst_334 = arith.constant dense<0.000000e+00> : vector<8x128xf32>
    %783 = tpu.matmul %781, %4, %cst_334 {dimension_numbers = #tpu.dot_dimension_numbers<[1], [0], [0], [1], [0, 0, 1, 1], [], []>} : vector<8x32xf32>, vector<32x128xf32>, vector<8x128xf32> -> vector<8x128xf32>
    %784 = arith.addf %780, %783 : vector<8x128xf32>
    %785 = vector.extract_strided_slice %784 {offsets = [0, 0], sizes = [8, 32], strides = [1, 1]} : vector<8x128xf32> to vector<8x32xf32>
    %786 = arith.negf %785 : vector<8x32xf32>
    %787 = math.exp %786 : vector<8x32xf32>
    %cst_335 = arith.constant 1.000000e+00 : f32
    %788 = vector.broadcast %cst_335 : f32 to vector<8x32xf32>
    %789 = arith.addf %788, %787 : vector<8x32xf32>
    %790 = arith.divf %788, %789 : vector<8x32xf32>
    %791 = vector.extract_strided_slice %784 {offsets = [0, 32], sizes = [8, 32], strides = [1, 1]} : vector<8x128xf32> to vector<8x32xf32>
    %792 = arith.negf %791 : vector<8x32xf32>
    %793 = math.exp %792 : vector<8x32xf32>
    %cst_336 = arith.constant 1.000000e+00 : f32
    %794 = vector.broadcast %cst_336 : f32 to vector<8x32xf32>
    %795 = arith.addf %794, %793 : vector<8x32xf32>
    %796 = arith.divf %794, %795 : vector<8x32xf32>
    %797 = vector.extract_strided_slice %784 {offsets = [0, 64], sizes = [8, 32], strides = [1, 1]} : vector<8x128xf32> to vector<8x32xf32>
    %798 = math.tanh %797 : vector<8x32xf32>
    %799 = vector.extract_strided_slice %784 {offsets = [0, 96], sizes = [8, 32], strides = [1, 1]} : vector<8x128xf32> to vector<8x32xf32>
    %800 = arith.negf %799 : vector<8x32xf32>
    %801 = math.exp %800 : vector<8x32xf32>
    %cst_337 = arith.constant 1.000000e+00 : f32
    %802 = vector.broadcast %cst_337 : f32 to vector<8x32xf32>
    %803 = arith.addf %802, %801 : vector<8x32xf32>
    %804 = arith.divf %802, %803 : vector<8x32xf32>
    %805 = arith.mulf %796, %782 : vector<8x32xf32>
    %806 = arith.mulf %790, %798 : vector<8x32xf32>
    %807 = arith.addf %805, %806 : vector<8x32xf32>
    %808 = math.tanh %807 : vector<8x32xf32>
    %809 = arith.mulf %804, %808 : vector<8x32xf32>
    %810 = vector.broadcast %777 : i32 to vector<8x1xi32>
    %811 = arith.cmpi slt, %810, %3 : vector<8x1xi32>
    %c0_338 = arith.constant 0 : index
    %c0_339 = arith.constant 0 : index
    %812 = vector.load %arg8[%c0_338, %c0_339] : memref<8x32xf32, #tpu.memory_space<vmem>>, vector<8x32xf32>
    %813 = vector.shape_cast %811 : vector<8x1xi1> to vector<8x1xi1>
    %814 = vector.broadcast %813 : vector<8x1xi1> to vector<8x32xi1>
    %815 = arith.select %814, %809, %812 : vector<8x32xi1>, vector<8x32xf32>
    %c0_340 = arith.constant 0 : index
    %c0_341 = arith.constant 0 : index
    %816 = vector.load %arg8[%c0_340, %c0_341] : memref<8x32xf32, #tpu.memory_space<vmem>>, vector<8x32xf32>
    tpu.vector_store %arg8[%c0_340, %c0_341], %815 {strides = array<i32>} : memref<8x32xf32, #tpu.memory_space<vmem>>, vector<8x32xf32>,
    %c0_342 = arith.constant 0 : index
    %c0_343 = arith.constant 0 : index
    %817 = vector.load %arg9[%c0_342, %c0_343] : memref<8x32xf32, #tpu.memory_space<vmem>>, vector<8x32xf32>
    %818 = vector.shape_cast %811 : vector<8x1xi1> to vector<8x1xi1>
    %819 = vector.broadcast %818 : vector<8x1xi1> to vector<8x32xi1>
    %820 = arith.select %819, %807, %817 : vector<8x32xi1>, vector<8x32xf32>
    %c0_344 = arith.constant 0 : index
    %c0_345 = arith.constant 0 : index
    %821 = vector.load %arg9[%c0_344, %c0_345] : memref<8x32xf32, #tpu.memory_space<vmem>>, vector<8x32xf32>
    tpu.vector_store %arg9[%c0_344, %c0_345], %820 {strides = array<i32>} : memref<8x32xf32, #tpu.memory_space<vmem>>, vector<8x32xf32>,
    %cst_346 = arith.constant 0.000000e+00 : f32
    %822 = vector.shape_cast %811 : vector<8x1xi1> to vector<8x1xi1>
    %823 = vector.broadcast %822 : vector<8x1xi1> to vector<8x32xi1>
    %824 = vector.broadcast %cst_346 : f32 to vector<8x32xf32>
    %825 = arith.select %823, %809, %824 : vector<8x32xi1>, vector<8x32xf32>
    %826 = arith.index_cast %c7_i32_326 : i32 to index
    %c0_347 = arith.constant 0 : index
    %c0_348 = arith.constant 0 : index
    %827 = vector.load %arg6[%826, %c0_347, %c0_348] : memref<8x8x32xf32, #tpu.memory_space<vmem>>, vector<1x8x32xf32>
    %828 = vector.shape_cast %827 : vector<1x8x32xf32> to vector<8x32xf32>
    %829 = vector.shape_cast %825 : vector<8x32xf32> to vector<1x8x32xf32>
    tpu.vector_store %arg6[%826, %c0_347, %c0_348], %829 {strides = array<i32>} : memref<8x8x32xf32, #tpu.memory_space<vmem>>, vector<1x8x32xf32>,
    %c7_i32_349 = arith.constant 7 : i32
    %830 = arith.subi %c7_i32_349, %c7_i32_326 : i32
    %c0_i32_350 = arith.constant 0 : i32
    %831 = arith.subi %c0_i32_350, %arg0 : i32
    %c8_i32_351 = arith.constant 8 : i32
    %832 = arith.muli %831, %c8_i32_351 : i32
    %833 = arith.addi %832, %830 : i32
    %834 = arith.index_cast %830 : i32 to index
    %c0_352 = arith.constant 0 : index
    %c0_353 = arith.constant 0 : index
    %835 = vector.load %arg3[%834, %c0_352, %c0_353] : memref<8x8x128xf32, #tpu.memory_space<vmem>>, vector<1x8x128xf32>
    %836 = vector.shape_cast %835 : vector<1x8x128xf32> to vector<8x128xf32>
    %c0_354 = arith.constant 0 : index
    %c0_355 = arith.constant 0 : index
    %837 = vector.load %arg10[%c0_354, %c0_355] : memref<8x32xf32, #tpu.memory_space<vmem>>, vector<8x32xf32>
    %c0_356 = arith.constant 0 : index
    %c0_357 = arith.constant 0 : index
    %838 = vector.load %arg11[%c0_356, %c0_357] : memref<8x32xf32, #tpu.memory_space<vmem>>, vector<8x32xf32>
    %cst_358 = arith.constant dense<0.000000e+00> : vector<8x128xf32>
    %839 = tpu.matmul %837, %5, %cst_358 {dimension_numbers = #tpu.dot_dimension_numbers<[1], [0], [0], [1], [0, 0, 1, 1], [], []>} : vector<8x32xf32>, vector<32x128xf32>, vector<8x128xf32> -> vector<8x128xf32>
    %840 = arith.addf %836, %839 : vector<8x128xf32>
    %841 = vector.extract_strided_slice %840 {offsets = [0, 0], sizes = [8, 32], strides = [1, 1]} : vector<8x128xf32> to vector<8x32xf32>
    %842 = arith.negf %841 : vector<8x32xf32>
    %843 = math.exp %842 : vector<8x32xf32>
    %cst_359 = arith.constant 1.000000e+00 : f32
    %844 = vector.broadcast %cst_359 : f32 to vector<8x32xf32>
    %845 = arith.addf %844, %843 : vector<8x32xf32>
    %846 = arith.divf %844, %845 : vector<8x32xf32>
    %847 = vector.extract_strided_slice %840 {offsets = [0, 32], sizes = [8, 32], strides = [1, 1]} : vector<8x128xf32> to vector<8x32xf32>
    %848 = arith.negf %847 : vector<8x32xf32>
    %849 = math.exp %848 : vector<8x32xf32>
    %cst_360 = arith.constant 1.000000e+00 : f32
    %850 = vector.broadcast %cst_360 : f32 to vector<8x32xf32>
    %851 = arith.addf %850, %849 : vector<8x32xf32>
    %852 = arith.divf %850, %851 : vector<8x32xf32>
    %853 = vector.extract_strided_slice %840 {offsets = [0, 64], sizes = [8, 32], strides = [1, 1]} : vector<8x128xf32> to vector<8x32xf32>
    %854 = math.tanh %853 : vector<8x32xf32>
    %855 = vector.extract_strided_slice %840 {offsets = [0, 96], sizes = [8, 32], strides = [1, 1]} : vector<8x128xf32> to vector<8x32xf32>
    %856 = arith.negf %855 : vector<8x32xf32>
    %857 = math.exp %856 : vector<8x32xf32>
    %cst_361 = arith.constant 1.000000e+00 : f32
    %858 = vector.broadcast %cst_361 : f32 to vector<8x32xf32>
    %859 = arith.addf %858, %857 : vector<8x32xf32>
    %860 = arith.divf %858, %859 : vector<8x32xf32>
    %861 = arith.mulf %852, %838 : vector<8x32xf32>
    %862 = arith.mulf %846, %854 : vector<8x32xf32>
    %863 = arith.addf %861, %862 : vector<8x32xf32>
    %864 = math.tanh %863 : vector<8x32xf32>
    %865 = arith.mulf %860, %864 : vector<8x32xf32>
    %866 = vector.broadcast %833 : i32 to vector<8x1xi32>
    %867 = arith.cmpi slt, %866, %3 : vector<8x1xi32>
    %c0_362 = arith.constant 0 : index
    %c0_363 = arith.constant 0 : index
    %868 = vector.load %arg10[%c0_362, %c0_363] : memref<8x32xf32, #tpu.memory_space<vmem>>, vector<8x32xf32>
    %869 = vector.shape_cast %867 : vector<8x1xi1> to vector<8x1xi1>
    %870 = vector.broadcast %869 : vector<8x1xi1> to vector<8x32xi1>
    %871 = arith.select %870, %865, %868 : vector<8x32xi1>, vector<8x32xf32>
    %c0_364 = arith.constant 0 : index
    %c0_365 = arith.constant 0 : index
    %872 = vector.load %arg10[%c0_364, %c0_365] : memref<8x32xf32, #tpu.memory_space<vmem>>, vector<8x32xf32>
    tpu.vector_store %arg10[%c0_364, %c0_365], %871 {strides = array<i32>} : memref<8x32xf32, #tpu.memory_space<vmem>>, vector<8x32xf32>,
    %c0_366 = arith.constant 0 : index
    %c0_367 = arith.constant 0 : index
    %873 = vector.load %arg11[%c0_366, %c0_367] : memref<8x32xf32, #tpu.memory_space<vmem>>, vector<8x32xf32>
    %874 = vector.shape_cast %867 : vector<8x1xi1> to vector<8x1xi1>
    %875 = vector.broadcast %874 : vector<8x1xi1> to vector<8x32xi1>
    %876 = arith.select %875, %863, %873 : vector<8x32xi1>, vector<8x32xf32>
    %c0_368 = arith.constant 0 : index
    %c0_369 = arith.constant 0 : index
    %877 = vector.load %arg11[%c0_368, %c0_369] : memref<8x32xf32, #tpu.memory_space<vmem>>, vector<8x32xf32>
    tpu.vector_store %arg11[%c0_368, %c0_369], %876 {strides = array<i32>} : memref<8x32xf32, #tpu.memory_space<vmem>>, vector<8x32xf32>,
    %cst_370 = arith.constant 0.000000e+00 : f32
    %878 = vector.shape_cast %867 : vector<8x1xi1> to vector<8x1xi1>
    %879 = vector.broadcast %878 : vector<8x1xi1> to vector<8x32xi1>
    %880 = vector.broadcast %cst_370 : f32 to vector<8x32xf32>
    %881 = arith.select %879, %865, %880 : vector<8x32xi1>, vector<8x32xf32>
    %882 = arith.index_cast %830 : i32 to index
    %c0_371 = arith.constant 0 : index
    %c0_372 = arith.constant 0 : index
    %883 = vector.load %arg7[%882, %c0_371, %c0_372] : memref<8x8x32xf32, #tpu.memory_space<vmem>>, vector<1x8x32xf32>
    %884 = vector.shape_cast %883 : vector<1x8x32xf32> to vector<8x32xf32>
    %885 = vector.shape_cast %881 : vector<8x32xf32> to vector<1x8x32xf32>
    tpu.vector_store %arg7[%882, %c0_371, %c0_372], %885 {strides = array<i32>} : memref<8x8x32xf32, #tpu.memory_space<vmem>>, vector<1x8x32xf32>,
    %c8_i32_373 = arith.constant 8 : i32
    return
  }
  func.func @transform_0(%arg0: i32) -> (i32, i32) {
    %c0_i32 = arith.constant 0 : i32
    %c0_i32_0 = arith.constant 0 : i32
    %c0_i32_1 = arith.constant 0 : i32
    return %c0_i32, %c0_i32_0 : i32, i32
  }
  func.func @transform_1(%arg0: i32) -> (i32, i32, i32) {
    %c0_i32 = arith.constant 0 : i32
    %c0_i32_0 = arith.constant 0 : i32
    %c0_i32_1 = arith.constant 0 : i32
    return %arg0, %c0_i32, %c0_i32_0 : i32, i32, i32
  }
  func.func @transform_2(%arg0: i32) -> (i32, i32, i32) {
    %c0_i32 = arith.constant 0 : i32
    %0 = arith.subi %c0_i32, %arg0 : i32
    %c0_i32_0 = arith.constant 0 : i32
    %c0_i32_1 = arith.constant 0 : i32
    %c0_i32_2 = arith.constant 0 : i32
    return %0, %c0_i32_0, %c0_i32_1 : i32, i32, i32
  }
  func.func @transform_3(%arg0: i32) -> (i32, i32) {
    %c0_i32 = arith.constant 0 : i32
    %c0_i32_0 = arith.constant 0 : i32
    %c0_i32_1 = arith.constant 0 : i32
    return %c0_i32, %c0_i32_0 : i32, i32
  }
  func.func @transform_4(%arg0: i32) -> (i32, i32) {
    %c0_i32 = arith.constant 0 : i32
    %c0_i32_0 = arith.constant 0 : i32
    %c0_i32_1 = arith.constant 0 : i32
    return %c0_i32, %c0_i32_0 : i32, i32
  }
  func.func @transform_5(%arg0: i32) -> (i32, i32, i32) {
    %c0_i32 = arith.constant 0 : i32
    %c0_i32_0 = arith.constant 0 : i32
    %c0_i32_1 = arith.constant 0 : i32
    return %arg0, %c0_i32, %c0_i32_0 : i32, i32, i32
  }
  func.func @transform_6(%arg0: i32) -> (i32, i32, i32) {
    %c0_i32 = arith.constant 0 : i32
    %0 = arith.subi %c0_i32, %arg0 : i32
    %c0_i32_0 = arith.constant 0 : i32
    %c0_i32_1 = arith.constant 0 : i32
    %c0_i32_2 = arith.constant 0 : i32
    return %0, %c0_i32_0, %c0_i32_1 : i32, i32, i32
  }
}

</mosaic_0001>

<llo_original>
// kernel: bi_lstm_forward.9
$region0: #{bi_lstm_forward.9}
  #allocation0 [shape = 'u32[]', space=smem, size = 0x4, offset = 0x4, fixed_abs, tag = 'smem constant byte address 0x4 - core index']
  #allocation1 [shape = 'u32[144,128]{1,0:T(1,128)}', space=vmem, size = 0x12000, scoped, tag = 'internal scratch']
  %s0 = inlined_call_operand.vmem [shape: f32[64,32], index: 0, kind: input, shape index: {}]
  %s1 = inlined_call_operand.vmem [shape: f32[64,32], index: 1, kind: input, shape index: {}]
  %s2 = inlined_call_operand.vmem [shape: f32[32,8], index: 2, kind: input, shape index: {}]
  %s3 = inlined_call_operand.vmem [shape: f32[32,8], index: 3, kind: input, shape index: {}]
  %s4 = inlined_call_operand.vmem [shape: f32[1,8], index: 4, kind: input, shape index: {}]
  %s5 = inlined_call_operand.vmem [shape: f32[64,8], index: 5, kind: output, shape index: {}]
  %s6 = sld [smem:[#allocation0]]
  $region30: #{bi_lstm_forward.9} parent=0
    _
  %s8 = ssub.s32 1, %s6
  %s9 = scalar_select 0, %s8, %s6
  // Predicated region
  $region2: #{bi_lstm_forward.9} parent=0 // pred_check
    _
  $region3: #{bi_lstm_forward.9} parent=0 // pred_check_branch
    %11 = sbr.rel (0) target = $region5
  $region4: #{bi_lstm_forward.9} parent=0 // pred_region
    _
  $region5: #{bi_lstm_forward.9} parent=0 // pred_fallthru
    _
  // Predicated region
  $region6: #{bi_lstm_forward.9} parent=0 // pred_check
    _
  $region7: #{bi_lstm_forward.9} parent=0 // pred_check_branch
    %13 = sbr.rel (0) target = $region9
  $region8: #{bi_lstm_forward.9} parent=0 // pred_region
    _
  $region9: #{bi_lstm_forward.9} parent=0 // pred_fallthru
    _
  // Predicated region
  $region10: #{bi_lstm_forward.9} parent=0 // pred_check
    _
  $region11: #{bi_lstm_forward.9} parent=0 // pred_check_branch
    %15 = sbr.rel (0) target = $region13
  $region12: #{bi_lstm_forward.9} parent=0 // pred_region
    _
  $region13: #{bi_lstm_forward.9} parent=0 // pred_fallthru
    _
  // Predicated region
  $region14: #{bi_lstm_forward.9} parent=0 // pred_check
    _
  $region15: #{bi_lstm_forward.9} parent=0 // pred_check_branch
    %17 = sbr.rel (0) target = $region17
  $region16: #{bi_lstm_forward.9} parent=0 // pred_region
    _
  $region17: #{bi_lstm_forward.9} parent=0 // pred_fallthru
    _
  // Predicated region
  $region18: #{bi_lstm_forward.9} parent=0 // pred_check
    _
  $region19: #{bi_lstm_forward.9} parent=0 // pred_check_branch
    %19 = sbr.rel (0) target = $region21
  $region20: #{bi_lstm_forward.9} parent=0 // pred_region
    _
  $region21: #{bi_lstm_forward.9} parent=0 // pred_fallthru
    _
  %v20 = vld [vmem:[%s0] sm:$0xff]
  %v21 = vld [vmem:[%s0 + $0x8] sm:$0xff]
  %v22 = vld [vmem:[%s0 + $0x10] sm:$0xff]
  %v23 = vld [vmem:[%s0 + $0x18] sm:$0xff]
  %v24 = vld [vmem:[%s0 + $0x20] sm:$0xff]
  %v25 = vld [vmem:[%s0 + $0x28] sm:$0xff]
  %v26 = vld [vmem:[%s0 + $0x30] sm:$0xff]
  %v27 = vld [vmem:[%s0 + $0x38] sm:$0xff]
  %v28 = vld [vmem:[%s2] sm:$0xff]
  %v29 = vld [vmem:[%s2 + $0x8] sm:$0xff]
  %v30 = vld [vmem:[%s2 + $0x10] sm:$0xff]
  %v31 = vld [vmem:[%s2 + $0x18] sm:$0xff]
  %v32 = vld [vmem:[%s1] sm:$0xff]
  %v33 = vld [vmem:[%s1 + $0x8] sm:$0xff]
  %v34 = vld [vmem:[%s1 + $0x10] sm:$0xff]
  %v35 = vld [vmem:[%s1 + $0x18] sm:$0xff]
  %v36 = vld [vmem:[%s1 + $0x20] sm:$0xff]
  %v37 = vld [vmem:[%s1 + $0x28] sm:$0xff]
  %v38 = vld [vmem:[%s1 + $0x30] sm:$0xff]
  %v39 = vld [vmem:[%s1 + $0x38] sm:$0xff]
  %v40 = vld [vmem:[%s3] sm:$0xff]
  %v41 = vld [vmem:[%s3 + $0x8] sm:$0xff]
  %v42 = vld [vmem:[%s3 + $0x10] sm:$0xff]
  %v43 = vld [vmem:[%s3 + $0x18] sm:$0xff]
  %vm44 = vcmask 261120
  %v46 = vsel %vm44, %v32, 0
  %v49 = vsel %vm44, %v33, 0
  %v52 = vsel %vm44, %v34, 0
  %v55 = vsel %vm44, %v35, 0
  %v58 = vsel %vm44, %v36, 0
  %v61 = vsel %vm44, %v37, 0
  %v64 = vsel %vm44, %v38, 0
  %v67 = vsel %vm44, %v39, 0
  %69 = vmatprep.subr.mxu0 0.0
  %70 = vmatpush1.msra.mxu0 0.0
  %71 = vmatprep.subr.mxu0 0.0
  %72 = vmatpush1.msra.mxu0 0.0
  %73 = vmatprep.subr.mxu0 0.0
  %74 = vmatpush1.msra.mxu0 0.0
  %75 = vmatprep.subr.mxu0 0.0
  %76 = vmatpush1.msra.mxu0 0.0
  %77 = vmatprep.subr.mxu0 0.0
  %78 = vmatpush1.msra.mxu0 0.0
  %79 = vmatprep.subr.mxu0 0.0
  %80 = vmatpush1.msra.mxu0 0.0
  %81 = vmatprep.subr.mxu0 0.0
  %82 = vmatpush1.msra.mxu0 0.0
  %83 = vmatprep.subr.mxu0 0.0
  %84 = vmatpush1.msra.mxu0 0.0
  %85 = vmatprep.subr.mxu0 0.0
  %86 = vmatpush1.msra.mxu0 0.0
  %87 = vmatprep.subr.mxu0 0.0
  %88 = vmatpush1.msra.mxu0 0.0
  %89 = vmatprep.subr.mxu0 0.0
  %90 = vmatpush1.msra.mxu0 0.0
  %91 = vmatprep.subr.mxu0 0.0
  %92 = vmatpush1.msra.mxu0 0.0
  %93 = vmatprep.subr.mxu0 0.0
  %94 = vmatpush1.msra.mxu0 %v43
  %95 = vmatprep.subr.mxu0 0.0
  %96 = vmatpush1.msra.mxu0 %v42
  %97 = vmatprep.subr.mxu0 0.0
  %98 = vmatpush1.msra.mxu0 %v41
  %99 = vmatprep.subr.mxu0 0.0
  %100 = vmatpush1.msra.mxu0 %v40
  %101 = vmatprep.subr.mxu0 0.0
  %102 = vmatpush2.msra.mxu0 0.0
  %103 = vmatprep.subr.mxu0 0.0
  %104 = vmatpush2.msra.mxu0 0.0
  %105 = vmatprep.subr.mxu0 0.0
  %106 = vmatpush2.msra.mxu0 0.0
  %107 = vmatprep.subr.mxu0 0.0
  %108 = vmatpush2.msra.mxu0 0.0
  %109 = vmatprep.subr.mxu0 0.0
  %110 = vmatpush2.msra.mxu0 0.0
  %111 = vmatprep.subr.mxu0 0.0
  %112 = vmatpush2.msra.mxu0 0.0
  %113 = vmatprep.subr.mxu0 0.0
  %114 = vmatpush2.msra.mxu0 0.0
  %115 = vmatprep.subr.mxu0 0.0
  %116 = vmatpush2.msra.mxu0 0.0
  %117 = vmatprep.subr.mxu0 0.0
  %118 = vmatpush2.msra.mxu0 0.0
  %119 = vmatprep.subr.mxu0 0.0
  %120 = vmatpush2.msra.mxu0 0.0
  %121 = vmatprep.subr.mxu0 0.0
  %122 = vmatpush2.msra.mxu0 0.0
  %123 = vmatprep.subr.mxu0 0.0
  %124 = vmatpush2.msra.mxu0 0.0
  %125 = vmatprep.subr.mxu0 0.0
  %126 = vmatpush2.msra.mxu0 0.0
  %127 = vmatprep.subr.mxu0 0.0
  %128 = vmatpush2.msra.mxu0 0.0
  %129 = vmatprep.subr.mxu0 0.0
  %130 = vmatpush2.msra.mxu0 0.0
  %131 = vmatprep.subr.mxu0 0.0
  %132 = vmatpush2.msra.mxu0 0.0
  %133 = vmatprep.mubr.f32.mxu0 0.0
  %134 = vmatmul.mubr.f32.gmra.mxu0 %v46
  %v135 = vpop.f32.mrf.mxu0
  %v136 = vadd.f32 0.0, %v135
  %v137 = vpop.f32.mrf.mxu0
  %138 = vmatprep.mubr.f32.mxu0 0.0
  %139 = vmatmul.mubr.f32.gmra.mxu0 %v49
  %v140 = vpop.f32.mrf.mxu0
  %v141 = vadd.f32 0.0, %v140
  %v142 = vpop.f32.mrf.mxu0
  %143 = vmatprep.mubr.f32.mxu0 0.0
  %144 = vmatmul.mubr.f32.gmra.mxu0 %v52
  %v145 = vpop.f32.mrf.mxu0
  %v146 = vadd.f32 0.0, %v145
  %v147 = vpop.f32.mrf.mxu0
  %148 = vmatprep.mubr.f32.mxu0 0.0
  %149 = vmatmul.mubr.f32.gmra.mxu0 %v55
  %v150 = vpop.f32.mrf.mxu0
  %v151 = vadd.f32 0.0, %v150
  %v152 = vpop.f32.mrf.mxu0
  %153 = vmatprep.mubr.f32.mxu0 0.0
  %154 = vmatmul.mubr.f32.gmra.mxu0 %v58
  %v155 = vpop.f32.mrf.mxu0
  %v156 = vadd.f32 0.0, %v155
  %v157 = vpop.f32.mrf.mxu0
  %158 = vmatprep.mubr.f32.mxu0 0.0
  %159 = vmatmul.mubr.f32.gmra.mxu0 %v61
  %v160 = vpop.f32.mrf.mxu0
  %v161 = vadd.f32 0.0, %v160
  %v162 = vpop.f32.mrf.mxu0
  %163 = vmatprep.mubr.f32.mxu0 0.0
  %164 = vmatmul.mubr.f32.gmra.mxu0 %v64
  %v165 = vpop.f32.mrf.mxu0
  %v166 = vadd.f32 0.0, %v165
  %v167 = vpop.f32.mrf.mxu0
  %168 = vmatprep.mubr.f32.mxu0 0.0
  %169 = vmatmul.mubr.f32.gmra.mxu0 %v67
  %v170 = vpop.f32.mrf.mxu0
  %v171 = vadd.f32 0.0, %v170
  %v172 = vpop.f32.mrf.mxu0
  %173 = vdwg.mxu0
  %v175 = vsel %vm44, %v20, 0
  %v178 = vsel %vm44, %v21, 0
  %v181 = vsel %vm44, %v22, 0
  %v184 = vsel %vm44, %v23, 0
  %v187 = vsel %vm44, %v24, 0
  %v190 = vsel %vm44, %v25, 0
  %v193 = vsel %vm44, %v26, 0
  %v196 = vsel %vm44, %v27, 0
  %198 = vmatprep.subr.mxu0 0.0
  %199 = vmatpush1.msra.mxu0 0.0
  %200 = vmatprep.subr.mxu0 0.0
  %201 = vmatpush1.msra.mxu0 0.0
  %202 = vmatprep.subr.mxu0 0.0
  %203 = vmatpush1.msra.mxu0 0.0
  %204 = vmatprep.subr.mxu0 0.0
  %205 = vmatpush1.msra.mxu0 0.0
  %206 = vmatprep.subr.mxu0 0.0
  %207 = vmatpush1.msra.mxu0 0.0
  %208 = vmatprep.subr.mxu0 0.0
  %209 = vmatpush1.msra.mxu0 0.0
  %210 = vmatprep.subr.mxu0 0.0
  %211 = vmatpush1.msra.mxu0 0.0
  %212 = vmatprep.subr.mxu0 0.0
  %213 = vmatpush1.msra.mxu0 0.0
  %214 = vmatprep.subr.mxu0 0.0
  %215 = vmatpush1.msra.mxu0 0.0
  %216 = vmatprep.subr.mxu0 0.0
  %217 = vmatpush1.msra.mxu0 0.0
  %218 = vmatprep.subr.mxu0 0.0
  %219 = vmatpush1.msra.mxu0 0.0
  %220 = vmatprep.subr.mxu0 0.0
  %221 = vmatpush1.msra.mxu0 0.0
  %222 = vmatprep.subr.mxu0 0.0
  %223 = vmatpush1.msra.mxu0 %v31
  %224 = vmatprep.subr.mxu0 0.0
  %225 = vmatpush1.msra.mxu0 %v30
  %226 = vmatprep.subr.mxu0 0.0
  %227 = vmatpush1.msra.mxu0 %v29
  %228 = vmatprep.subr.mxu0 0.0
  %229 = vmatpush1.msra.mxu0 %v28
  %230 = vmatprep.subr.mxu0 0.0
  %231 = vmatpush2.msra.mxu0 0.0
  %232 = vmatprep.subr.mxu0 0.0
  %233 = vmatpush2.msra.mxu0 0.0
  %234 = vmatprep.subr.mxu0 0.0
  %235 = vmatpush2.msra.mxu0 0.0
  %236 = vmatprep.subr.mxu0 0.0
  %237 = vmatpush2.msra.mxu0 0.0
  %238 = vmatprep.subr.mxu0 0.0
  %239 = vmatpush2.msra.mxu0 0.0
  %240 = vmatprep.subr.mxu0 0.0
  %241 = vmatpush2.msra.mxu0 0.0
  %242 = vmatprep.subr.mxu0 0.0
  %243 = vmatpush2.msra.mxu0 0.0
  %244 = vmatprep.subr.mxu0 0.0
  %245 = vmatpush2.msra.mxu0 0.0
  %246 = vmatprep.subr.mxu0 0.0
  %247 = vmatpush2.msra.mxu0 0.0
  %248 = vmatprep.subr.mxu0 0.0
  %249 = vmatpush2.msra.mxu0 0.0
  %250 = vmatprep.subr.mxu0 0.0
  %251 = vmatpush2.msra.mxu0 0.0
  %252 = vmatprep.subr.mxu0 0.0
  %253 = vmatpush2.msra.mxu0 0.0
  %254 = vmatprep.subr.mxu0 0.0
  %255 = vmatpush2.msra.mxu0 0.0
  %256 = vmatprep.subr.mxu0 0.0
  %257 = vmatpush2.msra.mxu0 0.0
  %258 = vmatprep.subr.mxu0 0.0
  %259 = vmatpush2.msra.mxu0 0.0
  %260 = vmatprep.subr.mxu0 0.0
  %261 = vmatpush2.msra.mxu0 0.0
  %262 = vmatprep.mubr.f32.mxu0 0.0
  %263 = vmatmul.mubr.f32.gmra.mxu0 %v175
  %v264 = vpop.f32.mrf.mxu0
  %v265 = vadd.f32 %v136, %v264
  %v266 = vpop.f32.mrf.mxu0
  %267 = vmatprep.mubr.f32.mxu0 0.0
  %268 = vmatmul.mubr.f32.gmra.mxu0 %v178
  %v269 = vpop.f32.mrf.mxu0
  %v270 = vadd.f32 %v141, %v269
  %v271 = vpop.f32.mrf.mxu0
  %272 = vmatprep.mubr.f32.mxu0 0.0
  %273 = vmatmul.mubr.f32.gmra.mxu0 %v181
  %v274 = vpop.f32.mrf.mxu0
  %v275 = vadd.f32 %v146, %v274
  %v276 = vpop.f32.mrf.mxu0
  %277 = vmatprep.mubr.f32.mxu0 0.0
  %278 = vmatmul.mubr.f32.gmra.mxu0 %v184
  %v279 = vpop.f32.mrf.mxu0
  %v280 = vadd.f32 %v151, %v279
  %v281 = vpop.f32.mrf.mxu0
  %282 = vmatprep.mubr.f32.mxu0 0.0
  %283 = vmatmul.mubr.f32.gmra.mxu0 %v187
  %v284 = vpop.f32.mrf.mxu0
  %v285 = vadd.f32 %v156, %v284
  %v286 = vpop.f32.mrf.mxu0
  %287 = vmatprep.mubr.f32.mxu0 0.0
  %288 = vmatmul.mubr.f32.gmra.mxu0 %v190
  %v289 = vpop.f32.mrf.mxu0
  %v290 = vadd.f32 %v161, %v289
  %v291 = vpop.f32.mrf.mxu0
  %292 = vmatprep.mubr.f32.mxu0 0.0
  %293 = vmatmul.mubr.f32.gmra.mxu0 %v193
  %v294 = vpop.f32.mrf.mxu0
  %v295 = vadd.f32 %v166, %v294
  %v296 = vpop.f32.mrf.mxu0
  %297 = vmatprep.mubr.f32.mxu0 0.0
  %298 = vmatmul.mubr.f32.gmra.mxu0 %v196
  %v299 = vpop.f32.mrf.mxu0
  %v300 = vadd.f32 %v171, %v299
  %v301 = vpop.f32.mrf.mxu0
  %302 = vdwg.mxu0
  %v303 = vld [vmem:[%s4] sm:$0x1]
  %v305 = vlaneseq
  %v306 = vshrl.u32 %v305, 7
  %v307 = vsub.s32 0, %v306
  %v308 = vrot.slane %v303, %v307
  %v310 = vadd.f32 %v265, %v308
  %v311 = vadd.f32 %v270, %v308
  %v312 = vadd.f32 %v275, %v308
  %v313 = vadd.f32 %v280, %v308
  %v314 = vadd.f32 %v285, %v308
  %v315 = vadd.f32 %v290, %v308
  %v316 = vadd.f32 %v295, %v308
  %v317 = vadd.f32 %v300, %v308
  %vm318 = vcmask 64512
  %319 = vst.msk [vmem:[%s5] sm:$0xff] %vm318, %v310
  %320 = vst.msk [vmem:[%s5 + $0x8] sm:$0xff] %vm318, %v311
  %321 = vst.msk [vmem:[%s5 + $0x10] sm:$0xff] %vm318, %v312
  %322 = vst.msk [vmem:[%s5 + $0x18] sm:$0xff] %vm318, %v313
  %323 = vst.msk [vmem:[%s5 + $0x20] sm:$0xff] %vm318, %v314
  %324 = vst.msk [vmem:[%s5 + $0x28] sm:$0xff] %vm318, %v315
  %325 = vst.msk [vmem:[%s5 + $0x30] sm:$0xff] %vm318, %v316
  %326 = vst.msk [vmem:[%s5 + $0x38] sm:$0xff] %vm318, %v317
  // Predicated region
  $region22: #{bi_lstm_forward.9} parent=0 // pred_check
    _
  $region23: #{bi_lstm_forward.9} parent=0 // pred_check_branch
    %328 = sbr.rel (0) target = $region25
  $region24: #{bi_lstm_forward.9} parent=0 // pred_region
    _
  $region25: #{bi_lstm_forward.9} parent=0 // pred_fallthru
    _
  // Predicated region
  $region26: #{bi_lstm_forward.9} parent=0 // pred_check
    _
  $region27: #{bi_lstm_forward.9} parent=0 // pred_check_branch
    %330 = sbr.rel (0) target = $region29
  $region28: #{bi_lstm_forward.9} parent=0 // pred_region
    _
  $region29: #{bi_lstm_forward.9} parent=0 // pred_fallthru
    _

// kernel: bi_lstm_forward.5
$region0: #{bi_lstm_forward.5}
  #allocation0 [shape = 'u32[]', space=smem, size = 0x4, offset = 0x4, fixed_abs, tag = 'smem constant byte address 0x4 - core index']
  #allocation1 [shape = 'u32[144,128]{1,0:T(1,128)}', space=vmem, size = 0x12000, scoped, tag = 'internal scratch']
  %s0 = inlined_call_operand.vmem [shape: f32[64,32], index: 0, kind: input, shape index: {}]
  %s1 = inlined_call_operand.vmem [shape: f32[32,128], index: 1, kind: input, shape index: {}]
  %s2 = inlined_call_operand.vmem [shape: f32[32,128], index: 2, kind: input, shape index: {}]
  %s3 = inlined_call_operand.vmem [shape: f32[1,128], index: 3, kind: input, shape index: {}]
  %s4 = inlined_call_operand.vmem [shape: f32[1,128], index: 4, kind: input, shape index: {}]
  %s5 = inlined_call_operand.vmem [shape: f32[64,128], index: 5, kind: output, shape index: {0}]
  %s6 = inlined_call_operand.vmem [shape: f32[64,128], index: 6, kind: output, shape index: {1}]
  %7 = xla_tuple %s5, %s6
  %s8 = sld [smem:[#allocation0]]
  $region38: #{bi_lstm_forward.5} parent=0
    _
  %s10 = ssub.s32 1, %s8
  %s11 = scalar_select 0, %s10, %s8
  // Predicated region
  $region2: #{bi_lstm_forward.5} parent=0 // pred_check
    _
  $region3: #{bi_lstm_forward.5} parent=0 // pred_check_branch
    %13 = sbr.rel (0) target = $region5
  $region4: #{bi_lstm_forward.5} parent=0 // pred_region
    _
  $region5: #{bi_lstm_forward.5} parent=0 // pred_fallthru
    _
  // Predicated region
  $region6: #{bi_lstm_forward.5} parent=0 // pred_check
    _
  $region7: #{bi_lstm_forward.5} parent=0 // pred_check_branch
    %15 = sbr.rel (0) target = $region9
  $region8: #{bi_lstm_forward.5} parent=0 // pred_region
    _
  $region9: #{bi_lstm_forward.5} parent=0 // pred_fallthru
    _
  // Predicated region
  $region10: #{bi_lstm_forward.5} parent=0 // pred_check
    _
  $region11: #{bi_lstm_forward.5} parent=0 // pred_check_branch
    %17 = sbr.rel (0) target = $region13
  $region12: #{bi_lstm_forward.5} parent=0 // pred_region
    _
  $region13: #{bi_lstm_forward.5} parent=0 // pred_fallthru
    _
  // Predicated region
  $region14: #{bi_lstm_forward.5} parent=0 // pred_check
    _
  $region15: #{bi_lstm_forward.5} parent=0 // pred_check_branch
    %19 = sbr.rel (0) target = $region17
  $region16: #{bi_lstm_forward.5} parent=0 // pred_region
    _
  $region17: #{bi_lstm_forward.5} parent=0 // pred_fallthru
    _
  // Predicated region
  $region18: #{bi_lstm_forward.5} parent=0 // pred_check
    _
  $region19: #{bi_lstm_forward.5} parent=0 // pred_check_branch
    %21 = sbr.rel (0) target = $region21
  $region20: #{bi_lstm_forward.5} parent=0 // pred_region
    _
  $region21: #{bi_lstm_forward.5} parent=0 // pred_fallthru
    _
  %v22 = vld [vmem:[%s0] sm:$0xff]
  %v23 = vld [vmem:[%s0 + $0x8] sm:$0xff]
  %v24 = vld [vmem:[%s0 + $0x10] sm:$0xff]
  %v25 = vld [vmem:[%s0 + $0x18] sm:$0xff]
  %v26 = vld [vmem:[%s0 + $0x20] sm:$0xff]
  %v27 = vld [vmem:[%s0 + $0x28] sm:$0xff]
  %v28 = vld [vmem:[%s0 + $0x30] sm:$0xff]
  %v29 = vld [vmem:[%s0 + $0x38] sm:$0xff]
  %v30 = vld [vmem:[%s1] sm:$0xff]
  %v31 = vld [vmem:[%s1 + $0x8] sm:$0xff]
  %v32 = vld [vmem:[%s1 + $0x10] sm:$0xff]
  %v33 = vld [vmem:[%s1 + $0x18] sm:$0xff]
  %v34 = vld [vmem:[%s3] sm:$0x1]
  %v36 = vlaneseq
  %v37 = vshrl.u32 %v36, 7
  %v38 = vsub.s32 0, %v37
  %v39 = vrot.slane %v34, %v38
  %vm41 = vcmask 261120
  %v43 = vsel %vm41, %v22, 0
  %v46 = vsel %vm41, %v23, 0
  %v49 = vsel %vm41, %v24, 0
  %v52 = vsel %vm41, %v25, 0
  %v55 = vsel %vm41, %v26, 0
  %v58 = vsel %vm41, %v27, 0
  %v61 = vsel %vm41, %v28, 0
  %v64 = vsel %vm41, %v29, 0
  %66 = vmatprep.subr.mxu0 0.0
  %67 = vmatpush1.msra.mxu0 0.0
  %68 = vmatprep.subr.mxu0 0.0
  %69 = vmatpush1.msra.mxu0 0.0
  %70 = vmatprep.subr.mxu0 0.0
  %71 = vmatpush1.msra.mxu0 0.0
  %72 = vmatprep.subr.mxu0 0.0
  %73 = vmatpush1.msra.mxu0 0.0
  %74 = vmatprep.subr.mxu0 0.0
  %75 = vmatpush1.msra.mxu0 0.0
  %76 = vmatprep.subr.mxu0 0.0
  %77 = vmatpush1.msra.mxu0 0.0
  %78 = vmatprep.subr.mxu0 0.0
  %79 = vmatpush1.msra.mxu0 0.0
  %80 = vmatprep.subr.mxu0 0.0
  %81 = vmatpush1.msra.mxu0 0.0
  %82 = vmatprep.subr.mxu0 0.0
  %83 = vmatpush1.msra.mxu0 0.0
  %84 = vmatprep.subr.mxu0 0.0
  %85 = vmatpush1.msra.mxu0 0.0
  %86 = vmatprep.subr.mxu0 0.0
  %87 = vmatpush1.msra.mxu0 0.0
  %88 = vmatprep.subr.mxu0 0.0
  %89 = vmatpush1.msra.mxu0 0.0
  %90 = vmatprep.subr.mxu0 0.0
  %91 = vmatpush1.msra.mxu0 %v33
  %92 = vmatprep.subr.mxu0 0.0
  %93 = vmatpush1.msra.mxu0 %v32
  %94 = vmatprep.subr.mxu0 0.0
  %95 = vmatpush1.msra.mxu0 %v31
  %96 = vmatprep.subr.mxu0 0.0
  %97 = vmatpush1.msra.mxu0 %v30
  %98 = vmatprep.subr.mxu0 0.0
  %99 = vmatpush2.msra.mxu0 0.0
  %100 = vmatprep.subr.mxu0 0.0
  %101 = vmatpush2.msra.mxu0 0.0
  %102 = vmatprep.subr.mxu0 0.0
  %103 = vmatpush2.msra.mxu0 0.0
  %104 = vmatprep.subr.mxu0 0.0
  %105 = vmatpush2.msra.mxu0 0.0
  %106 = vmatprep.subr.mxu0 0.0
  %107 = vmatpush2.msra.mxu0 0.0
  %108 = vmatprep.subr.mxu0 0.0
  %109 = vmatpush2.msra.mxu0 0.0
  %110 = vmatprep.subr.mxu0 0.0
  %111 = vmatpush2.msra.mxu0 0.0
  %112 = vmatprep.subr.mxu0 0.0
  %113 = vmatpush2.msra.mxu0 0.0
  %114 = vmatprep.subr.mxu0 0.0
  %115 = vmatpush2.msra.mxu0 0.0
  %116 = vmatprep.subr.mxu0 0.0
  %117 = vmatpush2.msra.mxu0 0.0
  %118 = vmatprep.subr.mxu0 0.0
  %119 = vmatpush2.msra.mxu0 0.0
  %120 = vmatprep.subr.mxu0 0.0
  %121 = vmatpush2.msra.mxu0 0.0
  %122 = vmatprep.subr.mxu0 0.0
  %123 = vmatpush2.msra.mxu0 0.0
  %124 = vmatprep.subr.mxu0 0.0
  %125 = vmatpush2.msra.mxu0 0.0
  %126 = vmatprep.subr.mxu0 0.0
  %127 = vmatpush2.msra.mxu0 0.0
  %128 = vmatprep.subr.mxu0 0.0
  %129 = vmatpush2.msra.mxu0 0.0
  %130 = vmatprep.mubr.f32.mxu0 0.0
  %131 = vmatmul.mubr.f32.gmra.mxu0 %v43
  %v132 = vpop.f32.mrf.mxu0
  %v133 = vadd.f32 %v39, %v132
  %v134 = vpop.f32.mrf.mxu0
  %135 = vmatprep.mubr.f32.mxu0 0.0
  %136 = vmatmul.mubr.f32.gmra.mxu0 %v46
  %v137 = vpop.f32.mrf.mxu0
  %v138 = vadd.f32 %v39, %v137
  %v139 = vpop.f32.mrf.mxu0
  %140 = vmatprep.mubr.f32.mxu0 0.0
  %141 = vmatmul.mubr.f32.gmra.mxu0 %v49
  %v142 = vpop.f32.mrf.mxu0
  %v143 = vadd.f32 %v39, %v142
  %v144 = vpop.f32.mrf.mxu0
  %145 = vmatprep.mubr.f32.mxu0 0.0
  %146 = vmatmul.mubr.f32.gmra.mxu0 %v52
  %v147 = vpop.f32.mrf.mxu0
  %v148 = vadd.f32 %v39, %v147
  %v149 = vpop.f32.mrf.mxu0
  %150 = vmatprep.mubr.f32.mxu0 0.0
  %151 = vmatmul.mubr.f32.gmra.mxu0 %v55
  %v152 = vpop.f32.mrf.mxu0
  %v153 = vadd.f32 %v39, %v152
  %v154 = vpop.f32.mrf.mxu0
  %155 = vmatprep.mubr.f32.mxu0 0.0
  %156 = vmatmul.mubr.f32.gmra.mxu0 %v58
  %v157 = vpop.f32.mrf.mxu0
  %v158 = vadd.f32 %v39, %v157
  %v159 = vpop.f32.mrf.mxu0
  %160 = vmatprep.mubr.f32.mxu0 0.0
  %161 = vmatmul.mubr.f32.gmra.mxu0 %v61
  %v162 = vpop.f32.mrf.mxu0
  %v163 = vadd.f32 %v39, %v162
  %v164 = vpop.f32.mrf.mxu0
  %165 = vmatprep.mubr.f32.mxu0 0.0
  %166 = vmatmul.mubr.f32.gmra.mxu0 %v64
  %v167 = vpop.f32.mrf.mxu0
  %v168 = vadd.f32 %v39, %v167
  %v169 = vpop.f32.mrf.mxu0
  %170 = vdwg.mxu0
  %171 = vst [vmem:[%s5] sm:$0xff] %v133
  %172 = vst [vmem:[%s5 + $0x8] sm:$0xff] %v138
  %173 = vst [vmem:[%s5 + $0x10] sm:$0xff] %v143
  %174 = vst [vmem:[%s5 + $0x18] sm:$0xff] %v148
  %175 = vst [vmem:[%s5 + $0x20] sm:$0xff] %v153
  %176 = vst [vmem:[%s5 + $0x28] sm:$0xff] %v158
  %177 = vst [vmem:[%s5 + $0x30] sm:$0xff] %v163
  %178 = vst [vmem:[%s5 + $0x38] sm:$0xff] %v168
  %v179 = vld [vmem:[%s2] sm:$0xff]
  %v180 = vld [vmem:[%s2 + $0x8] sm:$0xff]
  %v181 = vld [vmem:[%s2 + $0x10] sm:$0xff]
  %v182 = vld [vmem:[%s2 + $0x18] sm:$0xff]
  %v183 = vld [vmem:[%s4] sm:$0x1]
  %v185 = vlaneseq
  %v186 = vshrl.u32 %v185, 7
  %v187 = vsub.s32 0, %v186
  %v188 = vrot.slane %v183, %v187
  %190 = vmatprep.subr.mxu0 0.0
  %191 = vmatpush1.msra.mxu0 0.0
  %192 = vmatprep.subr.mxu0 0.0
  %193 = vmatpush1.msra.mxu0 0.0
  %194 = vmatprep.subr.mxu0 0.0
  %195 = vmatpush1.msra.mxu0 0.0
  %196 = vmatprep.subr.mxu0 0.0
  %197 = vmatpush1.msra.mxu0 0.0
  %198 = vmatprep.subr.mxu0 0.0
  %199 = vmatpush1.msra.mxu0 0.0
  %200 = vmatprep.subr.mxu0 0.0
  %201 = vmatpush1.msra.mxu0 0.0
  %202 = vmatprep.subr.mxu0 0.0
  %203 = vmatpush1.msra.mxu0 0.0
  %204 = vmatprep.subr.mxu0 0.0
  %205 = vmatpush1.msra.mxu0 0.0
  %206 = vmatprep.subr.mxu0 0.0
  %207 = vmatpush1.msra.mxu0 0.0
  %208 = vmatprep.subr.mxu0 0.0
  %209 = vmatpush1.msra.mxu0 0.0
  %210 = vmatprep.subr.mxu0 0.0
  %211 = vmatpush1.msra.mxu0 0.0
  %212 = vmatprep.subr.mxu0 0.0
  %213 = vmatpush1.msra.mxu0 0.0
  %214 = vmatprep.subr.mxu0 0.0
  %215 = vmatpush1.msra.mxu0 %v182
  %216 = vmatprep.subr.mxu0 0.0
  %217 = vmatpush1.msra.mxu0 %v181
  %218 = vmatprep.subr.mxu0 0.0
  %219 = vmatpush1.msra.mxu0 %v180
  %220 = vmatprep.subr.mxu0 0.0
  %221 = vmatpush1.msra.mxu0 %v179
  %222 = vmatprep.subr.mxu0 0.0
  %223 = vmatpush2.msra.mxu0 0.0
  %224 = vmatprep.subr.mxu0 0.0
  %225 = vmatpush2.msra.mxu0 0.0
  %226 = vmatprep.subr.mxu0 0.0
  %227 = vmatpush2.msra.mxu0 0.0
  %228 = vmatprep.subr.mxu0 0.0
  %229 = vmatpush2.msra.mxu0 0.0
  %230 = vmatprep.subr.mxu0 0.0
  %231 = vmatpush2.msra.mxu0 0.0
  %232 = vmatprep.subr.mxu0 0.0
  %233 = vmatpush2.msra.mxu0 0.0
  %234 = vmatprep.subr.mxu0 0.0
  %235 = vmatpush2.msra.mxu0 0.0
  %236 = vmatprep.subr.mxu0 0.0
  %237 = vmatpush2.msra.mxu0 0.0
  %238 = vmatprep.subr.mxu0 0.0
  %239 = vmatpush2.msra.mxu0 0.0
  %240 = vmatprep.subr.mxu0 0.0
  %241 = vmatpush2.msra.mxu0 0.0
  %242 = vmatprep.subr.mxu0 0.0
  %243 = vmatpush2.msra.mxu0 0.0
  %244 = vmatprep.subr.mxu0 0.0
  %245 = vmatpush2.msra.mxu0 0.0
  %246 = vmatprep.subr.mxu0 0.0
  %247 = vmatpush2.msra.mxu0 0.0
  %248 = vmatprep.subr.mxu0 0.0
  %249 = vmatpush2.msra.mxu0 0.0
  %250 = vmatprep.subr.mxu0 0.0
  %251 = vmatpush2.msra.mxu0 0.0
  %252 = vmatprep.subr.mxu0 0.0
  %253 = vmatpush2.msra.mxu0 0.0
  %254 = vmatprep.mubr.f32.mxu0 0.0
  %255 = vmatmul.mubr.f32.gmra.mxu0 %v43
  %v256 = vpop.f32.mrf.mxu0
  %v257 = vadd.f32 %v188, %v256
  %v258 = vpop.f32.mrf.mxu0
  %259 = vmatprep.mubr.f32.mxu0 0.0
  %260 = vmatmul.mubr.f32.gmra.mxu0 %v46
  %v261 = vpop.f32.mrf.mxu0
  %v262 = vadd.f32 %v188, %v261
  %v263 = vpop.f32.mrf.mxu0
  %264 = vmatprep.mubr.f32.mxu0 0.0
  %265 = vmatmul.mubr.f32.gmra.mxu0 %v49
  %v266 = vpop.f32.mrf.mxu0
  %v267 = vadd.f32 %v188, %v266
  %v268 = vpop.f32.mrf.mxu0
  %269 = vmatprep.mubr.f32.mxu0 0.0
  %270 = vmatmul.mubr.f32.gmra.mxu0 %v52
  %v271 = vpop.f32.mrf.mxu0
  %v272 = vadd.f32 %v188, %v271
  %v273 = vpop.f32.mrf.mxu0
  %274 = vmatprep.mubr.f32.mxu0 0.0
  %275 = vmatmul.mubr.f32.gmra.mxu0 %v55
  %v276 = vpop.f32.mrf.mxu0
  %v277 = vadd.f32 %v188, %v276
  %v278 = vpop.f32.mrf.mxu0
  %279 = vmatprep.mubr.f32.mxu0 0.0
  %280 = vmatmul.mubr.f32.gmra.mxu0 %v58
  %v281 = vpop.f32.mrf.mxu0
  %v282 = vadd.f32 %v188, %v281
  %v283 = vpop.f32.mrf.mxu0
  %284 = vmatprep.mubr.f32.mxu0 0.0
  %285 = vmatmul.mubr.f32.gmra.mxu0 %v61
  %v286 = vpop.f32.mrf.mxu0
  %v287 = vadd.f32 %v188, %v286
  %v288 = vpop.f32.mrf.mxu0
  %289 = vmatprep.mubr.f32.mxu0 0.0
  %290 = vmatmul.mubr.f32.gmra.mxu0 %v64
  %v291 = vpop.f32.mrf.mxu0
  %v292 = vadd.f32 %v188, %v291
  %v293 = vpop.f32.mrf.mxu0
  %294 = vdwg.mxu0
  %295 = vst [vmem:[%s6] sm:$0xff] %v257
  %296 = vst [vmem:[%s6 + $0x8] sm:$0xff] %v262
  %297 = vst [vmem:[%s6 + $0x10] sm:$0xff] %v267
  %298 = vst [vmem:[%s6 + $0x18] sm:$0xff] %v272
  %299 = vst [vmem:[%s6 + $0x20] sm:$0xff] %v277
  %300 = vst [vmem:[%s6 + $0x28] sm:$0xff] %v282
  %301 = vst [vmem:[%s6 + $0x30] sm:$0xff] %v287
  %302 = vst [vmem:[%s6 + $0x38] sm:$0xff] %v292
  // Predicated region
  $region22: #{bi_lstm_forward.5} parent=0 // pred_check
    _
  $region23: #{bi_lstm_forward.5} parent=0 // pred_check_branch
    %304 = sbr.rel (0) target = $region25
  $region24: #{bi_lstm_forward.5} parent=0 // pred_region
    _
  $region25: #{bi_lstm_forward.5} parent=0 // pred_fallthru
    _
  // Predicated region
  $region26: #{bi_lstm_forward.5} parent=0 // pred_check
    _
  $region27: #{bi_lstm_forward.5} parent=0 // pred_check_branch
    %306 = sbr.rel (0) target = $region29
  $region28: #{bi_lstm_forward.5} parent=0 // pred_region
    _
  $region29: #{bi_lstm_forward.5} parent=0 // pred_fallthru
    _
  // Predicated region
  $region30: #{bi_lstm_forward.5} parent=0 // pred_check
    _
  $region31: #{bi_lstm_forward.5} parent=0 // pred_check_branch
    %308 = sbr.rel (0) target = $region33
  $region32: #{bi_lstm_forward.5} parent=0 // pred_region
    _
  $region33: #{bi_lstm_forward.5} parent=0 // pred_fallthru
    _
  // Predicated region
  $region34: #{bi_lstm_forward.5} parent=0 // pred_check
    _
  $region35: #{bi_lstm_forward.5} parent=0 // pred_check_branch
    %310 = sbr.rel (0) target = $region37
  $region36: #{bi_lstm_forward.5} parent=0 // pred_region
    _
  $region37: #{bi_lstm_forward.5} parent=0 // pred_fallthru
    _

// kernel: bi_lstm_forward.7
$region0: #{bi_lstm_forward.7}
  #allocation0 [shape = 'u32[]', space=smem, size = 0x4, offset = 0x4, fixed_abs, tag = 'smem constant byte address 0x4 - core index']
  #allocation1 [shape = 'u32[144,128]{1,0:T(1,128)}', space=vmem, size = 0x12000, scoped, tag = 'internal scratch']
  %s0 = inlined_call_operand.vmem [shape: f32[64,32], index: 0, kind: input, shape index: {}]
  %s1 = inlined_call_operand.vmem [shape: f32[64,32], index: 1, kind: input, shape index: {}]
  %s2 = inlined_call_operand.vmem [shape: f32[32,128], index: 2, kind: input, shape index: {}]
  %s3 = inlined_call_operand.vmem [shape: f32[32,128], index: 3, kind: input, shape index: {}]
  %s4 = inlined_call_operand.vmem [shape: f32[32,128], index: 4, kind: input, shape index: {}]
  %s5 = inlined_call_operand.vmem [shape: f32[32,128], index: 5, kind: input, shape index: {}]
  %s6 = inlined_call_operand.vmem [shape: f32[1,128], index: 6, kind: input, shape index: {}]
  %s7 = inlined_call_operand.vmem [shape: f32[1,128], index: 7, kind: input, shape index: {}]
  %s8 = inlined_call_operand.vmem [shape: f32[64,128], index: 8, kind: output, shape index: {0}]
  %s9 = inlined_call_operand.vmem [shape: f32[64,128], index: 9, kind: output, shape index: {1}]
  %10 = xla_tuple %s8, %s9
  %s11 = sld [smem:[#allocation0]]
  $region50: #{bi_lstm_forward.7} parent=0
    _
  %s13 = ssub.s32 1, %s11
  %s14 = scalar_select 0, %s13, %s11
  // Predicated region
  $region2: #{bi_lstm_forward.7} parent=0 // pred_check
    _
  $region3: #{bi_lstm_forward.7} parent=0 // pred_check_branch
    %16 = sbr.rel (0) target = $region5
  $region4: #{bi_lstm_forward.7} parent=0 // pred_region
    _
  $region5: #{bi_lstm_forward.7} parent=0 // pred_fallthru
    _
  // Predicated region
  $region6: #{bi_lstm_forward.7} parent=0 // pred_check
    _
  $region7: #{bi_lstm_forward.7} parent=0 // pred_check_branch
    %18 = sbr.rel (0) target = $region9
  $region8: #{bi_lstm_forward.7} parent=0 // pred_region
    _
  $region9: #{bi_lstm_forward.7} parent=0 // pred_fallthru
    _
  // Predicated region
  $region10: #{bi_lstm_forward.7} parent=0 // pred_check
    _
  $region11: #{bi_lstm_forward.7} parent=0 // pred_check_branch
    %20 = sbr.rel (0) target = $region13
  $region12: #{bi_lstm_forward.7} parent=0 // pred_region
    _
  $region13: #{bi_lstm_forward.7} parent=0 // pred_fallthru
    _
  // Predicated region
  $region14: #{bi_lstm_forward.7} parent=0 // pred_check
    _
  $region15: #{bi_lstm_forward.7} parent=0 // pred_check_branch
    %22 = sbr.rel (0) target = $region17
  $region16: #{bi_lstm_forward.7} parent=0 // pred_region
    _
  $region17: #{bi_lstm_forward.7} parent=0 // pred_fallthru
    _
  // Predicated region
  $region18: #{bi_lstm_forward.7} parent=0 // pred_check
    _
  $region19: #{bi_lstm_forward.7} parent=0 // pred_check_branch
    %24 = sbr.rel (0) target = $region21
  $region20: #{bi_lstm_forward.7} parent=0 // pred_region
    _
  $region21: #{bi_lstm_forward.7} parent=0 // pred_fallthru
    _
  // Predicated region
  $region22: #{bi_lstm_forward.7} parent=0 // pred_check
    _
  $region23: #{bi_lstm_forward.7} parent=0 // pred_check_branch
    %26 = sbr.rel (0) target = $region25
  $region24: #{bi_lstm_forward.7} parent=0 // pred_region
    _
  $region25: #{bi_lstm_forward.7} parent=0 // pred_fallthru
    _
  // Predicated region
  $region26: #{bi_lstm_forward.7} parent=0 // pred_check
    _
  $region27: #{bi_lstm_forward.7} parent=0 // pred_check_branch
    %28 = sbr.rel (0) target = $region29
  $region28: #{bi_lstm_forward.7} parent=0 // pred_region
    _
  $region29: #{bi_lstm_forward.7} parent=0 // pred_fallthru
    _
  // Predicated region
  $region30: #{bi_lstm_forward.7} parent=0 // pred_check
    _
  $region31: #{bi_lstm_forward.7} parent=0 // pred_check_branch
    %30 = sbr.rel (0) target = $region33
  $region32: #{bi_lstm_forward.7} parent=0 // pred_region
    _
  $region33: #{bi_lstm_forward.7} parent=0 // pred_fallthru
    _
  %v31 = vld [vmem:[%s0] sm:$0xff]
  %v32 = vld [vmem:[%s0 + $0x8] sm:$0xff]
  %v33 = vld [vmem:[%s0 + $0x10] sm:$0xff]
  %v34 = vld [vmem:[%s0 + $0x18] sm:$0xff]
  %v35 = vld [vmem:[%s0 + $0x20] sm:$0xff]
  %v36 = vld [vmem:[%s0 + $0x28] sm:$0xff]
  %v37 = vld [vmem:[%s0 + $0x30] sm:$0xff]
  %v38 = vld [vmem:[%s0 + $0x38] sm:$0xff]
  %v39 = vld [vmem:[%s1] sm:$0xff]
  %v40 = vld [vmem:[%s1 + $0x8] sm:$0xff]
  %v41 = vld [vmem:[%s1 + $0x10] sm:$0xff]
  %v42 = vld [vmem:[%s1 + $0x18] sm:$0xff]
  %v43 = vld [vmem:[%s1 + $0x20] sm:$0xff]
  %v44 = vld [vmem:[%s1 + $0x28] sm:$0xff]
  %v45 = vld [vmem:[%s1 + $0x30] sm:$0xff]
  %v46 = vld [vmem:[%s1 + $0x38] sm:$0xff]
  %v47 = vld [vmem:[%s2] sm:$0xff]
  %v48 = vld [vmem:[%s2 + $0x8] sm:$0xff]
  %v49 = vld [vmem:[%s2 + $0x10] sm:$0xff]
  %v50 = vld [vmem:[%s2 + $0x18] sm:$0xff]
  %v51 = vld [vmem:[%s3] sm:$0xff]
  %v52 = vld [vmem:[%s3 + $0x8] sm:$0xff]
  %v53 = vld [vmem:[%s3 + $0x10] sm:$0xff]
  %v54 = vld [vmem:[%s3 + $0x18] sm:$0xff]
  %vm55 = vcmask 261120
  %v57 = vsel %vm55, %v39, 0
  %v60 = vsel %vm55, %v40, 0
  %v63 = vsel %vm55, %v41, 0
  %v66 = vsel %vm55, %v42, 0
  %v69 = vsel %vm55, %v43, 0
  %v72 = vsel %vm55, %v44, 0
  %v75 = vsel %vm55, %v45, 0
  %v78 = vsel %vm55, %v46, 0
  %80 = vmatprep.subr.mxu0 0.0
  %81 = vmatpush1.msra.mxu0 0.0
  %82 = vmatprep.subr.mxu0 0.0
  %83 = vmatpush1.msra.mxu0 0.0
  %84 = vmatprep.subr.mxu0 0.0
  %85 = vmatpush1.msra.mxu0 0.0
  %86 = vmatprep.subr.mxu0 0.0
  %87 = vmatpush1.msra.mxu0 0.0
  %88 = vmatprep.subr.mxu0 0.0
  %89 = vmatpush1.msra.mxu0 0.0
  %90 = vmatprep.subr.mxu0 0.0
  %91 = vmatpush1.msra.mxu0 0.0
  %92 = vmatprep.subr.mxu0 0.0
  %93 = vmatpush1.msra.mxu0 0.0
  %94 = vmatprep.subr.mxu0 0.0
  %95 = vmatpush1.msra.mxu0 0.0
  %96 = vmatprep.subr.mxu0 0.0
  %97 = vmatpush1.msra.mxu0 0.0
  %98 = vmatprep.subr.mxu0 0.0
  %99 = vmatpush1.msra.mxu0 0.0
  %100 = vmatprep.subr.mxu0 0.0
  %101 = vmatpush1.msra.mxu0 0.0
  %102 = vmatprep.subr.mxu0 0.0
  %103 = vmatpush1.msra.mxu0 0.0
  %104 = vmatprep.subr.mxu0 0.0
  %105 = vmatpush1.msra.mxu0 %v54
  %106 = vmatprep.subr.mxu0 0.0
  %107 = vmatpush1.msra.mxu0 %v53
  %108 = vmatprep.subr.mxu0 0.0
  %109 = vmatpush1.msra.mxu0 %v52
  %110 = vmatprep.subr.mxu0 0.0
  %111 = vmatpush1.msra.mxu0 %v51
  %112 = vmatprep.subr.mxu0 0.0
  %113 = vmatpush2.msra.mxu0 0.0
  %114 = vmatprep.subr.mxu0 0.0
  %115 = vmatpush2.msra.mxu0 0.0
  %116 = vmatprep.subr.mxu0 0.0
  %117 = vmatpush2.msra.mxu0 0.0
  %118 = vmatprep.subr.mxu0 0.0
  %119 = vmatpush2.msra.mxu0 0.0
  %120 = vmatprep.subr.mxu0 0.0
  %121 = vmatpush2.msra.mxu0 0.0
  %122 = vmatprep.subr.mxu0 0.0
  %123 = vmatpush2.msra.mxu0 0.0
  %124 = vmatprep.subr.mxu0 0.0
  %125 = vmatpush2.msra.mxu0 0.0
  %126 = vmatprep.subr.mxu0 0.0
  %127 = vmatpush2.msra.mxu0 0.0
  %128 = vmatprep.subr.mxu0 0.0
  %129 = vmatpush2.msra.mxu0 0.0
  %130 = vmatprep.subr.mxu0 0.0
  %131 = vmatpush2.msra.mxu0 0.0
  %132 = vmatprep.subr.mxu0 0.0
  %133 = vmatpush2.msra.mxu0 0.0
  %134 = vmatprep.subr.mxu0 0.0
  %135 = vmatpush2.msra.mxu0 0.0
  %136 = vmatprep.subr.mxu0 0.0
  %137 = vmatpush2.msra.mxu0 0.0
  %138 = vmatprep.subr.mxu0 0.0
  %139 = vmatpush2.msra.mxu0 0.0
  %140 = vmatprep.subr.mxu0 0.0
  %141 = vmatpush2.msra.mxu0 0.0
  %142 = vmatprep.subr.mxu0 0.0
  %143 = vmatpush2.msra.mxu0 0.0
  %144 = vmatprep.mubr.f32.mxu0 0.0
  %145 = vmatmul.mubr.f32.gmra.mxu0 %v57
  %v146 = vpop.f32.mrf.mxu0
  %v147 = vadd.f32 0.0, %v146
  %v148 = vpop.f32.mrf.mxu0
  %149 = vmatprep.mubr.f32.mxu0 0.0
  %150 = vmatmul.mubr.f32.gmra.mxu0 %v60
  %v151 = vpop.f32.mrf.mxu0
  %v152 = vadd.f32 0.0, %v151
  %v153 = vpop.f32.mrf.mxu0
  %154 = vmatprep.mubr.f32.mxu0 0.0
  %155 = vmatmul.mubr.f32.gmra.mxu0 %v63
  %v156 = vpop.f32.mrf.mxu0
  %v157 = vadd.f32 0.0, %v156
  %v158 = vpop.f32.mrf.mxu0
  %159 = vmatprep.mubr.f32.mxu0 0.0
  %160 = vmatmul.mubr.f32.gmra.mxu0 %v66
  %v161 = vpop.f32.mrf.mxu0
  %v162 = vadd.f32 0.0, %v161
  %v163 = vpop.f32.mrf.mxu0
  %164 = vmatprep.mubr.f32.mxu0 0.0
  %165 = vmatmul.mubr.f32.gmra.mxu0 %v69
  %v166 = vpop.f32.mrf.mxu0
  %v167 = vadd.f32 0.0, %v166
  %v168 = vpop.f32.mrf.mxu0
  %169 = vmatprep.mubr.f32.mxu0 0.0
  %170 = vmatmul.mubr.f32.gmra.mxu0 %v72
  %v171 = vpop.f32.mrf.mxu0
  %v172 = vadd.f32 0.0, %v171
  %v173 = vpop.f32.mrf.mxu0
  %174 = vmatprep.mubr.f32.mxu0 0.0
  %175 = vmatmul.mubr.f32.gmra.mxu0 %v75
  %v176 = vpop.f32.mrf.mxu0
  %v177 = vadd.f32 0.0, %v176
  %v178 = vpop.f32.mrf.mxu0
  %179 = vmatprep.mubr.f32.mxu0 0.0
  %180 = vmatmul.mubr.f32.gmra.mxu0 %v78
  %v181 = vpop.f32.mrf.mxu0
  %v182 = vadd.f32 0.0, %v181
  %v183 = vpop.f32.mrf.mxu0
  %184 = vdwg.mxu0
  %v186 = vsel %vm55, %v31, 0
  %v189 = vsel %vm55, %v32, 0
  %v192 = vsel %vm55, %v33, 0
  %v195 = vsel %vm55, %v34, 0
  %v198 = vsel %vm55, %v35, 0
  %v201 = vsel %vm55, %v36, 0
  %v204 = vsel %vm55, %v37, 0
  %v207 = vsel %vm55, %v38, 0
  %209 = vmatprep.subr.mxu0 0.0
  %210 = vmatpush1.msra.mxu0 0.0
  %211 = vmatprep.subr.mxu0 0.0
  %212 = vmatpush1.msra.mxu0 0.0
  %213 = vmatprep.subr.mxu0 0.0
  %214 = vmatpush1.msra.mxu0 0.0
  %215 = vmatprep.subr.mxu0 0.0
  %216 = vmatpush1.msra.mxu0 0.0
  %217 = vmatprep.subr.mxu0 0.0
  %218 = vmatpush1.msra.mxu0 0.0
  %219 = vmatprep.subr.mxu0 0.0
  %220 = vmatpush1.msra.mxu0 0.0
  %221 = vmatprep.subr.mxu0 0.0
  %222 = vmatpush1.msra.mxu0 0.0
  %223 = vmatprep.subr.mxu0 0.0
  %224 = vmatpush1.msra.mxu0 0.0
  %225 = vmatprep.subr.mxu0 0.0
  %226 = vmatpush1.msra.mxu0 0.0
  %227 = vmatprep.subr.mxu0 0.0
  %228 = vmatpush1.msra.mxu0 0.0
  %229 = vmatprep.subr.mxu0 0.0
  %230 = vmatpush1.msra.mxu0 0.0
  %231 = vmatprep.subr.mxu0 0.0
  %232 = vmatpush1.msra.mxu0 0.0
  %233 = vmatprep.subr.mxu0 0.0
  %234 = vmatpush1.msra.mxu0 %v50
  %235 = vmatprep.subr.mxu0 0.0
  %236 = vmatpush1.msra.mxu0 %v49
  %237 = vmatprep.subr.mxu0 0.0
  %238 = vmatpush1.msra.mxu0 %v48
  %239 = vmatprep.subr.mxu0 0.0
  %240 = vmatpush1.msra.mxu0 %v47
  %241 = vmatprep.subr.mxu0 0.0
  %242 = vmatpush2.msra.mxu0 0.0
  %243 = vmatprep.subr.mxu0 0.0
  %244 = vmatpush2.msra.mxu0 0.0
  %245 = vmatprep.subr.mxu0 0.0
  %246 = vmatpush2.msra.mxu0 0.0
  %247 = vmatprep.subr.mxu0 0.0
  %248 = vmatpush2.msra.mxu0 0.0
  %249 = vmatprep.subr.mxu0 0.0
  %250 = vmatpush2.msra.mxu0 0.0
  %251 = vmatprep.subr.mxu0 0.0
  %252 = vmatpush2.msra.mxu0 0.0
  %253 = vmatprep.subr.mxu0 0.0
  %254 = vmatpush2.msra.mxu0 0.0
  %255 = vmatprep.subr.mxu0 0.0
  %256 = vmatpush2.msra.mxu0 0.0
  %257 = vmatprep.subr.mxu0 0.0
  %258 = vmatpush2.msra.mxu0 0.0
  %259 = vmatprep.subr.mxu0 0.0
  %260 = vmatpush2.msra.mxu0 0.0
  %261 = vmatprep.subr.mxu0 0.0
  %262 = vmatpush2.msra.mxu0 0.0
  %263 = vmatprep.subr.mxu0 0.0
  %264 = vmatpush2.msra.mxu0 0.0
  %265 = vmatprep.subr.mxu0 0.0
  %266 = vmatpush2.msra.mxu0 0.0
  %267 = vmatprep.subr.mxu0 0.0
  %268 = vmatpush2.msra.mxu0 0.0
  %269 = vmatprep.subr.mxu0 0.0
  %270 = vmatpush2.msra.mxu0 0.0
  %271 = vmatprep.subr.mxu0 0.0
  %272 = vmatpush2.msra.mxu0 0.0
  %273 = vmatprep.mubr.f32.mxu0 0.0
  %274 = vmatmul.mubr.f32.gmra.mxu0 %v186
  %v275 = vpop.f32.mrf.mxu0
  %v276 = vadd.f32 %v147, %v275
  %v277 = vpop.f32.mrf.mxu0
  %278 = vmatprep.mubr.f32.mxu0 0.0
  %279 = vmatmul.mubr.f32.gmra.mxu0 %v189
  %v280 = vpop.f32.mrf.mxu0
  %v281 = vadd.f32 %v152, %v280
  %v282 = vpop.f32.mrf.mxu0
  %283 = vmatprep.mubr.f32.mxu0 0.0
  %284 = vmatmul.mubr.f32.gmra.mxu0 %v192
  %v285 = vpop.f32.mrf.mxu0
  %v286 = vadd.f32 %v157, %v285
  %v287 = vpop.f32.mrf.mxu0
  %288 = vmatprep.mubr.f32.mxu0 0.0
  %289 = vmatmul.mubr.f32.gmra.mxu0 %v195
  %v290 = vpop.f32.mrf.mxu0
  %v291 = vadd.f32 %v162, %v290
  %v292 = vpop.f32.mrf.mxu0
  %293 = vmatprep.mubr.f32.mxu0 0.0
  %294 = vmatmul.mubr.f32.gmra.mxu0 %v198
  %v295 = vpop.f32.mrf.mxu0
  %v296 = vadd.f32 %v167, %v295
  %v297 = vpop.f32.mrf.mxu0
  %298 = vmatprep.mubr.f32.mxu0 0.0
  %299 = vmatmul.mubr.f32.gmra.mxu0 %v201
  %v300 = vpop.f32.mrf.mxu0
  %v301 = vadd.f32 %v172, %v300
  %v302 = vpop.f32.mrf.mxu0
  %303 = vmatprep.mubr.f32.mxu0 0.0
  %304 = vmatmul.mubr.f32.gmra.mxu0 %v204
  %v305 = vpop.f32.mrf.mxu0
  %v306 = vadd.f32 %v177, %v305
  %v307 = vpop.f32.mrf.mxu0
  %308 = vmatprep.mubr.f32.mxu0 0.0
  %309 = vmatmul.mubr.f32.gmra.mxu0 %v207
  %v310 = vpop.f32.mrf.mxu0
  %v311 = vadd.f32 %v182, %v310
  %v312 = vpop.f32.mrf.mxu0
  %313 = vdwg.mxu0
  %v314 = vld [vmem:[%s6] sm:$0x1]
  %v316 = vlaneseq
  %v317 = vshrl.u32 %v316, 7
  %v318 = vsub.s32 0, %v317
  %v319 = vrot.slane %v314, %v318
  %v321 = vadd.f32 %v276, %v319
  %v322 = vadd.f32 %v281, %v319
  %v323 = vadd.f32 %v286, %v319
  %v324 = vadd.f32 %v291, %v319
  %v325 = vadd.f32 %v296, %v319
  %v326 = vadd.f32 %v301, %v319
  %v327 = vadd.f32 %v306, %v319
  %v328 = vadd.f32 %v311, %v319
  %329 = vst [vmem:[%s8] sm:$0xff] %v321
  %330 = vst [vmem:[%s8 + $0x8] sm:$0xff] %v322
  %331 = vst [vmem:[%s8 + $0x10] sm:$0xff] %v323
  %332 = vst [vmem:[%s8 + $0x18] sm:$0xff] %v324
  %333 = vst [vmem:[%s8 + $0x20] sm:$0xff] %v325
  %334 = vst [vmem:[%s8 + $0x28] sm:$0xff] %v326
  %335 = vst [vmem:[%s8 + $0x30] sm:$0xff] %v327
  %336 = vst [vmem:[%s8 + $0x38] sm:$0xff] %v328
  %v337 = vld [vmem:[%s4] sm:$0xff]
  %v338 = vld [vmem:[%s4 + $0x8] sm:$0xff]
  %v339 = vld [vmem:[%s4 + $0x10] sm:$0xff]
  %v340 = vld [vmem:[%s4 + $0x18] sm:$0xff]
  %v341 = vld [vmem:[%s5] sm:$0xff]
  %v342 = vld [vmem:[%s5 + $0x8] sm:$0xff]
  %v343 = vld [vmem:[%s5 + $0x10] sm:$0xff]
  %v344 = vld [vmem:[%s5 + $0x18] sm:$0xff]
  %345 = vmatprep.subr.mxu0 0.0
  %346 = vmatpush1.msra.mxu0 0.0
  %347 = vmatprep.subr.mxu0 0.0
  %348 = vmatpush1.msra.mxu0 0.0
  %349 = vmatprep.subr.mxu0 0.0
  %350 = vmatpush1.msra.mxu0 0.0
  %351 = vmatprep.subr.mxu0 0.0
  %352 = vmatpush1.msra.mxu0 0.0
  %353 = vmatprep.subr.mxu0 0.0
  %354 = vmatpush1.msra.mxu0 0.0
  %355 = vmatprep.subr.mxu0 0.0
  %356 = vmatpush1.msra.mxu0 0.0
  %357 = vmatprep.subr.mxu0 0.0
  %358 = vmatpush1.msra.mxu0 0.0
  %359 = vmatprep.subr.mxu0 0.0
  %360 = vmatpush1.msra.mxu0 0.0
  %361 = vmatprep.subr.mxu0 0.0
  %362 = vmatpush1.msra.mxu0 0.0
  %363 = vmatprep.subr.mxu0 0.0
  %364 = vmatpush1.msra.mxu0 0.0
  %365 = vmatprep.subr.mxu0 0.0
  %366 = vmatpush1.msra.mxu0 0.0
  %367 = vmatprep.subr.mxu0 0.0
  %368 = vmatpush1.msra.mxu0 0.0
  %369 = vmatprep.subr.mxu0 0.0
  %370 = vmatpush1.msra.mxu0 %v344
  %371 = vmatprep.subr.mxu0 0.0
  %372 = vmatpush1.msra.mxu0 %v343
  %373 = vmatprep.subr.mxu0 0.0
  %374 = vmatpush1.msra.mxu0 %v342
  %375 = vmatprep.subr.mxu0 0.0
  %376 = vmatpush1.msra.mxu0 %v341
  %377 = vmatprep.subr.mxu0 0.0
  %378 = vmatpush2.msra.mxu0 0.0
  %379 = vmatprep.subr.mxu0 0.0
  %380 = vmatpush2.msra.mxu0 0.0
  %381 = vmatprep.subr.mxu0 0.0
  %382 = vmatpush2.msra.mxu0 0.0
  %383 = vmatprep.subr.mxu0 0.0
  %384 = vmatpush2.msra.mxu0 0.0
  %385 = vmatprep.subr.mxu0 0.0
  %386 = vmatpush2.msra.mxu0 0.0
  %387 = vmatprep.subr.mxu0 0.0
  %388 = vmatpush2.msra.mxu0 0.0
  %389 = vmatprep.subr.mxu0 0.0
  %390 = vmatpush2.msra.mxu0 0.0
  %391 = vmatprep.subr.mxu0 0.0
  %392 = vmatpush2.msra.mxu0 0.0
  %393 = vmatprep.subr.mxu0 0.0
  %394 = vmatpush2.msra.mxu0 0.0
  %395 = vmatprep.subr.mxu0 0.0
  %396 = vmatpush2.msra.mxu0 0.0
  %397 = vmatprep.subr.mxu0 0.0
  %398 = vmatpush2.msra.mxu0 0.0
  %399 = vmatprep.subr.mxu0 0.0
  %400 = vmatpush2.msra.mxu0 0.0
  %401 = vmatprep.subr.mxu0 0.0
  %402 = vmatpush2.msra.mxu0 0.0
  %403 = vmatprep.subr.mxu0 0.0
  %404 = vmatpush2.msra.mxu0 0.0
  %405 = vmatprep.subr.mxu0 0.0
  %406 = vmatpush2.msra.mxu0 0.0
  %407 = vmatprep.subr.mxu0 0.0
  %408 = vmatpush2.msra.mxu0 0.0
  %409 = vmatprep.mubr.f32.mxu0 0.0
  %410 = vmatmul.mubr.f32.gmra.mxu0 %v57
  %v411 = vpop.f32.mrf.mxu0
  %v412 = vadd.f32 0.0, %v411
  %v413 = vpop.f32.mrf.mxu0
  %414 = vmatprep.mubr.f32.mxu0 0.0
  %415 = vmatmul.mubr.f32.gmra.mxu0 %v60
  %v416 = vpop.f32.mrf.mxu0
  %v417 = vadd.f32 0.0, %v416
  %v418 = vpop.f32.mrf.mxu0
  %419 = vmatprep.mubr.f32.mxu0 0.0
  %420 = vmatmul.mubr.f32.gmra.mxu0 %v63
  %v421 = vpop.f32.mrf.mxu0
  %v422 = vadd.f32 0.0, %v421
  %v423 = vpop.f32.mrf.mxu0
  %424 = vmatprep.mubr.f32.mxu0 0.0
  %425 = vmatmul.mubr.f32.gmra.mxu0 %v66
  %v426 = vpop.f32.mrf.mxu0
  %v427 = vadd.f32 0.0, %v426
  %v428 = vpop.f32.mrf.mxu0
  %429 = vmatprep.mubr.f32.mxu0 0.0
  %430 = vmatmul.mubr.f32.gmra.mxu0 %v69
  %v431 = vpop.f32.mrf.mxu0
  %v432 = vadd.f32 0.0, %v431
  %v433 = vpop.f32.mrf.mxu0
  %434 = vmatprep.mubr.f32.mxu0 0.0
  %435 = vmatmul.mubr.f32.gmra.mxu0 %v72
  %v436 = vpop.f32.mrf.mxu0
  %v437 = vadd.f32 0.0, %v436
  %v438 = vpop.f32.mrf.mxu0
  %439 = vmatprep.mubr.f32.mxu0 0.0
  %440 = vmatmul.mubr.f32.gmra.mxu0 %v75
  %v441 = vpop.f32.mrf.mxu0
  %v442 = vadd.f32 0.0, %v441
  %v443 = vpop.f32.mrf.mxu0
  %444 = vmatprep.mubr.f32.mxu0 0.0
  %445 = vmatmul.mubr.f32.gmra.mxu0 %v78
  %v446 = vpop.f32.mrf.mxu0
  %v447 = vadd.f32 0.0, %v446
  %v448 = vpop.f32.mrf.mxu0
  %449 = vdwg.mxu0
  %450 = vmatprep.subr.mxu0 0.0
  %451 = vmatpush1.msra.mxu0 0.0
  %452 = vmatprep.subr.mxu0 0.0
  %453 = vmatpush1.msra.mxu0 0.0
  %454 = vmatprep.subr.mxu0 0.0
  %455 = vmatpush1.msra.mxu0 0.0
  %456 = vmatprep.subr.mxu0 0.0
  %457 = vmatpush1.msra.mxu0 0.0
  %458 = vmatprep.subr.mxu0 0.0
  %459 = vmatpush1.msra.mxu0 0.0
  %460 = vmatprep.subr.mxu0 0.0
  %461 = vmatpush1.msra.mxu0 0.0
  %462 = vmatprep.subr.mxu0 0.0
  %463 = vmatpush1.msra.mxu0 0.0
  %464 = vmatprep.subr.mxu0 0.0
  %465 = vmatpush1.msra.mxu0 0.0
  %466 = vmatprep.subr.mxu0 0.0
  %467 = vmatpush1.msra.mxu0 0.0
  %468 = vmatprep.subr.mxu0 0.0
  %469 = vmatpush1.msra.mxu0 0.0
  %470 = vmatprep.subr.mxu0 0.0
  %471 = vmatpush1.msra.mxu0 0.0
  %472 = vmatprep.subr.mxu0 0.0
  %473 = vmatpush1.msra.mxu0 0.0
  %474 = vmatprep.subr.mxu0 0.0
  %475 = vmatpush1.msra.mxu0 %v340
  %476 = vmatprep.subr.mxu0 0.0
  %477 = vmatpush1.msra.mxu0 %v339
  %478 = vmatprep.subr.mxu0 0.0
  %479 = vmatpush1.msra.mxu0 %v338
  %480 = vmatprep.subr.mxu0 0.0
  %481 = vmatpush1.msra.mxu0 %v337
  %482 = vmatprep.subr.mxu0 0.0
  %483 = vmatpush2.msra.mxu0 0.0
  %484 = vmatprep.subr.mxu0 0.0
  %485 = vmatpush2.msra.mxu0 0.0
  %486 = vmatprep.subr.mxu0 0.0
  %487 = vmatpush2.msra.mxu0 0.0
  %488 = vmatprep.subr.mxu0 0.0
  %489 = vmatpush2.msra.mxu0 0.0
  %490 = vmatprep.subr.mxu0 0.0
  %491 = vmatpush2.msra.mxu0 0.0
  %492 = vmatprep.subr.mxu0 0.0
  %493 = vmatpush2.msra.mxu0 0.0
  %494 = vmatprep.subr.mxu0 0.0
  %495 = vmatpush2.msra.mxu0 0.0
  %496 = vmatprep.subr.mxu0 0.0
  %497 = vmatpush2.msra.mxu0 0.0
  %498 = vmatprep.subr.mxu0 0.0
  %499 = vmatpush2.msra.mxu0 0.0
  %500 = vmatprep.subr.mxu0 0.0
  %501 = vmatpush2.msra.mxu0 0.0
  %502 = vmatprep.subr.mxu0 0.0
  %503 = vmatpush2.msra.mxu0 0.0
  %504 = vmatprep.subr.mxu0 0.0
  %505 = vmatpush2.msra.mxu0 0.0
  %506 = vmatprep.subr.mxu0 0.0
  %507 = vmatpush2.msra.mxu0 0.0
  %508 = vmatprep.subr.mxu0 0.0
  %509 = vmatpush2.msra.mxu0 0.0
  %510 = vmatprep.subr.mxu0 0.0
  %511 = vmatpush2.msra.mxu0 0.0
  %512 = vmatprep.subr.mxu0 0.0
  %513 = vmatpush2.msra.mxu0 0.0
  %514 = vmatprep.mubr.f32.mxu0 0.0
  %515 = vmatmul.mubr.f32.gmra.mxu0 %v186
  %v516 = vpop.f32.mrf.mxu0
  %v517 = vadd.f32 %v412, %v516
  %v518 = vpop.f32.mrf.mxu0
  %519 = vmatprep.mubr.f32.mxu0 0.0
  %520 = vmatmul.mubr.f32.gmra.mxu0 %v189
  %v521 = vpop.f32.mrf.mxu0
  %v522 = vadd.f32 %v417, %v521
  %v523 = vpop.f32.mrf.mxu0
  %524 = vmatprep.mubr.f32.mxu0 0.0
  %525 = vmatmul.mubr.f32.gmra.mxu0 %v192
  %v526 = vpop.f32.mrf.mxu0
  %v527 = vadd.f32 %v422, %v526
  %v528 = vpop.f32.mrf.mxu0
  %529 = vmatprep.mubr.f32.mxu0 0.0
  %530 = vmatmul.mubr.f32.gmra.mxu0 %v195
  %v531 = vpop.f32.mrf.mxu0
  %v532 = vadd.f32 %v427, %v531
  %v533 = vpop.f32.mrf.mxu0
  %534 = vmatprep.mubr.f32.mxu0 0.0
  %535 = vmatmul.mubr.f32.gmra.mxu0 %v198
  %v536 = vpop.f32.mrf.mxu0
  %v537 = vadd.f32 %v432, %v536
  %v538 = vpop.f32.mrf.mxu0
  %539 = vmatprep.mubr.f32.mxu0 0.0
  %540 = vmatmul.mubr.f32.gmra.mxu0 %v201
  %v541 = vpop.f32.mrf.mxu0
  %v542 = vadd.f32 %v437, %v541
  %v543 = vpop.f32.mrf.mxu0
  %544 = vmatprep.mubr.f32.mxu0 0.0
  %545 = vmatmul.mubr.f32.gmra.mxu0 %v204
  %v546 = vpop.f32.mrf.mxu0
  %v547 = vadd.f32 %v442, %v546
  %v548 = vpop.f32.mrf.mxu0
  %549 = vmatprep.mubr.f32.mxu0 0.0
  %550 = vmatmul.mubr.f32.gmra.mxu0 %v207
  %v551 = vpop.f32.mrf.mxu0
  %v552 = vadd.f32 %v447, %v551
  %v553 = vpop.f32.mrf.mxu0
  %554 = vdwg.mxu0
  %v555 = vld [vmem:[%s7] sm:$0x1]
  %v557 = vlaneseq
  %v558 = vshrl.u32 %v557, 7
  %v559 = vsub.s32 0, %v558
  %v560 = vrot.slane %v555, %v559
  %v562 = vadd.f32 %v517, %v560
  %v563 = vadd.f32 %v522, %v560
  %v564 = vadd.f32 %v527, %v560
  %v565 = vadd.f32 %v532, %v560
  %v566 = vadd.f32 %v537, %v560
  %v567 = vadd.f32 %v542, %v560
  %v568 = vadd.f32 %v547, %v560
  %v569 = vadd.f32 %v552, %v560
  %570 = vst [vmem:[%s9] sm:$0xff] %v562
  %571 = vst [vmem:[%s9 + $0x8] sm:$0xff] %v563
  %572 = vst [vmem:[%s9 + $0x10] sm:$0xff] %v564
  %573 = vst [vmem:[%s9 + $0x18] sm:$0xff] %v565
  %574 = vst [vmem:[%s9 + $0x20] sm:$0xff] %v566
  %575 = vst [vmem:[%s9 + $0x28] sm:$0xff] %v567
  %576 = vst [vmem:[%s9 + $0x30] sm:$0xff] %v568
  %577 = vst [vmem:[%s9 + $0x38] sm:$0xff] %v569
  // Predicated region
  $region34: #{bi_lstm_forward.7} parent=0 // pred_check
    _
  $region35: #{bi_lstm_forward.7} parent=0 // pred_check_branch
    %579 = sbr.rel (0) target = $region37
  $region36: #{bi_lstm_forward.7} parent=0 // pred_region
    _
  $region37: #{bi_lstm_forward.7} parent=0 // pred_fallthru
    _
  // Predicated region
  $region38: #{bi_lstm_forward.7} parent=0 // pred_check
    _
  $region39: #{bi_lstm_forward.7} parent=0 // pred_check_branch
    %581 = sbr.rel (0) target = $region41
  $region40: #{bi_lstm_forward.7} parent=0 // pred_region
    _
  $region41: #{bi_lstm_forward.7} parent=0 // pred_fallthru
    _
  // Predicated region
  $region42: #{bi_lstm_forward.7} parent=0 // pred_check
    _
  $region43: #{bi_lstm_forward.7} parent=0 // pred_check_branch
    %583 = sbr.rel (0) target = $region45
  $region44: #{bi_lstm_forward.7} parent=0 // pred_region
    _
  $region45: #{bi_lstm_forward.7} parent=0 // pred_fallthru
    _
  // Predicated region
  $region46: #{bi_lstm_forward.7} parent=0 // pred_check
    _
  $region47: #{bi_lstm_forward.7} parent=0 // pred_check_branch
    %585 = sbr.rel (0) target = $region49
  $region48: #{bi_lstm_forward.7} parent=0 // pred_region
    _
  $region49: #{bi_lstm_forward.7} parent=0 // pred_fallthru
    _

// kernel: bi_lstm_forward.6
$region0: #{bi_lstm_forward.6}
  #allocation0 [shape = 'u32[]', space=smem, size = 0x4, offset = 0x4, fixed_abs, tag = 'smem constant byte address 0x4 - core index']
  #allocation1 [shape = 'u32[144,128]{1,0:T(1,128)}', space=vmem, size = 0x12000, scoped, tag = 'internal scratch']
  #allocation2 [shape = 'f32[8,32]{1,0:T(8,128)}', space=vmem, size = 0x1000, scoped, tag = 'scratch operand']
  #allocation3 [shape = 'f32[8,32]{1,0:T(8,128)}', space=vmem, size = 0x1000, scoped, tag = 'scratch operand']
  #allocation4 [shape = 'f32[8,32]{1,0:T(8,128)}', space=vmem, size = 0x1000, scoped, tag = 'scratch operand']
  #allocation5 [shape = 'f32[8,32]{1,0:T(8,128)}', space=vmem, size = 0x1000, scoped, tag = 'scratch operand']
  %s0 = inlined_call_operand.vmem [shape: s32[8,1], index: 0, kind: input, shape index: {}]
  %s1 = inlined_call_operand.vmem [shape: f32[8,8,128], index: 1, kind: input, shape index: {}]
  %s2 = inlined_call_operand.vmem [shape: f32[8,8,128], index: 2, kind: input, shape index: {}]
  %s3 = inlined_call_operand.vmem [shape: f32[32,128], index: 3, kind: input, shape index: {}]
  %s4 = inlined_call_operand.vmem [shape: f32[32,128], index: 4, kind: input, shape index: {}]
  %s5 = inlined_call_operand.vmem [shape: f32[8,8,32], index: 5, kind: output, shape index: {0}]
  %s6 = inlined_call_operand.vmem [shape: f32[8,8,32], index: 6, kind: output, shape index: {1}]
  %7 = xla_tuple %s5, %s6
  %s8 = sld [smem:[#allocation0]]
  $region42: #{bi_lstm_forward.6} parent=0
    _
  %s10 = ssub.s32 1, %s8
  %s11 = scalar_select 0, %s10, %s8
  // Predicated region
  $region2: #{bi_lstm_forward.6} parent=0 // pred_check
    _
  $region3: #{bi_lstm_forward.6} parent=0 // pred_check_branch
    %13 = sbr.rel (0) target = $region5
  $region4: #{bi_lstm_forward.6} parent=0 // pred_region
    _
  $region5: #{bi_lstm_forward.6} parent=0 // pred_fallthru
    _
  // Predicated region
  $region6: #{bi_lstm_forward.6} parent=0 // pred_check
    _
  $region7: #{bi_lstm_forward.6} parent=0 // pred_check_branch
    %15 = sbr.rel (0) target = $region9
  $region8: #{bi_lstm_forward.6} parent=0 // pred_region
    _
  $region9: #{bi_lstm_forward.6} parent=0 // pred_fallthru
    _
  // Predicated region
  $region10: #{bi_lstm_forward.6} parent=0 // pred_check
    _
  $region11: #{bi_lstm_forward.6} parent=0 // pred_check_branch
    %17 = sbr.rel (0) target = $region13
  $region12: #{bi_lstm_forward.6} parent=0 // pred_region
    %s18 = ssub.s32 0, 0
    %s19 = smul.u32 8, %s18
    %p20 = scmp.lt.s32.totalorder %s19, 7
    %s21 = scalar_select %p20, %s19, 7
    %s22 = smul.addr %s21, 8
    %s23 = scalar_lea.vmem %s2, %s22
    %s24 = ssub.s32 0, 0
    %s25 = smul.u32 8, %s24
  $region13: #{bi_lstm_forward.6} parent=0 // pred_fallthru
    _
  // Predicated region
  $region14: #{bi_lstm_forward.6} parent=0 // pred_check
    _
  $region15: #{bi_lstm_forward.6} parent=0 // pred_check_branch
    %27 = sbr.rel (0) target = $region17
  $region16: #{bi_lstm_forward.6} parent=0 // pred_region
    _
  $region17: #{bi_lstm_forward.6} parent=0 // pred_fallthru
    _
  // Predicated region
  $region18: #{bi_lstm_forward.6} parent=0 // pred_check
    _
  $region19: #{bi_lstm_forward.6} parent=0 // pred_check_branch
    %29 = sbr.rel (0) target = $region21
  $region20: #{bi_lstm_forward.6} parent=0 // pred_region
    _
  $region21: #{bi_lstm_forward.6} parent=0 // pred_fallthru
    _
  %s30 = ssub.s32 0, 0
  %s31 = smul.u32 8, %s30
  %p32 = scmp.lt.s32.totalorder %s31, 7
  %s33 = scalar_select %p32, %s31, 7
  %s34 = smul.addr %s33, 8
  %s35 = scalar_lea.vmem %s2, %s34
  %s36 = ssub.s32 0, 0
  %s37 = smul.u32 8, %s36
  %p38 = scmp.lt.s32.totalorder %s37, 7
  %s39 = scalar_select %p38, %s37, 7
  %s40 = smul.addr %s39, 8
  %s41 = scalar_lea.vmem %s6, %s40
  %s42 = ssub.s32 0, 0
  %s43 = smul.u32 8, %s42
  %p44 = scmp.lt.s32.totalorder %s43, 7
  %s45 = scalar_select %p44, %s43, 7
  %s46 = smul.addr %s45, 8
  %s47 = scalar_lea.vmem %s2, %s46
  %s48 = ssub.s32 0, 0
  %s49 = smul.u32 8, %s48
  %s50 = ssub.s32 0, 0
  %s51 = smul.u32 8, %s50
  %p52 = scmp.lt.s32.totalorder %s51, 7
  %s53 = scalar_select %p52, %s51, 7
  %s54 = smul.addr %s53, 8
  %s55 = scalar_lea.vmem %s6, %s54
  %s56 = ssub.s32 0, 0
  %s57 = smul.u32 8, %s56
  %p58 = scmp.eq.s32.totalorder 0, 0
  // Predicated region
  $region22: #{bi_lstm_forward.6} parent=0 // pred_check
    %p59 = pneg %p58
  $region23: #{bi_lstm_forward.6} parent=0 // pred_check_branch
    %61 = sbr.rel (%p59) target = $region25
  $region24: #{bi_lstm_forward.6} parent=0 // pred_region
    %vm62 = vcmask 261120
    %63 = vst.msk [vmem:[#allocation2] sm:$0xff] %vm62, 0.0
    %64 = vst.msk [vmem:[#allocation3] sm:$0xff] %vm62, 0.0
    %65 = vst.msk [vmem:[#allocation4] sm:$0xff] %vm62, 0.0
    %66 = vst.msk [vmem:[#allocation5] sm:$0xff] %vm62, 0.0
  $region25: #{bi_lstm_forward.6} parent=0 // pred_fallthru
    _
  %v67 = vld [vmem:[%s0] sm:$0xff]
  %v68 = vld [vmem:[%s3] sm:$0xff]
  %v69 = vld [vmem:[%s3 + $0x8] sm:$0xff]
  %v70 = vld [vmem:[%s3 + $0x10] sm:$0xff]
  %v71 = vld [vmem:[%s3 + $0x18] sm:$0xff]
  %v72 = vld [vmem:[%s4] sm:$0xff]
  %v73 = vld [vmem:[%s4 + $0x8] sm:$0xff]
  %v74 = vld [vmem:[%s4 + $0x10] sm:$0xff]
  %v75 = vld [vmem:[%s4 + $0x18] sm:$0xff]
  %s76 = smul.u32 0, 8
  %v77 = vld [vmem:[%s1] sm:$0xff]
  %v78 = vld [vmem:[#allocation2] sm:$0xff]
  %v79 = vld [vmem:[#allocation3] sm:$0xff]
  %vm80 = vcmask 261120
  %v82 = vsel %vm80, %v78, 0
  %84 = vmatprep.subr.mxu0 0.0
  %85 = vmatpush1.msra.mxu0 0.0
  %86 = vmatprep.subr.mxu0 0.0
  %87 = vmatpush1.msra.mxu0 0.0
  %88 = vmatprep.subr.mxu0 0.0
  %89 = vmatpush1.msra.mxu0 0.0
  %90 = vmatprep.subr.mxu0 0.0
  %91 = vmatpush1.msra.mxu0 0.0
  %92 = vmatprep.subr.mxu0 0.0
  %93 = vmatpush1.msra.mxu0 0.0
  %94 = vmatprep.subr.mxu0 0.0
  %95 = vmatpush1.msra.mxu0 0.0
  %96 = vmatprep.subr.mxu0 0.0
  %97 = vmatpush1.msra.mxu0 0.0
  %98 = vmatprep.subr.mxu0 0.0
  %99 = vmatpush1.msra.mxu0 0.0
  %100 = vmatprep.subr.mxu0 0.0
  %101 = vmatpush1.msra.mxu0 0.0
  %102 = vmatprep.subr.mxu0 0.0
  %103 = vmatpush1.msra.mxu0 0.0
  %104 = vmatprep.subr.mxu0 0.0
  %105 = vmatpush1.msra.mxu0 0.0
  %106 = vmatprep.subr.mxu0 0.0
  %107 = vmatpush1.msra.mxu0 0.0
  %108 = vmatprep.subr.mxu0 0.0
  %109 = vmatpush1.msra.mxu0 %v71
  %110 = vmatprep.subr.mxu0 0.0
  %111 = vmatpush1.msra.mxu0 %v70
  %112 = vmatprep.subr.mxu0 0.0
  %113 = vmatpush1.msra.mxu0 %v69
  %114 = vmatprep.subr.mxu0 0.0
  %115 = vmatpush1.msra.mxu0 %v68
  %116 = vmatprep.subr.mxu0 0.0
  %117 = vmatpush2.msra.mxu0 0.0
  %118 = vmatprep.subr.mxu0 0.0
  %119 = vmatpush2.msra.mxu0 0.0
  %120 = vmatprep.subr.mxu0 0.0
  %121 = vmatpush2.msra.mxu0 0.0
  %122 = vmatprep.subr.mxu0 0.0
  %123 = vmatpush2.msra.mxu0 0.0
  %124 = vmatprep.subr.mxu0 0.0
  %125 = vmatpush2.msra.mxu0 0.0
  %126 = vmatprep.subr.mxu0 0.0
  %127 = vmatpush2.msra.mxu0 0.0
  %128 = vmatprep.subr.mxu0 0.0
  %129 = vmatpush2.msra.mxu0 0.0
  %130 = vmatprep.subr.mxu0 0.0
  %131 = vmatpush2.msra.mxu0 0.0
  %132 = vmatprep.subr.mxu0 0.0
  %133 = vmatpush2.msra.mxu0 0.0
  %134 = vmatprep.subr.mxu0 0.0
  %135 = vmatpush2.msra.mxu0 0.0
  %136 = vmatprep.subr.mxu0 0.0
  %137 = vmatpush2.msra.mxu0 0.0
  %138 = vmatprep.subr.mxu0 0.0
  %139 = vmatpush2.msra.mxu0 0.0
  %140 = vmatprep.subr.mxu0 0.0
  %141 = vmatpush2.msra.mxu0 0.0
  %142 = vmatprep.subr.mxu0 0.0
  %143 = vmatpush2.msra.mxu0 0.0
  %144 = vmatprep.subr.mxu0 0.0
  %145 = vmatpush2.msra.mxu0 0.0
  %146 = vmatprep.subr.mxu0 0.0
  %147 = vmatpush2.msra.mxu0 0.0
  %148 = vmatprep.mubr.f32.mxu0 0.0
  %149 = vmatmul.mubr.f32.gmra.mxu0 %v82
  %v150 = vpop.f32.mrf.mxu0
  %v151 = vadd.f32 0.0, %v150
  %v152 = vpop.f32.mrf.mxu0
  %153 = vdwg.mxu0
  %v154 = vadd.f32 %v77, %v151
  %v155 = vxor.u32 %v154, 2147483648
  %v156 = vmul.f32 %v155, 1.442695
  %v157 = vpow.pop %v156
  %v158 = vadd.f32 %v157, 1.0
  %v159 = vrcp.pop %v158
  %v160 = vmul.f32 1.0, %v159
  %v161 = vtanh.pop %v154
  %163 = vrot.lane.b32.xlu0 %v79, 32
  %v164 = vpop.permute.xlu0 %163
  %v166 = vmul.f32 %v160, %v164
  %168 = vrot.lane.b32.xlu0 %v161, 64
  %v169 = vpop.permute.xlu0 %168
  %v171 = vmul.f32 %v160, %v169
  %173 = vrot.lane.b32.xlu0 %v171, 32
  %v174 = vpop.permute.xlu0 %173
  %v176 = vadd.f32 %v166, %v174
  %v177 = vtanh.pop %v176
  %179 = vrot.lane.b32.xlu0 %v177, 64
  %v180 = vpop.permute.xlu0 %179
  %v182 = vmul.f32 %v160, %v180
  %v183 = vstv %s76
  %vm184 = vcmp.lt.s32.totalorder %v183, %v67
  %v185 = vsel %vm184, 1, 0
  %186 = vset.pattern.permute.xlu0 0
  %187 = vperm.xlu0 %186, %v185
  %v188 = vpop.permute.xlu0 %187
  %vm189 = vcmp.eq.s32.totalorder %v188, 1
  %190 = vrot.lane.b32.xlu0 %v78, 96
  %v191 = vpop.permute.xlu0 %190
  %v193 = vsel %vm189, %v182, %v191
  %195 = vrot.lane.b32.xlu0 %v193, 32
  %v196 = vpop.permute.xlu0 %195
  %198 = vst.msk [vmem:[#allocation2] sm:$0xff] %vm80, %v196
  %v199 = vld [vmem:[#allocation3] sm:$0xff]
  %201 = vrot.lane.b32.xlu0 %v199, 32
  %v202 = vpop.permute.xlu0 %201
  %v204 = vsel %vm189, %v176, %v202
  %206 = vrot.lane.b32.xlu0 %v204, 96
  %v207 = vpop.permute.xlu0 %206
  %209 = vst.msk [vmem:[#allocation3] sm:$0xff] %vm80, %v207
  %v210 = vsel %vm189, %v182, 0.0
  %212 = vrot.lane.b32.xlu0 %v210, 32
  %v213 = vpop.permute.xlu0 %212
  %215 = vst.msk [vmem:[%s5] sm:$0xff] %vm80, %v213
  %s216 = ssub.s32 0, 0
  %s217 = smul.u32 %s216, 8
  %s218 = sadd.s32 %s217, 7
  %s219 = scalar_lea.vmem %s47, 56
  %v220 = vld [vmem:[%s219] sm:$0xff]
  %v221 = vld [vmem:[#allocation4] sm:$0xff]
  %v222 = vld [vmem:[#allocation5] sm:$0xff]
  %v224 = vsel %vm80, %v221, 0
  %226 = vmatprep.subr.mxu0 0.0
  %227 = vmatpush1.msra.mxu0 0.0
  %228 = vmatprep.subr.mxu0 0.0
  %229 = vmatpush1.msra.mxu0 0.0
  %230 = vmatprep.subr.mxu0 0.0
  %231 = vmatpush1.msra.mxu0 0.0
  %232 = vmatprep.subr.mxu0 0.0
  %233 = vmatpush1.msra.mxu0 0.0
  %234 = vmatprep.subr.mxu0 0.0
  %235 = vmatpush1.msra.mxu0 0.0
  %236 = vmatprep.subr.mxu0 0.0
  %237 = vmatpush1.msra.mxu0 0.0
  %238 = vmatprep.subr.mxu0 0.0
  %239 = vmatpush1.msra.mxu0 0.0
  %240 = vmatprep.subr.mxu0 0.0
  %241 = vmatpush1.msra.mxu0 0.0
  %242 = vmatprep.subr.mxu0 0.0
  %243 = vmatpush1.msra.mxu0 0.0
  %244 = vmatprep.subr.mxu0 0.0
  %245 = vmatpush1.msra.mxu0 0.0
  %246 = vmatprep.subr.mxu0 0.0
  %247 = vmatpush1.msra.mxu0 0.0
  %248 = vmatprep.subr.mxu0 0.0
  %249 = vmatpush1.msra.mxu0 0.0
  %250 = vmatprep.subr.mxu0 0.0
  %251 = vmatpush1.msra.mxu0 %v75
  %252 = vmatprep.subr.mxu0 0.0
  %253 = vmatpush1.msra.mxu0 %v74
  %254 = vmatprep.subr.mxu0 0.0
  %255 = vmatpush1.msra.mxu0 %v73
  %256 = vmatprep.subr.mxu0 0.0
  %257 = vmatpush1.msra.mxu0 %v72
  %258 = vmatprep.subr.mxu0 0.0
  %259 = vmatpush2.msra.mxu0 0.0
  %260 = vmatprep.subr.mxu0 0.0
  %261 = vmatpush2.msra.mxu0 0.0
  %262 = vmatprep.subr.mxu0 0.0
  %263 = vmatpush2.msra.mxu0 0.0
  %264 = vmatprep.subr.mxu0 0.0
  %265 = vmatpush2.msra.mxu0 0.0
  %266 = vmatprep.subr.mxu0 0.0
  %267 = vmatpush2.msra.mxu0 0.0
  %268 = vmatprep.subr.mxu0 0.0
  %269 = vmatpush2.msra.mxu0 0.0
  %270 = vmatprep.subr.mxu0 0.0
  %271 = vmatpush2.msra.mxu0 0.0
  %272 = vmatprep.subr.mxu0 0.0
  %273 = vmatpush2.msra.mxu0 0.0
  %274 = vmatprep.subr.mxu0 0.0
  %275 = vmatpush2.msra.mxu0 0.0
  %276 = vmatprep.subr.mxu0 0.0
  %277 = vmatpush2.msra.mxu0 0.0
  %278 = vmatprep.subr.mxu0 0.0
  %279 = vmatpush2.msra.mxu0 0.0
  %280 = vmatprep.subr.mxu0 0.0
  %281 = vmatpush2.msra.mxu0 0.0
  %282 = vmatprep.subr.mxu0 0.0
  %283 = vmatpush2.msra.mxu0 0.0
  %284 = vmatprep.subr.mxu0 0.0
  %285 = vmatpush2.msra.mxu0 0.0
  %286 = vmatprep.subr.mxu0 0.0
  %287 = vmatpush2.msra.mxu0 0.0
  %288 = vmatprep.subr.mxu0 0.0
  %289 = vmatpush2.msra.mxu0 0.0
  %290 = vmatprep.mubr.f32.mxu0 0.0
  %291 = vmatmul.mubr.f32.gmra.mxu0 %v224
  %v292 = vpop.f32.mrf.mxu0
  %v293 = vadd.f32 0.0, %v292
  %v294 = vpop.f32.mrf.mxu0
  %295 = vdwg.mxu0
  %v296 = vadd.f32 %v220, %v293
  %v297 = vxor.u32 %v296, 2147483648
  %v298 = vmul.f32 %v297, 1.442695
  %v299 = vpow.pop %v298
  %v300 = vadd.f32 %v299, 1.0
  %v301 = vrcp.pop %v300
  %v302 = vmul.f32 1.0, %v301
  %v303 = vtanh.pop %v296
  %305 = vrot.lane.b32.xlu0 %v222, 32
  %v306 = vpop.permute.xlu0 %305
  %v308 = vmul.f32 %v302, %v306
  %310 = vrot.lane.b32.xlu0 %v303, 64
  %v311 = vpop.permute.xlu0 %310
  %v313 = vmul.f32 %v302, %v311
  %315 = vrot.lane.b32.xlu0 %v313, 32
  %v316 = vpop.permute.xlu0 %315
  %v318 = vadd.f32 %v308, %v316
  %v319 = vtanh.pop %v318
  %321 = vrot.lane.b32.xlu0 %v319, 64
  %v322 = vpop.permute.xlu0 %321
  %v324 = vmul.f32 %v302, %v322
  %v325 = vstv %s218
  %vm326 = vcmp.lt.s32.totalorder %v325, %v67
  %v327 = vsel %vm326, 1, 0
  %328 = vset.pattern.permute.xlu0 0
  %329 = vperm.xlu0 %328, %v327
  %v330 = vpop.permute.xlu0 %329
  %vm331 = vcmp.eq.s32.totalorder %v330, 1
  %332 = vrot.lane.b32.xlu0 %v221, 96
  %v333 = vpop.permute.xlu0 %332
  %v335 = vsel %vm331, %v324, %v333
  %337 = vrot.lane.b32.xlu0 %v335, 32
  %v338 = vpop.permute.xlu0 %337
  %340 = vst.msk [vmem:[#allocation4] sm:$0xff] %vm80, %v338
  %v341 = vld [vmem:[#allocation5] sm:$0xff]
  %343 = vrot.lane.b32.xlu0 %v341, 32
  %v344 = vpop.permute.xlu0 %343
  %v346 = vsel %vm331, %v318, %v344
  %348 = vrot.lane.b32.xlu0 %v346, 96
  %v349 = vpop.permute.xlu0 %348
  %351 = vst.msk [vmem:[#allocation5] sm:$0xff] %vm80, %v349
  %v352 = vsel %vm331, %v324, 0.0
  %354 = vrot.lane.b32.xlu0 %v352, 32
  %v355 = vpop.permute.xlu0 %354
  %s357 = scalar_lea.vmem %s55, 56
  %358 = vst.msk [vmem:[%s357] sm:$0xff] %vm80, %v355
  %s359 = sadd.s32 %s76, 1
  %s360 = scalar_lea.vmem %s1, 8
  %v361 = vld [vmem:[%s360] sm:$0xff]
  %v362 = vld [vmem:[#allocation2] sm:$0xff]
  %v363 = vld [vmem:[#allocation3] sm:$0xff]
  %v365 = vsel %vm80, %v362, 0
  %367 = vmatprep.subr.mxu0 0.0
  %368 = vmatpush1.msra.mxu0 0.0
  %369 = vmatprep.subr.mxu0 0.0
  %370 = vmatpush1.msra.mxu0 0.0
  %371 = vmatprep.subr.mxu0 0.0
  %372 = vmatpush1.msra.mxu0 0.0
  %373 = vmatprep.subr.mxu0 0.0
  %374 = vmatpush1.msra.mxu0 0.0
  %375 = vmatprep.subr.mxu0 0.0
  %376 = vmatpush1.msra.mxu0 0.0
  %377 = vmatprep.subr.mxu0 0.0
  %378 = vmatpush1.msra.mxu0 0.0
  %379 = vmatprep.subr.mxu0 0.0
  %380 = vmatpush1.msra.mxu0 0.0
  %381 = vmatprep.subr.mxu0 0.0
  %382 = vmatpush1.msra.mxu0 0.0
  %383 = vmatprep.subr.mxu0 0.0
  %384 = vmatpush1.msra.mxu0 0.0
  %385 = vmatprep.subr.mxu0 0.0
  %386 = vmatpush1.msra.mxu0 0.0
  %387 = vmatprep.subr.mxu0 0.0
  %388 = vmatpush1.msra.mxu0 0.0
  %389 = vmatprep.subr.mxu0 0.0
  %390 = vmatpush1.msra.mxu0 0.0
  %391 = vmatprep.subr.mxu0 0.0
  %392 = vmatpush1.msra.mxu0 %v71
  %393 = vmatprep.subr.mxu0 0.0
  %394 = vmatpush1.msra.mxu0 %v70
  %395 = vmatprep.subr.mxu0 0.0
  %396 = vmatpush1.msra.mxu0 %v69
  %397 = vmatprep.subr.mxu0 0.0
  %398 = vmatpush1.msra.mxu0 %v68
  %399 = vmatprep.subr.mxu0 0.0
  %400 = vmatpush2.msra.mxu0 0.0
  %401 = vmatprep.subr.mxu0 0.0
  %402 = vmatpush2.msra.mxu0 0.0
  %403 = vmatprep.subr.mxu0 0.0
  %404 = vmatpush2.msra.mxu0 0.0
  %405 = vmatprep.subr.mxu0 0.0
  %406 = vmatpush2.msra.mxu0 0.0
  %407 = vmatprep.subr.mxu0 0.0
  %408 = vmatpush2.msra.mxu0 0.0
  %409 = vmatprep.subr.mxu0 0.0
  %410 = vmatpush2.msra.mxu0 0.0
  %411 = vmatprep.subr.mxu0 0.0
  %412 = vmatpush2.msra.mxu0 0.0
  %413 = vmatprep.subr.mxu0 0.0
  %414 = vmatpush2.msra.mxu0 0.0
  %415 = vmatprep.subr.mxu0 0.0
  %416 = vmatpush2.msra.mxu0 0.0
  %417 = vmatprep.subr.mxu0 0.0
  %418 = vmatpush2.msra.mxu0 0.0
  %419 = vmatprep.subr.mxu0 0.0
  %420 = vmatpush2.msra.mxu0 0.0
  %421 = vmatprep.subr.mxu0 0.0
  %422 = vmatpush2.msra.mxu0 0.0
  %423 = vmatprep.subr.mxu0 0.0
  %424 = vmatpush2.msra.mxu0 0.0
  %425 = vmatprep.subr.mxu0 0.0
  %426 = vmatpush2.msra.mxu0 0.0
  %427 = vmatprep.subr.mxu0 0.0
  %428 = vmatpush2.msra.mxu0 0.0
  %429 = vmatprep.subr.mxu0 0.0
  %430 = vmatpush2.msra.mxu0 0.0
  %431 = vmatprep.mubr.f32.mxu0 0.0
  %432 = vmatmul.mubr.f32.gmra.mxu0 %v365
  %v433 = vpop.f32.mrf.mxu0
  %v434 = vadd.f32 0.0, %v433
  %v435 = vpop.f32.mrf.mxu0
  %436 = vdwg.mxu0
  %v437 = vadd.f32 %v361, %v434
  %v438 = vxor.u32 %v437, 2147483648
  %v439 = vmul.f32 %v438, 1.442695
  %v440 = vpow.pop %v439
  %v441 = vadd.f32 %v440, 1.0
  %v442 = vrcp.pop %v441
  %v443 = vmul.f32 1.0, %v442
  %v444 = vtanh.pop %v437
  %446 = vrot.lane.b32.xlu0 %v363, 32
  %v447 = vpop.permute.xlu0 %446
  %v449 = vmul.f32 %v443, %v447
  %451 = vrot.lane.b32.xlu0 %v444, 64
  %v452 = vpop.permute.xlu0 %451
  %v454 = vmul.f32 %v443, %v452
  %456 = vrot.lane.b32.xlu0 %v454, 32
  %v457 = vpop.permute.xlu0 %456
  %v459 = vadd.f32 %v449, %v457
  %v460 = vtanh.pop %v459
  %462 = vrot.lane.b32.xlu0 %v460, 64
  %v463 = vpop.permute.xlu0 %462
  %v465 = vmul.f32 %v443, %v463
  %v466 = vstv %s359
  %vm467 = vcmp.lt.s32.totalorder %v466, %v67
  %v468 = vsel %vm467, 1, 0
  %469 = vset.pattern.permute.xlu0 0
  %470 = vperm.xlu0 %469, %v468
  %v471 = vpop.permute.xlu0 %470
  %vm472 = vcmp.eq.s32.totalorder %v471, 1
  %473 = vrot.lane.b32.xlu0 %v362, 96
  %v474 = vpop.permute.xlu0 %473
  %v476 = vsel %vm472, %v465, %v474
  %478 = vrot.lane.b32.xlu0 %v476, 32
  %v479 = vpop.permute.xlu0 %478
  %481 = vst.msk [vmem:[#allocation2] sm:$0xff] %vm80, %v479
  %v482 = vld [vmem:[#allocation3] sm:$0xff]
  %484 = vrot.lane.b32.xlu0 %v482, 32
  %v485 = vpop.permute.xlu0 %484
  %v487 = vsel %vm472, %v459, %v485
  %489 = vrot.lane.b32.xlu0 %v487, 96
  %v490 = vpop.permute.xlu0 %489
  %492 = vst.msk [vmem:[#allocation3] sm:$0xff] %vm80, %v490
  %v493 = vsel %vm472, %v465, 0.0
  %495 = vrot.lane.b32.xlu0 %v493, 32
  %v496 = vpop.permute.xlu0 %495
  %s498 = scalar_lea.vmem %s5, 8
  %499 = vst.msk [vmem:[%s498] sm:$0xff] %vm80, %v496
  %s500 = sadd.s32 %s217, 6
  %s501 = scalar_lea.vmem %s47, 48
  %v502 = vld [vmem:[%s501] sm:$0xff]
  %v503 = vld [vmem:[#allocation4] sm:$0xff]
  %v504 = vld [vmem:[#allocation5] sm:$0xff]
  %v506 = vsel %vm80, %v503, 0
  %508 = vmatprep.subr.mxu0 0.0
  %509 = vmatpush1.msra.mxu0 0.0
  %510 = vmatprep.subr.mxu0 0.0
  %511 = vmatpush1.msra.mxu0 0.0
  %512 = vmatprep.subr.mxu0 0.0
  %513 = vmatpush1.msra.mxu0 0.0
  %514 = vmatprep.subr.mxu0 0.0
  %515 = vmatpush1.msra.mxu0 0.0
  %516 = vmatprep.subr.mxu0 0.0
  %517 = vmatpush1.msra.mxu0 0.0
  %518 = vmatprep.subr.mxu0 0.0
  %519 = vmatpush1.msra.mxu0 0.0
  %520 = vmatprep.subr.mxu0 0.0
  %521 = vmatpush1.msra.mxu0 0.0
  %522 = vmatprep.subr.mxu0 0.0
  %523 = vmatpush1.msra.mxu0 0.0
  %524 = vmatprep.subr.mxu0 0.0
  %525 = vmatpush1.msra.mxu0 0.0
  %526 = vmatprep.subr.mxu0 0.0
  %527 = vmatpush1.msra.mxu0 0.0
  %528 = vmatprep.subr.mxu0 0.0
  %529 = vmatpush1.msra.mxu0 0.0
  %530 = vmatprep.subr.mxu0 0.0
  %531 = vmatpush1.msra.mxu0 0.0
  %532 = vmatprep.subr.mxu0 0.0
  %533 = vmatpush1.msra.mxu0 %v75
  %534 = vmatprep.subr.mxu0 0.0
  %535 = vmatpush1.msra.mxu0 %v74
  %536 = vmatprep.subr.mxu0 0.0
  %537 = vmatpush1.msra.mxu0 %v73
  %538 = vmatprep.subr.mxu0 0.0
  %539 = vmatpush1.msra.mxu0 %v72
  %540 = vmatprep.subr.mxu0 0.0
  %541 = vmatpush2.msra.mxu0 0.0
  %542 = vmatprep.subr.mxu0 0.0
  %543 = vmatpush2.msra.mxu0 0.0
  %544 = vmatprep.subr.mxu0 0.0
  %545 = vmatpush2.msra.mxu0 0.0
  %546 = vmatprep.subr.mxu0 0.0
  %547 = vmatpush2.msra.mxu0 0.0
  %548 = vmatprep.subr.mxu0 0.0
  %549 = vmatpush2.msra.mxu0 0.0
  %550 = vmatprep.subr.mxu0 0.0
  %551 = vmatpush2.msra.mxu0 0.0
  %552 = vmatprep.subr.mxu0 0.0
  %553 = vmatpush2.msra.mxu0 0.0
  %554 = vmatprep.subr.mxu0 0.0
  %555 = vmatpush2.msra.mxu0 0.0
  %556 = vmatprep.subr.mxu0 0.0
  %557 = vmatpush2.msra.mxu0 0.0
  %558 = vmatprep.subr.mxu0 0.0
  %559 = vmatpush2.msra.mxu0 0.0
  %560 = vmatprep.subr.mxu0 0.0
  %561 = vmatpush2.msra.mxu0 0.0
  %562 = vmatprep.subr.mxu0 0.0
  %563 = vmatpush2.msra.mxu0 0.0
  %564 = vmatprep.subr.mxu0 0.0
  %565 = vmatpush2.msra.mxu0 0.0
  %566 = vmatprep.subr.mxu0 0.0
  %567 = vmatpush2.msra.mxu0 0.0
  %568 = vmatprep.subr.mxu0 0.0
  %569 = vmatpush2.msra.mxu0 0.0
  %570 = vmatprep.subr.mxu0 0.0
  %571 = vmatpush2.msra.mxu0 0.0
  %572 = vmatprep.mubr.f32.mxu0 0.0
  %573 = vmatmul.mubr.f32.gmra.mxu0 %v506
  %v574 = vpop.f32.mrf.mxu0
  %v575 = vadd.f32 0.0, %v574
  %v576 = vpop.f32.mrf.mxu0
  %577 = vdwg.mxu0
  %v578 = vadd.f32 %v502, %v575
  %v579 = vxor.u32 %v578, 2147483648
  %v580 = vmul.f32 %v579, 1.442695
  %v581 = vpow.pop %v580
  %v582 = vadd.f32 %v581, 1.0
  %v583 = vrcp.pop %v582
  %v584 = vmul.f32 1.0, %v583
  %v585 = vtanh.pop %v578
  %587 = vrot.lane.b32.xlu0 %v504, 32
  %v588 = vpop.permute.xlu0 %587
  %v590 = vmul.f32 %v584, %v588
  %592 = vrot.lane.b32.xlu0 %v585, 64
  %v593 = vpop.permute.xlu0 %592
  %v595 = vmul.f32 %v584, %v593
  %597 = vrot.lane.b32.xlu0 %v595, 32
  %v598 = vpop.permute.xlu0 %597
  %v600 = vadd.f32 %v590, %v598
  %v601 = vtanh.pop %v600
  %603 = vrot.lane.b32.xlu0 %v601, 64
  %v604 = vpop.permute.xlu0 %603
  %v606 = vmul.f32 %v584, %v604
  %v607 = vstv %s500
  %vm608 = vcmp.lt.s32.totalorder %v607, %v67
  %v609 = vsel %vm608, 1, 0
  %610 = vset.pattern.permute.xlu0 0
  %611 = vperm.xlu0 %610, %v609
  %v612 = vpop.permute.xlu0 %611
  %vm613 = vcmp.eq.s32.totalorder %v612, 1
  %614 = vrot.lane.b32.xlu0 %v503, 96
  %v615 = vpop.permute.xlu0 %614
  %v617 = vsel %vm613, %v606, %v615
  %619 = vrot.lane.b32.xlu0 %v617, 32
  %v620 = vpop.permute.xlu0 %619
  %622 = vst.msk [vmem:[#allocation4] sm:$0xff] %vm80, %v620
  %v623 = vld [vmem:[#allocation5] sm:$0xff]
  %625 = vrot.lane.b32.xlu0 %v623, 32
  %v626 = vpop.permute.xlu0 %625
  %v628 = vsel %vm613, %v600, %v626
  %630 = vrot.lane.b32.xlu0 %v628, 96
  %v631 = vpop.permute.xlu0 %630
  %633 = vst.msk [vmem:[#allocation5] sm:$0xff] %vm80, %v631
  %v634 = vsel %vm613, %v606, 0.0
  %636 = vrot.lane.b32.xlu0 %v634, 32
  %v637 = vpop.permute.xlu0 %636
  %s639 = scalar_lea.vmem %s55, 48
  %640 = vst.msk [vmem:[%s639] sm:$0xff] %vm80, %v637
  %s641 = sadd.s32 %s76, 2
  %s642 = scalar_lea.vmem %s1, 16
  %v643 = vld [vmem:[%s642] sm:$0xff]
  %v644 = vld [vmem:[#allocation2] sm:$0xff]
  %v645 = vld [vmem:[#allocation3] sm:$0xff]
  %v647 = vsel %vm80, %v644, 0
  %649 = vmatprep.subr.mxu0 0.0
  %650 = vmatpush1.msra.mxu0 0.0
  %651 = vmatprep.subr.mxu0 0.0
  %652 = vmatpush1.msra.mxu0 0.0
  %653 = vmatprep.subr.mxu0 0.0
  %654 = vmatpush1.msra.mxu0 0.0
  %655 = vmatprep.subr.mxu0 0.0
  %656 = vmatpush1.msra.mxu0 0.0
  %657 = vmatprep.subr.mxu0 0.0
  %658 = vmatpush1.msra.mxu0 0.0
  %659 = vmatprep.subr.mxu0 0.0
  %660 = vmatpush1.msra.mxu0 0.0
  %661 = vmatprep.subr.mxu0 0.0
  %662 = vmatpush1.msra.mxu0 0.0
  %663 = vmatprep.subr.mxu0 0.0
  %664 = vmatpush1.msra.mxu0 0.0
  %665 = vmatprep.subr.mxu0 0.0
  %666 = vmatpush1.msra.mxu0 0.0
  %667 = vmatprep.subr.mxu0 0.0
  %668 = vmatpush1.msra.mxu0 0.0
  %669 = vmatprep.subr.mxu0 0.0
  %670 = vmatpush1.msra.mxu0 0.0
  %671 = vmatprep.subr.mxu0 0.0
  %672 = vmatpush1.msra.mxu0 0.0
  %673 = vmatprep.subr.mxu0 0.0
  %674 = vmatpush1.msra.mxu0 %v71
  %675 = vmatprep.subr.mxu0 0.0
  %676 = vmatpush1.msra.mxu0 %v70
  %677 = vmatprep.subr.mxu0 0.0
  %678 = vmatpush1.msra.mxu0 %v69
  %679 = vmatprep.subr.mxu0 0.0
  %680 = vmatpush1.msra.mxu0 %v68
  %681 = vmatprep.subr.mxu0 0.0
  %682 = vmatpush2.msra.mxu0 0.0
  %683 = vmatprep.subr.mxu0 0.0
  %684 = vmatpush2.msra.mxu0 0.0
  %685 = vmatprep.subr.mxu0 0.0
  %686 = vmatpush2.msra.mxu0 0.0
  %687 = vmatprep.subr.mxu0 0.0
  %688 = vmatpush2.msra.mxu0 0.0
  %689 = vmatprep.subr.mxu0 0.0
  %690 = vmatpush2.msra.mxu0 0.0
  %691 = vmatprep.subr.mxu0 0.0
  %692 = vmatpush2.msra.mxu0 0.0
  %693 = vmatprep.subr.mxu0 0.0
  %694 = vmatpush2.msra.mxu0 0.0
  %695 = vmatprep.subr.mxu0 0.0
  %696 = vmatpush2.msra.mxu0 0.0
  %697 = vmatprep.subr.mxu0 0.0
  %698 = vmatpush2.msra.mxu0 0.0
  %699 = vmatprep.subr.mxu0 0.0
  %700 = vmatpush2.msra.mxu0 0.0
  %701 = vmatprep.subr.mxu0 0.0
  %702 = vmatpush2.msra.mxu0 0.0
  %703 = vmatprep.subr.mxu0 0.0
  %704 = vmatpush2.msra.mxu0 0.0
  %705 = vmatprep.subr.mxu0 0.0
  %706 = vmatpush2.msra.mxu0 0.0
  %707 = vmatprep.subr.mxu0 0.0
  %708 = vmatpush2.msra.mxu0 0.0
  %709 = vmatprep.subr.mxu0 0.0
  %710 = vmatpush2.msra.mxu0 0.0
  %711 = vmatprep.subr.mxu0 0.0
  %712 = vmatpush2.msra.mxu0 0.0
  %713 = vmatprep.mubr.f32.mxu0 0.0
  %714 = vmatmul.mubr.f32.gmra.mxu0 %v647
  %v715 = vpop.f32.mrf.mxu0
  %v716 = vadd.f32 0.0, %v715
  %v717 = vpop.f32.mrf.mxu0
  %718 = vdwg.mxu0
  %v719 = vadd.f32 %v643, %v716
  %v720 = vxor.u32 %v719, 2147483648
  %v721 = vmul.f32 %v720, 1.442695
  %v722 = vpow.pop %v721
  %v723 = vadd.f32 %v722, 1.0
  %v724 = vrcp.pop %v723
  %v725 = vmul.f32 1.0, %v724
  %v726 = vtanh.pop %v719
  %728 = vrot.lane.b32.xlu0 %v645, 32
  %v729 = vpop.permute.xlu0 %728
  %v731 = vmul.f32 %v725, %v729
  %733 = vrot.lane.b32.xlu0 %v726, 64
  %v734 = vpop.permute.xlu0 %733
  %v736 = vmul.f32 %v725, %v734
  %738 = vrot.lane.b32.xlu0 %v736, 32
  %v739 = vpop.permute.xlu0 %738
  %v741 = vadd.f32 %v731, %v739
  %v742 = vtanh.pop %v741
  %744 = vrot.lane.b32.xlu0 %v742, 64
  %v745 = vpop.permute.xlu0 %744
  %v747 = vmul.f32 %v725, %v745
  %v748 = vstv %s641
  %vm749 = vcmp.lt.s32.totalorder %v748, %v67
  %v750 = vsel %vm749, 1, 0
  %751 = vset.pattern.permute.xlu0 0
  %752 = vperm.xlu0 %751, %v750
  %v753 = vpop.permute.xlu0 %752
  %vm754 = vcmp.eq.s32.totalorder %v753, 1
  %755 = vrot.lane.b32.xlu0 %v644, 96
  %v756 = vpop.permute.xlu0 %755
  %v758 = vsel %vm754, %v747, %v756
  %760 = vrot.lane.b32.xlu0 %v758, 32
  %v761 = vpop.permute.xlu0 %760
  %763 = vst.msk [vmem:[#allocation2] sm:$0xff] %vm80, %v761
  %v764 = vld [vmem:[#allocation3] sm:$0xff]
  %766 = vrot.lane.b32.xlu0 %v764, 32
  %v767 = vpop.permute.xlu0 %766
  %v769 = vsel %vm754, %v741, %v767
  %771 = vrot.lane.b32.xlu0 %v769, 96
  %v772 = vpop.permute.xlu0 %771
  %774 = vst.msk [vmem:[#allocation3] sm:$0xff] %vm80, %v772
  %v775 = vsel %vm754, %v747, 0.0
  %777 = vrot.lane.b32.xlu0 %v775, 32
  %v778 = vpop.permute.xlu0 %777
  %s780 = scalar_lea.vmem %s5, 16
  %781 = vst.msk [vmem:[%s780] sm:$0xff] %vm80, %v778
  %s782 = sadd.s32 %s217, 5
  %s783 = scalar_lea.vmem %s47, 40
  %v784 = vld [vmem:[%s783] sm:$0xff]
  %v785 = vld [vmem:[#allocation4] sm:$0xff]
  %v786 = vld [vmem:[#allocation5] sm:$0xff]
  %v788 = vsel %vm80, %v785, 0
  %790 = vmatprep.subr.mxu0 0.0
  %791 = vmatpush1.msra.mxu0 0.0
  %792 = vmatprep.subr.mxu0 0.0
  %793 = vmatpush1.msra.mxu0 0.0
  %794 = vmatprep.subr.mxu0 0.0
  %795 = vmatpush1.msra.mxu0 0.0
  %796 = vmatprep.subr.mxu0 0.0
  %797 = vmatpush1.msra.mxu0 0.0
  %798 = vmatprep.subr.mxu0 0.0
  %799 = vmatpush1.msra.mxu0 0.0
  %800 = vmatprep.subr.mxu0 0.0
  %801 = vmatpush1.msra.mxu0 0.0
  %802 = vmatprep.subr.mxu0 0.0
  %803 = vmatpush1.msra.mxu0 0.0
  %804 = vmatprep.subr.mxu0 0.0
  %805 = vmatpush1.msra.mxu0 0.0
  %806 = vmatprep.subr.mxu0 0.0
  %807 = vmatpush1.msra.mxu0 0.0
  %808 = vmatprep.subr.mxu0 0.0
  %809 = vmatpush1.msra.mxu0 0.0
  %810 = vmatprep.subr.mxu0 0.0
  %811 = vmatpush1.msra.mxu0 0.0
  %812 = vmatprep.subr.mxu0 0.0
  %813 = vmatpush1.msra.mxu0 0.0
  %814 = vmatprep.subr.mxu0 0.0
  %815 = vmatpush1.msra.mxu0 %v75
  %816 = vmatprep.subr.mxu0 0.0
  %817 = vmatpush1.msra.mxu0 %v74
  %818 = vmatprep.subr.mxu0 0.0
  %819 = vmatpush1.msra.mxu0 %v73
  %820 = vmatprep.subr.mxu0 0.0
  %821 = vmatpush1.msra.mxu0 %v72
  %822 = vmatprep.subr.mxu0 0.0
  %823 = vmatpush2.msra.mxu0 0.0
  %824 = vmatprep.subr.mxu0 0.0
  %825 = vmatpush2.msra.mxu0 0.0
  %826 = vmatprep.subr.mxu0 0.0
  %827 = vmatpush2.msra.mxu0 0.0
  %828 = vmatprep.subr.mxu0 0.0
  %829 = vmatpush2.msra.mxu0 0.0
  %830 = vmatprep.subr.mxu0 0.0
  %831 = vmatpush2.msra.mxu0 0.0
  %832 = vmatprep.subr.mxu0 0.0
  %833 = vmatpush2.msra.mxu0 0.0
  %834 = vmatprep.subr.mxu0 0.0
  %835 = vmatpush2.msra.mxu0 0.0
  %836 = vmatprep.subr.mxu0 0.0
  %837 = vmatpush2.msra.mxu0 0.0
  %838 = vmatprep.subr.mxu0 0.0
  %839 = vmatpush2.msra.mxu0 0.0
  %840 = vmatprep.subr.mxu0 0.0
  %841 = vmatpush2.msra.mxu0 0.0
  %842 = vmatprep.subr.mxu0 0.0
  %843 = vmatpush2.msra.mxu0 0.0
  %844 = vmatprep.subr.mxu0 0.0
  %845 = vmatpush2.msra.mxu0 0.0
  %846 = vmatprep.subr.mxu0 0.0
  %847 = vmatpush2.msra.mxu0 0.0
  %848 = vmatprep.subr.mxu0 0.0
  %849 = vmatpush2.msra.mxu0 0.0
  %850 = vmatprep.subr.mxu0 0.0
  %851 = vmatpush2.msra.mxu0 0.0
  %852 = vmatprep.subr.mxu0 0.0
  %853 = vmatpush2.msra.mxu0 0.0
  %854 = vmatprep.mubr.f32.mxu0 0.0
  %855 = vmatmul.mubr.f32.gmra.mxu0 %v788
  %v856 = vpop.f32.mrf.mxu0
  %v857 = vadd.f32 0.0, %v856
  %v858 = vpop.f32.mrf.mxu0
  %859 = vdwg.mxu0
  %v860 = vadd.f32 %v784, %v857
  %v861 = vxor.u32 %v860, 2147483648
  %v862 = vmul.f32 %v861, 1.442695
  %v863 = vpow.pop %v862
  %v864 = vadd.f32 %v863, 1.0
  %v865 = vrcp.pop %v864
  %v866 = vmul.f32 1.0, %v865
  %v867 = vtanh.pop %v860
  %869 = vrot.lane.b32.xlu0 %v786, 32
  %v870 = vpop.permute.xlu0 %869
  %v872 = vmul.f32 %v866, %v870
  %874 = vrot.lane.b32.xlu0 %v867, 64
  %v875 = vpop.permute.xlu0 %874
  %v877 = vmul.f32 %v866, %v875
  %879 = vrot.lane.b32.xlu0 %v877, 32
  %v880 = vpop.permute.xlu0 %879
  %v882 = vadd.f32 %v872, %v880
  %v883 = vtanh.pop %v882
  %885 = vrot.lane.b32.xlu0 %v883, 64
  %v886 = vpop.permute.xlu0 %885
  %v888 = vmul.f32 %v866, %v886
  %v889 = vstv %s782
  %vm890 = vcmp.lt.s32.totalorder %v889, %v67
  %v891 = vsel %vm890, 1, 0
  %892 = vset.pattern.permute.xlu0 0
  %893 = vperm.xlu0 %892, %v891
  %v894 = vpop.permute.xlu0 %893
  %vm895 = vcmp.eq.s32.totalorder %v894, 1
  %896 = vrot.lane.b32.xlu0 %v785, 96
  %v897 = vpop.permute.xlu0 %896
  %v899 = vsel %vm895, %v888, %v897
  %901 = vrot.lane.b32.xlu0 %v899, 32
  %v902 = vpop.permute.xlu0 %901
  %904 = vst.msk [vmem:[#allocation4] sm:$0xff] %vm80, %v902
  %v905 = vld [vmem:[#allocation5] sm:$0xff]
  %907 = vrot.lane.b32.xlu0 %v905, 32
  %v908 = vpop.permute.xlu0 %907
  %v910 = vsel %vm895, %v882, %v908
  %912 = vrot.lane.b32.xlu0 %v910, 96
  %v913 = vpop.permute.xlu0 %912
  %915 = vst.msk [vmem:[#allocation5] sm:$0xff] %vm80, %v913
  %v916 = vsel %vm895, %v888, 0.0
  %918 = vrot.lane.b32.xlu0 %v916, 32
  %v919 = vpop.permute.xlu0 %918
  %s921 = scalar_lea.vmem %s55, 40
  %922 = vst.msk [vmem:[%s921] sm:$0xff] %vm80, %v919
  %s923 = sadd.s32 %s76, 3
  %s924 = scalar_lea.vmem %s1, 24
  %v925 = vld [vmem:[%s924] sm:$0xff]
  %v926 = vld [vmem:[#allocation2] sm:$0xff]
  %v927 = vld [vmem:[#allocation3] sm:$0xff]
  %v929 = vsel %vm80, %v926, 0
  %931 = vmatprep.subr.mxu0 0.0
  %932 = vmatpush1.msra.mxu0 0.0
  %933 = vmatprep.subr.mxu0 0.0
  %934 = vmatpush1.msra.mxu0 0.0
  %935 = vmatprep.subr.mxu0 0.0
  %936 = vmatpush1.msra.mxu0 0.0
  %937 = vmatprep.subr.mxu0 0.0
  %938 = vmatpush1.msra.mxu0 0.0
  %939 = vmatprep.subr.mxu0 0.0
  %940 = vmatpush1.msra.mxu0 0.0
  %941 = vmatprep.subr.mxu0 0.0
  %942 = vmatpush1.msra.mxu0 0.0
  %943 = vmatprep.subr.mxu0 0.0
  %944 = vmatpush1.msra.mxu0 0.0
  %945 = vmatprep.subr.mxu0 0.0
  %946 = vmatpush1.msra.mxu0 0.0
  %947 = vmatprep.subr.mxu0 0.0
  %948 = vmatpush1.msra.mxu0 0.0
  %949 = vmatprep.subr.mxu0 0.0
  %950 = vmatpush1.msra.mxu0 0.0
  %951 = vmatprep.subr.mxu0 0.0
  %952 = vmatpush1.msra.mxu0 0.0
  %953 = vmatprep.subr.mxu0 0.0
  %954 = vmatpush1.msra.mxu0 0.0
  %955 = vmatprep.subr.mxu0 0.0
  %956 = vmatpush1.msra.mxu0 %v71
  %957 = vmatprep.subr.mxu0 0.0
  %958 = vmatpush1.msra.mxu0 %v70
  %959 = vmatprep.subr.mxu0 0.0
  %960 = vmatpush1.msra.mxu0 %v69
  %961 = vmatprep.subr.mxu0 0.0
  %962 = vmatpush1.msra.mxu0 %v68
  %963 = vmatprep.subr.mxu0 0.0
  %964 = vmatpush2.msra.mxu0 0.0
  %965 = vmatprep.subr.mxu0 0.0
  %966 = vmatpush2.msra.mxu0 0.0
  %967 = vmatprep.subr.mxu0 0.0
  %968 = vmatpush2.msra.mxu0 0.0
  %969 = vmatprep.subr.mxu0 0.0
  %970 = vmatpush2.msra.mxu0 0.0
  %971 = vmatprep.subr.mxu0 0.0
  %972 = vmatpush2.msra.mxu0 0.0
  %973 = vmatprep.subr.mxu0 0.0
  %974 = vmatpush2.msra.mxu0 0.0
  %975 = vmatprep.subr.mxu0 0.0
  %976 = vmatpush2.msra.mxu0 0.0
  %977 = vmatprep.subr.mxu0 0.0
  %978 = vmatpush2.msra.mxu0 0.0
  %979 = vmatprep.subr.mxu0 0.0
  %980 = vmatpush2.msra.mxu0 0.0
  %981 = vmatprep.subr.mxu0 0.0
  %982 = vmatpush2.msra.mxu0 0.0
  %983 = vmatprep.subr.mxu0 0.0
  %984 = vmatpush2.msra.mxu0 0.0
  %985 = vmatprep.subr.mxu0 0.0
  %986 = vmatpush2.msra.mxu0 0.0
  %987 = vmatprep.subr.mxu0 0.0
  %988 = vmatpush2.msra.mxu0 0.0
  %989 = vmatprep.subr.mxu0 0.0
  %990 = vmatpush2.msra.mxu0 0.0
  %991 = vmatprep.subr.mxu0 0.0
  %992 = vmatpush2.msra.mxu0 0.0
  %993 = vmatprep.subr.mxu0 0.0
  %994 = vmatpush2.msra.mxu0 0.0
  %995 = vmatprep.mubr.f32.mxu0 0.0
  %996 = vmatmul.mubr.f32.gmra.mxu0 %v929
  %v997 = vpop.f32.mrf.mxu0
  %v998 = vadd.f32 0.0, %v997
  %v999 = vpop.f32.mrf.mxu0
  %1000 = vdwg.mxu0
  %v1001 = vadd.f32 %v925, %v998
  %v1002 = vxor.u32 %v1001, 2147483648
  %v1003 = vmul.f32 %v1002, 1.442695
  %v1004 = vpow.pop %v1003
  %v1005 = vadd.f32 %v1004, 1.0
  %v1006 = vrcp.pop %v1005
  %v1007 = vmul.f32 1.0, %v1006
  %v1008 = vtanh.pop %v1001
  %1010 = vrot.lane.b32.xlu0 %v927, 32
  %v1011 = vpop.permute.xlu0 %1010
  %v1013 = vmul.f32 %v1007, %v1011
  %1015 = vrot.lane.b32.xlu0 %v1008, 64
  %v1016 = vpop.permute.xlu0 %1015
  %v1018 = vmul.f32 %v1007, %v1016
  %1020 = vrot.lane.b32.xlu0 %v1018, 32
  %v1021 = vpop.permute.xlu0 %1020
  %v1023 = vadd.f32 %v1013, %v1021
  %v1024 = vtanh.pop %v1023
  %1026 = vrot.lane.b32.xlu0 %v1024, 64
  %v1027 = vpop.permute.xlu0 %1026
  %v1029 = vmul.f32 %v1007, %v1027
  %v1030 = vstv %s923
  %vm1031 = vcmp.lt.s32.totalorder %v1030, %v67
  %v1032 = vsel %vm1031, 1, 0
  %1033 = vset.pattern.permute.xlu0 0
  %1034 = vperm.xlu0 %1033, %v1032
  %v1035 = vpop.permute.xlu0 %1034
  %vm1036 = vcmp.eq.s32.totalorder %v1035, 1
  %1037 = vrot.lane.b32.xlu0 %v926, 96
  %v1038 = vpop.permute.xlu0 %1037
  %v1040 = vsel %vm1036, %v1029, %v1038
  %1042 = vrot.lane.b32.xlu0 %v1040, 32
  %v1043 = vpop.permute.xlu0 %1042
  %1045 = vst.msk [vmem:[#allocation2] sm:$0xff] %vm80, %v1043
  %v1046 = vld [vmem:[#allocation3] sm:$0xff]
  %1048 = vrot.lane.b32.xlu0 %v1046, 32
  %v1049 = vpop.permute.xlu0 %1048
  %v1051 = vsel %vm1036, %v1023, %v1049
  %1053 = vrot.lane.b32.xlu0 %v1051, 96
  %v1054 = vpop.permute.xlu0 %1053
  %1056 = vst.msk [vmem:[#allocation3] sm:$0xff] %vm80, %v1054
  %v1057 = vsel %vm1036, %v1029, 0.0
  %1059 = vrot.lane.b32.xlu0 %v1057, 32
  %v1060 = vpop.permute.xlu0 %1059
  %s1062 = scalar_lea.vmem %s5, 24
  %1063 = vst.msk [vmem:[%s1062] sm:$0xff] %vm80, %v1060
  %s1064 = sadd.s32 %s217, 4
  %s1065 = scalar_lea.vmem %s47, 32
  %v1066 = vld [vmem:[%s1065] sm:$0xff]
  %v1067 = vld [vmem:[#allocation4] sm:$0xff]
  %v1068 = vld [vmem:[#allocation5] sm:$0xff]
  %v1070 = vsel %vm80, %v1067, 0
  %1072 = vmatprep.subr.mxu0 0.0
  %1073 = vmatpush1.msra.mxu0 0.0
  %1074 = vmatprep.subr.mxu0 0.0
  %1075 = vmatpush1.msra.mxu0 0.0
  %1076 = vmatprep.subr.mxu0 0.0
  %1077 = vmatpush1.msra.mxu0 0.0
  %1078 = vmatprep.subr.mxu0 0.0
  %1079 = vmatpush1.msra.mxu0 0.0
  %1080 = vmatprep.subr.mxu0 0.0
  %1081 = vmatpush1.msra.mxu0 0.0
  %1082 = vmatprep.subr.mxu0 0.0
  %1083 = vmatpush1.msra.mxu0 0.0
  %1084 = vmatprep.subr.mxu0 0.0
  %1085 = vmatpush1.msra.mxu0 0.0
  %1086 = vmatprep.subr.mxu0 0.0
  %1087 = vmatpush1.msra.mxu0 0.0
  %1088 = vmatprep.subr.mxu0 0.0
  %1089 = vmatpush1.msra.mxu0 0.0
  %1090 = vmatprep.subr.mxu0 0.0
  %1091 = vmatpush1.msra.mxu0 0.0
  %1092 = vmatprep.subr.mxu0 0.0
  %1093 = vmatpush1.msra.mxu0 0.0
  %1094 = vmatprep.subr.mxu0 0.0
  %1095 = vmatpush1.msra.mxu0 0.0
  %1096 = vmatprep.subr.mxu0 0.0
  %1097 = vmatpush1.msra.mxu0 %v75
  %1098 = vmatprep.subr.mxu0 0.0
  %1099 = vmatpush1.msra.mxu0 %v74
  %1100 = vmatprep.subr.mxu0 0.0
  %1101 = vmatpush1.msra.mxu0 %v73
  %1102 = vmatprep.subr.mxu0 0.0
  %1103 = vmatpush1.msra.mxu0 %v72
  %1104 = vmatprep.subr.mxu0 0.0
  %1105 = vmatpush2.msra.mxu0 0.0
  %1106 = vmatprep.subr.mxu0 0.0
  %1107 = vmatpush2.msra.mxu0 0.0
  %1108 = vmatprep.subr.mxu0 0.0
  %1109 = vmatpush2.msra.mxu0 0.0
  %1110 = vmatprep.subr.mxu0 0.0
  %1111 = vmatpush2.msra.mxu0 0.0
  %1112 = vmatprep.subr.mxu0 0.0
  %1113 = vmatpush2.msra.mxu0 0.0
  %1114 = vmatprep.subr.mxu0 0.0
  %1115 = vmatpush2.msra.mxu0 0.0
  %1116 = vmatprep.subr.mxu0 0.0
  %1117 = vmatpush2.msra.mxu0 0.0
  %1118 = vmatprep.subr.mxu0 0.0
  %1119 = vmatpush2.msra.mxu0 0.0
  %1120 = vmatprep.subr.mxu0 0.0
  %1121 = vmatpush2.msra.mxu0 0.0
  %1122 = vmatprep.subr.mxu0 0.0
  %1123 = vmatpush2.msra.mxu0 0.0
  %1124 = vmatprep.subr.mxu0 0.0
  %1125 = vmatpush2.msra.mxu0 0.0
  %1126 = vmatprep.subr.mxu0 0.0
  %1127 = vmatpush2.msra.mxu0 0.0
  %1128 = vmatprep.subr.mxu0 0.0
  %1129 = vmatpush2.msra.mxu0 0.0
  %1130 = vmatprep.subr.mxu0 0.0
  %1131 = vmatpush2.msra.mxu0 0.0
  %1132 = vmatprep.subr.mxu0 0.0
  %1133 = vmatpush2.msra.mxu0 0.0
  %1134 = vmatprep.subr.mxu0 0.0
  %1135 = vmatpush2.msra.mxu0 0.0
  %1136 = vmatprep.mubr.f32.mxu0 0.0
  %1137 = vmatmul.mubr.f32.gmra.mxu0 %v1070
  %v1138 = vpop.f32.mrf.mxu0
  %v1139 = vadd.f32 0.0, %v1138
  %v1140 = vpop.f32.mrf.mxu0
  %1141 = vdwg.mxu0
  %v1142 = vadd.f32 %v1066, %v1139
  %v1143 = vxor.u32 %v1142, 2147483648
  %v1144 = vmul.f32 %v1143, 1.442695
  %v1145 = vpow.pop %v1144
  %v1146 = vadd.f32 %v1145, 1.0
  %v1147 = vrcp.pop %v1146
  %v1148 = vmul.f32 1.0, %v1147
  %v1149 = vtanh.pop %v1142
  %1151 = vrot.lane.b32.xlu0 %v1068, 32
  %v1152 = vpop.permute.xlu0 %1151
  %v1154 = vmul.f32 %v1148, %v1152
  %1156 = vrot.lane.b32.xlu0 %v1149, 64
  %v1157 = vpop.permute.xlu0 %1156
  %v1159 = vmul.f32 %v1148, %v1157
  %1161 = vrot.lane.b32.xlu0 %v1159, 32
  %v1162 = vpop.permute.xlu0 %1161
  %v1164 = vadd.f32 %v1154, %v1162
  %v1165 = vtanh.pop %v1164
  %1167 = vrot.lane.b32.xlu0 %v1165, 64
  %v1168 = vpop.permute.xlu0 %1167
  %v1170 = vmul.f32 %v1148, %v1168
  %v1171 = vstv %s1064
  %vm1172 = vcmp.lt.s32.totalorder %v1171, %v67
  %v1173 = vsel %vm1172, 1, 0
  %1174 = vset.pattern.permute.xlu0 0
  %1175 = vperm.xlu0 %1174, %v1173
  %v1176 = vpop.permute.xlu0 %1175
  %vm1177 = vcmp.eq.s32.totalorder %v1176, 1
  %1178 = vrot.lane.b32.xlu0 %v1067, 96
  %v1179 = vpop.permute.xlu0 %1178
  %v1181 = vsel %vm1177, %v1170, %v1179
  %1183 = vrot.lane.b32.xlu0 %v1181, 32
  %v1184 = vpop.permute.xlu0 %1183
  %1186 = vst.msk [vmem:[#allocation4] sm:$0xff] %vm80, %v1184
  %v1187 = vld [vmem:[#allocation5] sm:$0xff]
  %1189 = vrot.lane.b32.xlu0 %v1187, 32
  %v1190 = vpop.permute.xlu0 %1189
  %v1192 = vsel %vm1177, %v1164, %v1190
  %1194 = vrot.lane.b32.xlu0 %v1192, 96
  %v1195 = vpop.permute.xlu0 %1194
  %1197 = vst.msk [vmem:[#allocation5] sm:$0xff] %vm80, %v1195
  %v1198 = vsel %vm1177, %v1170, 0.0
  %1200 = vrot.lane.b32.xlu0 %v1198, 32
  %v1201 = vpop.permute.xlu0 %1200
  %s1203 = scalar_lea.vmem %s55, 32
  %1204 = vst.msk [vmem:[%s1203] sm:$0xff] %vm80, %v1201
  %s1205 = sadd.s32 %s76, 4
  %s1206 = scalar_lea.vmem %s1, 32
  %v1207 = vld [vmem:[%s1206] sm:$0xff]
  %v1208 = vld [vmem:[#allocation2] sm:$0xff]
  %v1209 = vld [vmem:[#allocation3] sm:$0xff]
  %v1211 = vsel %vm80, %v1208, 0
  %1213 = vmatprep.subr.mxu0 0.0
  %1214 = vmatpush1.msra.mxu0 0.0
  %1215 = vmatprep.subr.mxu0 0.0
  %1216 = vmatpush1.msra.mxu0 0.0
  %1217 = vmatprep.subr.mxu0 0.0
  %1218 = vmatpush1.msra.mxu0 0.0
  %1219 = vmatprep.subr.mxu0 0.0
  %1220 = vmatpush1.msra.mxu0 0.0
  %1221 = vmatprep.subr.mxu0 0.0
  %1222 = vmatpush1.msra.mxu0 0.0
  %1223 = vmatprep.subr.mxu0 0.0
  %1224 = vmatpush1.msra.mxu0 0.0
  %1225 = vmatprep.subr.mxu0 0.0
  %1226 = vmatpush1.msra.mxu0 0.0
  %1227 = vmatprep.subr.mxu0 0.0
  %1228 = vmatpush1.msra.mxu0 0.0
  %1229 = vmatprep.subr.mxu0 0.0
  %1230 = vmatpush1.msra.mxu0 0.0
  %1231 = vmatprep.subr.mxu0 0.0
  %1232 = vmatpush1.msra.mxu0 0.0
  %1233 = vmatprep.subr.mxu0 0.0
  %1234 = vmatpush1.msra.mxu0 0.0
  %1235 = vmatprep.subr.mxu0 0.0
  %1236 = vmatpush1.msra.mxu0 0.0
  %1237 = vmatprep.subr.mxu0 0.0
  %1238 = vmatpush1.msra.mxu0 %v71
  %1239 = vmatprep.subr.mxu0 0.0
  %1240 = vmatpush1.msra.mxu0 %v70
  %1241 = vmatprep.subr.mxu0 0.0
  %1242 = vmatpush1.msra.mxu0 %v69
  %1243 = vmatprep.subr.mxu0 0.0
  %1244 = vmatpush1.msra.mxu0 %v68
  %1245 = vmatprep.subr.mxu0 0.0
  %1246 = vmatpush2.msra.mxu0 0.0
  %1247 = vmatprep.subr.mxu0 0.0
  %1248 = vmatpush2.msra.mxu0 0.0
  %1249 = vmatprep.subr.mxu0 0.0
  %1250 = vmatpush2.msra.mxu0 0.0
  %1251 = vmatprep.subr.mxu0 0.0
  %1252 = vmatpush2.msra.mxu0 0.0
  %1253 = vmatprep.subr.mxu0 0.0
  %1254 = vmatpush2.msra.mxu0 0.0
  %1255 = vmatprep.subr.mxu0 0.0
  %1256 = vmatpush2.msra.mxu0 0.0
  %1257 = vmatprep.subr.mxu0 0.0
  %1258 = vmatpush2.msra.mxu0 0.0
  %1259 = vmatprep.subr.mxu0 0.0
  %1260 = vmatpush2.msra.mxu0 0.0
  %1261 = vmatprep.subr.mxu0 0.0
  %1262 = vmatpush2.msra.mxu0 0.0
  %1263 = vmatprep.subr.mxu0 0.0
  %1264 = vmatpush2.msra.mxu0 0.0
  %1265 = vmatprep.subr.mxu0 0.0
  %1266 = vmatpush2.msra.mxu0 0.0
  %1267 = vmatprep.subr.mxu0 0.0
  %1268 = vmatpush2.msra.mxu0 0.0
  %1269 = vmatprep.subr.mxu0 0.0
  %1270 = vmatpush2.msra.mxu0 0.0
  %1271 = vmatprep.subr.mxu0 0.0
  %1272 = vmatpush2.msra.mxu0 0.0
  %1273 = vmatprep.subr.mxu0 0.0
  %1274 = vmatpush2.msra.mxu0 0.0
  %1275 = vmatprep.subr.mxu0 0.0
  %1276 = vmatpush2.msra.mxu0 0.0
  %1277 = vmatprep.mubr.f32.mxu0 0.0
  %1278 = vmatmul.mubr.f32.gmra.mxu0 %v1211
  %v1279 = vpop.f32.mrf.mxu0
  %v1280 = vadd.f32 0.0, %v1279
  %v1281 = vpop.f32.mrf.mxu0
  %1282 = vdwg.mxu0
  %v1283 = vadd.f32 %v1207, %v1280
  %v1284 = vxor.u32 %v1283, 2147483648
  %v1285 = vmul.f32 %v1284, 1.442695
  %v1286 = vpow.pop %v1285
  %v1287 = vadd.f32 %v1286, 1.0
  %v1288 = vrcp.pop %v1287
  %v1289 = vmul.f32 1.0, %v1288
  %v1290 = vtanh.pop %v1283
  %1292 = vrot.lane.b32.xlu0 %v1209, 32
  %v1293 = vpop.permute.xlu0 %1292
  %v1295 = vmul.f32 %v1289, %v1293
  %1297 = vrot.lane.b32.xlu0 %v1290, 64
  %v1298 = vpop.permute.xlu0 %1297
  %v1300 = vmul.f32 %v1289, %v1298
  %1302 = vrot.lane.b32.xlu0 %v1300, 32
  %v1303 = vpop.permute.xlu0 %1302
  %v1305 = vadd.f32 %v1295, %v1303
  %v1306 = vtanh.pop %v1305
  %1308 = vrot.lane.b32.xlu0 %v1306, 64
  %v1309 = vpop.permute.xlu0 %1308
  %v1311 = vmul.f32 %v1289, %v1309
  %v1312 = vstv %s1205
  %vm1313 = vcmp.lt.s32.totalorder %v1312, %v67
  %v1314 = vsel %vm1313, 1, 0
  %1315 = vset.pattern.permute.xlu0 0
  %1316 = vperm.xlu0 %1315, %v1314
  %v1317 = vpop.permute.xlu0 %1316
  %vm1318 = vcmp.eq.s32.totalorder %v1317, 1
  %1319 = vrot.lane.b32.xlu0 %v1208, 96
  %v1320 = vpop.permute.xlu0 %1319
  %v1322 = vsel %vm1318, %v1311, %v1320
  %1324 = vrot.lane.b32.xlu0 %v1322, 32
  %v1325 = vpop.permute.xlu0 %1324
  %1327 = vst.msk [vmem:[#allocation2] sm:$0xff] %vm80, %v1325
  %v1328 = vld [vmem:[#allocation3] sm:$0xff]
  %1330 = vrot.lane.b32.xlu0 %v1328, 32
  %v1331 = vpop.permute.xlu0 %1330
  %v1333 = vsel %vm1318, %v1305, %v1331
  %1335 = vrot.lane.b32.xlu0 %v1333, 96
  %v1336 = vpop.permute.xlu0 %1335
  %1338 = vst.msk [vmem:[#allocation3] sm:$0xff] %vm80, %v1336
  %v1339 = vsel %vm1318, %v1311, 0.0
  %1341 = vrot.lane.b32.xlu0 %v1339, 32
  %v1342 = vpop.permute.xlu0 %1341
  %s1344 = scalar_lea.vmem %s5, 32
  %1345 = vst.msk [vmem:[%s1344] sm:$0xff] %vm80, %v1342
  %s1346 = sadd.s32 %s217, 3
  %s1347 = scalar_lea.vmem %s47, 24
  %v1348 = vld [vmem:[%s1347] sm:$0xff]
  %v1349 = vld [vmem:[#allocation4] sm:$0xff]
  %v1350 = vld [vmem:[#allocation5] sm:$0xff]
  %v1352 = vsel %vm80, %v1349, 0
  %1354 = vmatprep.subr.mxu0 0.0
  %1355 = vmatpush1.msra.mxu0 0.0
  %1356 = vmatprep.subr.mxu0 0.0
  %1357 = vmatpush1.msra.mxu0 0.0
  %1358 = vmatprep.subr.mxu0 0.0
  %1359 = vmatpush1.msra.mxu0 0.0
  %1360 = vmatprep.subr.mxu0 0.0
  %1361 = vmatpush1.msra.mxu0 0.0
  %1362 = vmatprep.subr.mxu0 0.0
  %1363 = vmatpush1.msra.mxu0 0.0
  %1364 = vmatprep.subr.mxu0 0.0
  %1365 = vmatpush1.msra.mxu0 0.0
  %1366 = vmatprep.subr.mxu0 0.0
  %1367 = vmatpush1.msra.mxu0 0.0
  %1368 = vmatprep.subr.mxu0 0.0
  %1369 = vmatpush1.msra.mxu0 0.0
  %1370 = vmatprep.subr.mxu0 0.0
  %1371 = vmatpush1.msra.mxu0 0.0
  %1372 = vmatprep.subr.mxu0 0.0
  %1373 = vmatpush1.msra.mxu0 0.0
  %1374 = vmatprep.subr.mxu0 0.0
  %1375 = vmatpush1.msra.mxu0 0.0
  %1376 = vmatprep.subr.mxu0 0.0
  %1377 = vmatpush1.msra.mxu0 0.0
  %1378 = vmatprep.subr.mxu0 0.0
  %1379 = vmatpush1.msra.mxu0 %v75
  %1380 = vmatprep.subr.mxu0 0.0
  %1381 = vmatpush1.msra.mxu0 %v74
  %1382 = vmatprep.subr.mxu0 0.0
  %1383 = vmatpush1.msra.mxu0 %v73
  %1384 = vmatprep.subr.mxu0 0.0
  %1385 = vmatpush1.msra.mxu0 %v72
  %1386 = vmatprep.subr.mxu0 0.0
  %1387 = vmatpush2.msra.mxu0 0.0
  %1388 = vmatprep.subr.mxu0 0.0
  %1389 = vmatpush2.msra.mxu0 0.0
  %1390 = vmatprep.subr.mxu0 0.0
  %1391 = vmatpush2.msra.mxu0 0.0
  %1392 = vmatprep.subr.mxu0 0.0
  %1393 = vmatpush2.msra.mxu0 0.0
  %1394 = vmatprep.subr.mxu0 0.0
  %1395 = vmatpush2.msra.mxu0 0.0
  %1396 = vmatprep.subr.mxu0 0.0
  %1397 = vmatpush2.msra.mxu0 0.0
  %1398 = vmatprep.subr.mxu0 0.0
  %1399 = vmatpush2.msra.mxu0 0.0
  %1400 = vmatprep.subr.mxu0 0.0
  %1401 = vmatpush2.msra.mxu0 0.0
  %1402 = vmatprep.subr.mxu0 0.0
  %1403 = vmatpush2.msra.mxu0 0.0
  %1404 = vmatprep.subr.mxu0 0.0
  %1405 = vmatpush2.msra.mxu0 0.0
  %1406 = vmatprep.subr.mxu0 0.0
  %1407 = vmatpush2.msra.mxu0 0.0
  %1408 = vmatprep.subr.mxu0 0.0
  %1409 = vmatpush2.msra.mxu0 0.0
  %1410 = vmatprep.subr.mxu0 0.0
  %1411 = vmatpush2.msra.mxu0 0.0
  %1412 = vmatprep.subr.mxu0 0.0
  %1413 = vmatpush2.msra.mxu0 0.0
  %1414 = vmatprep.subr.mxu0 0.0
  %1415 = vmatpush2.msra.mxu0 0.0
  %1416 = vmatprep.subr.mxu0 0.0
  %1417 = vmatpush2.msra.mxu0 0.0
  %1418 = vmatprep.mubr.f32.mxu0 0.0
  %1419 = vmatmul.mubr.f32.gmra.mxu0 %v1352
  %v1420 = vpop.f32.mrf.mxu0
  %v1421 = vadd.f32 0.0, %v1420
  %v1422 = vpop.f32.mrf.mxu0
  %1423 = vdwg.mxu0
  %v1424 = vadd.f32 %v1348, %v1421
  %v1425 = vxor.u32 %v1424, 2147483648
  %v1426 = vmul.f32 %v1425, 1.442695
  %v1427 = vpow.pop %v1426
  %v1428 = vadd.f32 %v1427, 1.0
  %v1429 = vrcp.pop %v1428
  %v1430 = vmul.f32 1.0, %v1429
  %v1431 = vtanh.pop %v1424
  %1433 = vrot.lane.b32.xlu0 %v1350, 32
  %v1434 = vpop.permute.xlu0 %1433
  %v1436 = vmul.f32 %v1430, %v1434
  %1438 = vrot.lane.b32.xlu0 %v1431, 64
  %v1439 = vpop.permute.xlu0 %1438
  %v1441 = vmul.f32 %v1430, %v1439
  %1443 = vrot.lane.b32.xlu0 %v1441, 32
  %v1444 = vpop.permute.xlu0 %1443
  %v1446 = vadd.f32 %v1436, %v1444
  %v1447 = vtanh.pop %v1446
  %1449 = vrot.lane.b32.xlu0 %v1447, 64
  %v1450 = vpop.permute.xlu0 %1449
  %v1452 = vmul.f32 %v1430, %v1450
  %v1453 = vstv %s1346
  %vm1454 = vcmp.lt.s32.totalorder %v1453, %v67
  %v1455 = vsel %vm1454, 1, 0
  %1456 = vset.pattern.permute.xlu0 0
  %1457 = vperm.xlu0 %1456, %v1455
  %v1458 = vpop.permute.xlu0 %1457
  %vm1459 = vcmp.eq.s32.totalorder %v1458, 1
  %1460 = vrot.lane.b32.xlu0 %v1349, 96
  %v1461 = vpop.permute.xlu0 %1460
  %v1463 = vsel %vm1459, %v1452, %v1461
  %1465 = vrot.lane.b32.xlu0 %v1463, 32
  %v1466 = vpop.permute.xlu0 %1465
  %1468 = vst.msk [vmem:[#allocation4] sm:$0xff] %vm80, %v1466
  %v1469 = vld [vmem:[#allocation5] sm:$0xff]
  %1471 = vrot.lane.b32.xlu0 %v1469, 32
  %v1472 = vpop.permute.xlu0 %1471
  %v1474 = vsel %vm1459, %v1446, %v1472
  %1476 = vrot.lane.b32.xlu0 %v1474, 96
  %v1477 = vpop.permute.xlu0 %1476
  %1479 = vst.msk [vmem:[#allocation5] sm:$0xff] %vm80, %v1477
  %v1480 = vsel %vm1459, %v1452, 0.0
  %1482 = vrot.lane.b32.xlu0 %v1480, 32
  %v1483 = vpop.permute.xlu0 %1482
  %s1485 = scalar_lea.vmem %s55, 24
  %1486 = vst.msk [vmem:[%s1485] sm:$0xff] %vm80, %v1483
  %s1487 = sadd.s32 %s76, 5
  %s1488 = scalar_lea.vmem %s1, 40
  %v1489 = vld [vmem:[%s1488] sm:$0xff]
  %v1490 = vld [vmem:[#allocation2] sm:$0xff]
  %v1491 = vld [vmem:[#allocation3] sm:$0xff]
  %v1493 = vsel %vm80, %v1490, 0
  %1495 = vmatprep.subr.mxu0 0.0
  %1496 = vmatpush1.msra.mxu0 0.0
  %1497 = vmatprep.subr.mxu0 0.0
  %1498 = vmatpush1.msra.mxu0 0.0
  %1499 = vmatprep.subr.mxu0 0.0
  %1500 = vmatpush1.msra.mxu0 0.0
  %1501 = vmatprep.subr.mxu0 0.0
  %1502 = vmatpush1.msra.mxu0 0.0
  %1503 = vmatprep.subr.mxu0 0.0
  %1504 = vmatpush1.msra.mxu0 0.0
  %1505 = vmatprep.subr.mxu0 0.0
  %1506 = vmatpush1.msra.mxu0 0.0
  %1507 = vmatprep.subr.mxu0 0.0
  %1508 = vmatpush1.msra.mxu0 0.0
  %1509 = vmatprep.subr.mxu0 0.0
  %1510 = vmatpush1.msra.mxu0 0.0
  %1511 = vmatprep.subr.mxu0 0.0
  %1512 = vmatpush1.msra.mxu0 0.0
  %1513 = vmatprep.subr.mxu0 0.0
  %1514 = vmatpush1.msra.mxu0 0.0
  %1515 = vmatprep.subr.mxu0 0.0
  %1516 = vmatpush1.msra.mxu0 0.0
  %1517 = vmatprep.subr.mxu0 0.0
  %1518 = vmatpush1.msra.mxu0 0.0
  %1519 = vmatprep.subr.mxu0 0.0
  %1520 = vmatpush1.msra.mxu0 %v71
  %1521 = vmatprep.subr.mxu0 0.0
  %1522 = vmatpush1.msra.mxu0 %v70
  %1523 = vmatprep.subr.mxu0 0.0
  %1524 = vmatpush1.msra.mxu0 %v69
  %1525 = vmatprep.subr.mxu0 0.0
  %1526 = vmatpush1.msra.mxu0 %v68
  %1527 = vmatprep.subr.mxu0 0.0
  %1528 = vmatpush2.msra.mxu0 0.0
  %1529 = vmatprep.subr.mxu0 0.0
  %1530 = vmatpush2.msra.mxu0 0.0
  %1531 = vmatprep.subr.mxu0 0.0
  %1532 = vmatpush2.msra.mxu0 0.0
  %1533 = vmatprep.subr.mxu0 0.0
  %1534 = vmatpush2.msra.mxu0 0.0
  %1535 = vmatprep.subr.mxu0 0.0
  %1536 = vmatpush2.msra.mxu0 0.0
  %1537 = vmatprep.subr.mxu0 0.0
  %1538 = vmatpush2.msra.mxu0 0.0
  %1539 = vmatprep.subr.mxu0 0.0
  %1540 = vmatpush2.msra.mxu0 0.0
  %1541 = vmatprep.subr.mxu0 0.0
  %1542 = vmatpush2.msra.mxu0 0.0
  %1543 = vmatprep.subr.mxu0 0.0
  %1544 = vmatpush2.msra.mxu0 0.0
  %1545 = vmatprep.subr.mxu0 0.0
  %1546 = vmatpush2.msra.mxu0 0.0
  %1547 = vmatprep.subr.mxu0 0.0
  %1548 = vmatpush2.msra.mxu0 0.0
  %1549 = vmatprep.subr.mxu0 0.0
  %1550 = vmatpush2.msra.mxu0 0.0
  %1551 = vmatprep.subr.mxu0 0.0
  %1552 = vmatpush2.msra.mxu0 0.0
  %1553 = vmatprep.subr.mxu0 0.0
  %1554 = vmatpush2.msra.mxu0 0.0
  %1555 = vmatprep.subr.mxu0 0.0
  %1556 = vmatpush2.msra.mxu0 0.0
  %1557 = vmatprep.subr.mxu0 0.0
  %1558 = vmatpush2.msra.mxu0 0.0
  %1559 = vmatprep.mubr.f32.mxu0 0.0
  %1560 = vmatmul.mubr.f32.gmra.mxu0 %v1493
  %v1561 = vpop.f32.mrf.mxu0
  %v1562 = vadd.f32 0.0, %v1561
  %v1563 = vpop.f32.mrf.mxu0
  %1564 = vdwg.mxu0
  %v1565 = vadd.f32 %v1489, %v1562
  %v1566 = vxor.u32 %v1565, 2147483648
  %v1567 = vmul.f32 %v1566, 1.442695
  %v1568 = vpow.pop %v1567
  %v1569 = vadd.f32 %v1568, 1.0
  %v1570 = vrcp.pop %v1569
  %v1571 = vmul.f32 1.0, %v1570
  %v1572 = vtanh.pop %v1565
  %1574 = vrot.lane.b32.xlu0 %v1491, 32
  %v1575 = vpop.permute.xlu0 %1574
  %v1577 = vmul.f32 %v1571, %v1575
  %1579 = vrot.lane.b32.xlu0 %v1572, 64
  %v1580 = vpop.permute.xlu0 %1579
  %v1582 = vmul.f32 %v1571, %v1580
  %1584 = vrot.lane.b32.xlu0 %v1582, 32
  %v1585 = vpop.permute.xlu0 %1584
  %v1587 = vadd.f32 %v1577, %v1585
  %v1588 = vtanh.pop %v1587
  %1590 = vrot.lane.b32.xlu0 %v1588, 64
  %v1591 = vpop.permute.xlu0 %1590
  %v1593 = vmul.f32 %v1571, %v1591
  %v1594 = vstv %s1487
  %vm1595 = vcmp.lt.s32.totalorder %v1594, %v67
  %v1596 = vsel %vm1595, 1, 0
  %1597 = vset.pattern.permute.xlu0 0
  %1598 = vperm.xlu0 %1597, %v1596
  %v1599 = vpop.permute.xlu0 %1598
  %vm1600 = vcmp.eq.s32.totalorder %v1599, 1
  %1601 = vrot.lane.b32.xlu0 %v1490, 96
  %v1602 = vpop.permute.xlu0 %1601
  %v1604 = vsel %vm1600, %v1593, %v1602
  %1606 = vrot.lane.b32.xlu0 %v1604, 32
  %v1607 = vpop.permute.xlu0 %1606
  %1609 = vst.msk [vmem:[#allocation2] sm:$0xff] %vm80, %v1607
  %v1610 = vld [vmem:[#allocation3] sm:$0xff]
  %1612 = vrot.lane.b32.xlu0 %v1610, 32
  %v1613 = vpop.permute.xlu0 %1612
  %v1615 = vsel %vm1600, %v1587, %v1613
  %1617 = vrot.lane.b32.xlu0 %v1615, 96
  %v1618 = vpop.permute.xlu0 %1617
  %1620 = vst.msk [vmem:[#allocation3] sm:$0xff] %vm80, %v1618
  %v1621 = vsel %vm1600, %v1593, 0.0
  %1623 = vrot.lane.b32.xlu0 %v1621, 32
  %v1624 = vpop.permute.xlu0 %1623
  %s1626 = scalar_lea.vmem %s5, 40
  %1627 = vst.msk [vmem:[%s1626] sm:$0xff] %vm80, %v1624
  %s1628 = sadd.s32 %s217, 2
  %s1629 = scalar_lea.vmem %s47, 16
  %v1630 = vld [vmem:[%s1629] sm:$0xff]
  %v1631 = vld [vmem:[#allocation4] sm:$0xff]
  %v1632 = vld [vmem:[#allocation5] sm:$0xff]
  %v1634 = vsel %vm80, %v1631, 0
  %1636 = vmatprep.subr.mxu0 0.0
  %1637 = vmatpush1.msra.mxu0 0.0
  %1638 = vmatprep.subr.mxu0 0.0
  %1639 = vmatpush1.msra.mxu0 0.0
  %1640 = vmatprep.subr.mxu0 0.0
  %1641 = vmatpush1.msra.mxu0 0.0
  %1642 = vmatprep.subr.mxu0 0.0
  %1643 = vmatpush1.msra.mxu0 0.0
  %1644 = vmatprep.subr.mxu0 0.0
  %1645 = vmatpush1.msra.mxu0 0.0
  %1646 = vmatprep.subr.mxu0 0.0
  %1647 = vmatpush1.msra.mxu0 0.0
  %1648 = vmatprep.subr.mxu0 0.0
  %1649 = vmatpush1.msra.mxu0 0.0
  %1650 = vmatprep.subr.mxu0 0.0
  %1651 = vmatpush1.msra.mxu0 0.0
  %1652 = vmatprep.subr.mxu0 0.0
  %1653 = vmatpush1.msra.mxu0 0.0
  %1654 = vmatprep.subr.mxu0 0.0
  %1655 = vmatpush1.msra.mxu0 0.0
  %1656 = vmatprep.subr.mxu0 0.0
  %1657 = vmatpush1.msra.mxu0 0.0
  %1658 = vmatprep.subr.mxu0 0.0
  %1659 = vmatpush1.msra.mxu0 0.0
  %1660 = vmatprep.subr.mxu0 0.0
  %1661 = vmatpush1.msra.mxu0 %v75
  %1662 = vmatprep.subr.mxu0 0.0
  %1663 = vmatpush1.msra.mxu0 %v74
  %1664 = vmatprep.subr.mxu0 0.0
  %1665 = vmatpush1.msra.mxu0 %v73
  %1666 = vmatprep.subr.mxu0 0.0
  %1667 = vmatpush1.msra.mxu0 %v72
  %1668 = vmatprep.subr.mxu0 0.0
  %1669 = vmatpush2.msra.mxu0 0.0
  %1670 = vmatprep.subr.mxu0 0.0
  %1671 = vmatpush2.msra.mxu0 0.0
  %1672 = vmatprep.subr.mxu0 0.0
  %1673 = vmatpush2.msra.mxu0 0.0
  %1674 = vmatprep.subr.mxu0 0.0
  %1675 = vmatpush2.msra.mxu0 0.0
  %1676 = vmatprep.subr.mxu0 0.0
  %1677 = vmatpush2.msra.mxu0 0.0
  %1678 = vmatprep.subr.mxu0 0.0
  %1679 = vmatpush2.msra.mxu0 0.0
  %1680 = vmatprep.subr.mxu0 0.0
  %1681 = vmatpush2.msra.mxu0 0.0
  %1682 = vmatprep.subr.mxu0 0.0
  %1683 = vmatpush2.msra.mxu0 0.0
  %1684 = vmatprep.subr.mxu0 0.0
  %1685 = vmatpush2.msra.mxu0 0.0
  %1686 = vmatprep.subr.mxu0 0.0
  %1687 = vmatpush2.msra.mxu0 0.0
  %1688 = vmatprep.subr.mxu0 0.0
  %1689 = vmatpush2.msra.mxu0 0.0
  %1690 = vmatprep.subr.mxu0 0.0
  %1691 = vmatpush2.msra.mxu0 0.0
  %1692 = vmatprep.subr.mxu0 0.0
  %1693 = vmatpush2.msra.mxu0 0.0
  %1694 = vmatprep.subr.mxu0 0.0
  %1695 = vmatpush2.msra.mxu0 0.0
  %1696 = vmatprep.subr.mxu0 0.0
  %1697 = vmatpush2.msra.mxu0 0.0
  %1698 = vmatprep.subr.mxu0 0.0
  %1699 = vmatpush2.msra.mxu0 0.0
  %1700 = vmatprep.mubr.f32.mxu0 0.0
  %1701 = vmatmul.mubr.f32.gmra.mxu0 %v1634
  %v1702 = vpop.f32.mrf.mxu0
  %v1703 = vadd.f32 0.0, %v1702
  %v1704 = vpop.f32.mrf.mxu0
  %1705 = vdwg.mxu0
  %v1706 = vadd.f32 %v1630, %v1703
  %v1707 = vxor.u32 %v1706, 2147483648
  %v1708 = vmul.f32 %v1707, 1.442695
  %v1709 = vpow.pop %v1708
  %v1710 = vadd.f32 %v1709, 1.0
  %v1711 = vrcp.pop %v1710
  %v1712 = vmul.f32 1.0, %v1711
  %v1713 = vtanh.pop %v1706
  %1715 = vrot.lane.b32.xlu0 %v1632, 32
  %v1716 = vpop.permute.xlu0 %1715
  %v1718 = vmul.f32 %v1712, %v1716
  %1720 = vrot.lane.b32.xlu0 %v1713, 64
  %v1721 = vpop.permute.xlu0 %1720
  %v1723 = vmul.f32 %v1712, %v1721
  %1725 = vrot.lane.b32.xlu0 %v1723, 32
  %v1726 = vpop.permute.xlu0 %1725
  %v1728 = vadd.f32 %v1718, %v1726
  %v1729 = vtanh.pop %v1728
  %1731 = vrot.lane.b32.xlu0 %v1729, 64
  %v1732 = vpop.permute.xlu0 %1731
  %v1734 = vmul.f32 %v1712, %v1732
  %v1735 = vstv %s1628
  %vm1736 = vcmp.lt.s32.totalorder %v1735, %v67
  %v1737 = vsel %vm1736, 1, 0
  %1738 = vset.pattern.permute.xlu0 0
  %1739 = vperm.xlu0 %1738, %v1737
  %v1740 = vpop.permute.xlu0 %1739
  %vm1741 = vcmp.eq.s32.totalorder %v1740, 1
  %1742 = vrot.lane.b32.xlu0 %v1631, 96
  %v1743 = vpop.permute.xlu0 %1742
  %v1745 = vsel %vm1741, %v1734, %v1743
  %1747 = vrot.lane.b32.xlu0 %v1745, 32
  %v1748 = vpop.permute.xlu0 %1747
  %1750 = vst.msk [vmem:[#allocation4] sm:$0xff] %vm80, %v1748
  %v1751 = vld [vmem:[#allocation5] sm:$0xff]
  %1753 = vrot.lane.b32.xlu0 %v1751, 32
  %v1754 = vpop.permute.xlu0 %1753
  %v1756 = vsel %vm1741, %v1728, %v1754
  %1758 = vrot.lane.b32.xlu0 %v1756, 96
  %v1759 = vpop.permute.xlu0 %1758
  %1761 = vst.msk [vmem:[#allocation5] sm:$0xff] %vm80, %v1759
  %v1762 = vsel %vm1741, %v1734, 0.0
  %1764 = vrot.lane.b32.xlu0 %v1762, 32
  %v1765 = vpop.permute.xlu0 %1764
  %s1767 = scalar_lea.vmem %s55, 16
  %1768 = vst.msk [vmem:[%s1767] sm:$0xff] %vm80, %v1765
  %s1769 = sadd.s32 %s76, 6
  %s1770 = scalar_lea.vmem %s1, 48
  %v1771 = vld [vmem:[%s1770] sm:$0xff]
  %v1772 = vld [vmem:[#allocation2] sm:$0xff]
  %v1773 = vld [vmem:[#allocation3] sm:$0xff]
  %v1775 = vsel %vm80, %v1772, 0
  %1777 = vmatprep.subr.mxu0 0.0
  %1778 = vmatpush1.msra.mxu0 0.0
  %1779 = vmatprep.subr.mxu0 0.0
  %1780 = vmatpush1.msra.mxu0 0.0
  %1781 = vmatprep.subr.mxu0 0.0
  %1782 = vmatpush1.msra.mxu0 0.0
  %1783 = vmatprep.subr.mxu0 0.0
  %1784 = vmatpush1.msra.mxu0 0.0
  %1785 = vmatprep.subr.mxu0 0.0
  %1786 = vmatpush1.msra.mxu0 0.0
  %1787 = vmatprep.subr.mxu0 0.0
  %1788 = vmatpush1.msra.mxu0 0.0
  %1789 = vmatprep.subr.mxu0 0.0
  %1790 = vmatpush1.msra.mxu0 0.0
  %1791 = vmatprep.subr.mxu0 0.0
  %1792 = vmatpush1.msra.mxu0 0.0
  %1793 = vmatprep.subr.mxu0 0.0
  %1794 = vmatpush1.msra.mxu0 0.0
  %1795 = vmatprep.subr.mxu0 0.0
  %1796 = vmatpush1.msra.mxu0 0.0
  %1797 = vmatprep.subr.mxu0 0.0
  %1798 = vmatpush1.msra.mxu0 0.0
  %1799 = vmatprep.subr.mxu0 0.0
  %1800 = vmatpush1.msra.mxu0 0.0
  %1801 = vmatprep.subr.mxu0 0.0
  %1802 = vmatpush1.msra.mxu0 %v71
  %1803 = vmatprep.subr.mxu0 0.0
  %1804 = vmatpush1.msra.mxu0 %v70
  %1805 = vmatprep.subr.mxu0 0.0
  %1806 = vmatpush1.msra.mxu0 %v69
  %1807 = vmatprep.subr.mxu0 0.0
  %1808 = vmatpush1.msra.mxu0 %v68
  %1809 = vmatprep.subr.mxu0 0.0
  %1810 = vmatpush2.msra.mxu0 0.0
  %1811 = vmatprep.subr.mxu0 0.0
  %1812 = vmatpush2.msra.mxu0 0.0
  %1813 = vmatprep.subr.mxu0 0.0
  %1814 = vmatpush2.msra.mxu0 0.0
  %1815 = vmatprep.subr.mxu0 0.0
  %1816 = vmatpush2.msra.mxu0 0.0
  %1817 = vmatprep.subr.mxu0 0.0
  %1818 = vmatpush2.msra.mxu0 0.0
  %1819 = vmatprep.subr.mxu0 0.0
  %1820 = vmatpush2.msra.mxu0 0.0
  %1821 = vmatprep.subr.mxu0 0.0
  %1822 = vmatpush2.msra.mxu0 0.0
  %1823 = vmatprep.subr.mxu0 0.0
  %1824 = vmatpush2.msra.mxu0 0.0
  %1825 = vmatprep.subr.mxu0 0.0
  %1826 = vmatpush2.msra.mxu0 0.0
  %1827 = vmatprep.subr.mxu0 0.0
  %1828 = vmatpush2.msra.mxu0 0.0
  %1829 = vmatprep.subr.mxu0 0.0
  %1830 = vmatpush2.msra.mxu0 0.0
  %1831 = vmatprep.subr.mxu0 0.0
  %1832 = vmatpush2.msra.mxu0 0.0
  %1833 = vmatprep.subr.mxu0 0.0
  %1834 = vmatpush2.msra.mxu0 0.0
  %1835 = vmatprep.subr.mxu0 0.0
  %1836 = vmatpush2.msra.mxu0 0.0
  %1837 = vmatprep.subr.mxu0 0.0
  %1838 = vmatpush2.msra.mxu0 0.0
  %1839 = vmatprep.subr.mxu0 0.0
  %1840 = vmatpush2.msra.mxu0 0.0
  %1841 = vmatprep.mubr.f32.mxu0 0.0
  %1842 = vmatmul.mubr.f32.gmra.mxu0 %v1775
  %v1843 = vpop.f32.mrf.mxu0
  %v1844 = vadd.f32 0.0, %v1843
  %v1845 = vpop.f32.mrf.mxu0
  %1846 = vdwg.mxu0
  %v1847 = vadd.f32 %v1771, %v1844
  %v1848 = vxor.u32 %v1847, 2147483648
  %v1849 = vmul.f32 %v1848, 1.442695
  %v1850 = vpow.pop %v1849
  %v1851 = vadd.f32 %v1850, 1.0
  %v1852 = vrcp.pop %v1851
  %v1853 = vmul.f32 1.0, %v1852
  %v1854 = vtanh.pop %v1847
  %1856 = vrot.lane.b32.xlu0 %v1773, 32
  %v1857 = vpop.permute.xlu0 %1856
  %v1859 = vmul.f32 %v1853, %v1857
  %1861 = vrot.lane.b32.xlu0 %v1854, 64
  %v1862 = vpop.permute.xlu0 %1861
  %v1864 = vmul.f32 %v1853, %v1862
  %1866 = vrot.lane.b32.xlu0 %v1864, 32
  %v1867 = vpop.permute.xlu0 %1866
  %v1869 = vadd.f32 %v1859, %v1867
  %v1870 = vtanh.pop %v1869
  %1872 = vrot.lane.b32.xlu0 %v1870, 64
  %v1873 = vpop.permute.xlu0 %1872
  %v1875 = vmul.f32 %v1853, %v1873
  %v1876 = vstv %s1769
  %vm1877 = vcmp.lt.s32.totalorder %v1876, %v67
  %v1878 = vsel %vm1877, 1, 0
  %1879 = vset.pattern.permute.xlu0 0
  %1880 = vperm.xlu0 %1879, %v1878
  %v1881 = vpop.permute.xlu0 %1880
  %vm1882 = vcmp.eq.s32.totalorder %v1881, 1
  %1883 = vrot.lane.b32.xlu0 %v1772, 96
  %v1884 = vpop.permute.xlu0 %1883
  %v1886 = vsel %vm1882, %v1875, %v1884
  %1888 = vrot.lane.b32.xlu0 %v1886, 32
  %v1889 = vpop.permute.xlu0 %1888
  %1891 = vst.msk [vmem:[#allocation2] sm:$0xff] %vm80, %v1889
  %v1892 = vld [vmem:[#allocation3] sm:$0xff]
  %1894 = vrot.lane.b32.xlu0 %v1892, 32
  %v1895 = vpop.permute.xlu0 %1894
  %v1897 = vsel %vm1882, %v1869, %v1895
  %1899 = vrot.lane.b32.xlu0 %v1897, 96
  %v1900 = vpop.permute.xlu0 %1899
  %1902 = vst.msk [vmem:[#allocation3] sm:$0xff] %vm80, %v1900
  %v1903 = vsel %vm1882, %v1875, 0.0
  %1905 = vrot.lane.b32.xlu0 %v1903, 32
  %v1906 = vpop.permute.xlu0 %1905
  %s1908 = scalar_lea.vmem %s5, 48
  %1909 = vst.msk [vmem:[%s1908] sm:$0xff] %vm80, %v1906
  %s1910 = sadd.s32 %s217, 1
  %s1911 = scalar_lea.vmem %s47, 8
  %v1912 = vld [vmem:[%s1911] sm:$0xff]
  %v1913 = vld [vmem:[#allocation4] sm:$0xff]
  %v1914 = vld [vmem:[#allocation5] sm:$0xff]
  %v1916 = vsel %vm80, %v1913, 0
  %1918 = vmatprep.subr.mxu0 0.0
  %1919 = vmatpush1.msra.mxu0 0.0
  %1920 = vmatprep.subr.mxu0 0.0
  %1921 = vmatpush1.msra.mxu0 0.0
  %1922 = vmatprep.subr.mxu0 0.0
  %1923 = vmatpush1.msra.mxu0 0.0
  %1924 = vmatprep.subr.mxu0 0.0
  %1925 = vmatpush1.msra.mxu0 0.0
  %1926 = vmatprep.subr.mxu0 0.0
  %1927 = vmatpush1.msra.mxu0 0.0
  %1928 = vmatprep.subr.mxu0 0.0
  %1929 = vmatpush1.msra.mxu0 0.0
  %1930 = vmatprep.subr.mxu0 0.0
  %1931 = vmatpush1.msra.mxu0 0.0
  %1932 = vmatprep.subr.mxu0 0.0
  %1933 = vmatpush1.msra.mxu0 0.0
  %1934 = vmatprep.subr.mxu0 0.0
  %1935 = vmatpush1.msra.mxu0 0.0
  %1936 = vmatprep.subr.mxu0 0.0
  %1937 = vmatpush1.msra.mxu0 0.0
  %1938 = vmatprep.subr.mxu0 0.0
  %1939 = vmatpush1.msra.mxu0 0.0
  %1940 = vmatprep.subr.mxu0 0.0
  %1941 = vmatpush1.msra.mxu0 0.0
  %1942 = vmatprep.subr.mxu0 0.0
  %1943 = vmatpush1.msra.mxu0 %v75
  %1944 = vmatprep.subr.mxu0 0.0
  %1945 = vmatpush1.msra.mxu0 %v74
  %1946 = vmatprep.subr.mxu0 0.0
  %1947 = vmatpush1.msra.mxu0 %v73
  %1948 = vmatprep.subr.mxu0 0.0
  %1949 = vmatpush1.msra.mxu0 %v72
  %1950 = vmatprep.subr.mxu0 0.0
  %1951 = vmatpush2.msra.mxu0 0.0
  %1952 = vmatprep.subr.mxu0 0.0
  %1953 = vmatpush2.msra.mxu0 0.0
  %1954 = vmatprep.subr.mxu0 0.0
  %1955 = vmatpush2.msra.mxu0 0.0
  %1956 = vmatprep.subr.mxu0 0.0
  %1957 = vmatpush2.msra.mxu0 0.0
  %1958 = vmatprep.subr.mxu0 0.0
  %1959 = vmatpush2.msra.mxu0 0.0
  %1960 = vmatprep.subr.mxu0 0.0
  %1961 = vmatpush2.msra.mxu0 0.0
  %1962 = vmatprep.subr.mxu0 0.0
  %1963 = vmatpush2.msra.mxu0 0.0
  %1964 = vmatprep.subr.mxu0 0.0
  %1965 = vmatpush2.msra.mxu0 0.0
  %1966 = vmatprep.subr.mxu0 0.0
  %1967 = vmatpush2.msra.mxu0 0.0
  %1968 = vmatprep.subr.mxu0 0.0
  %1969 = vmatpush2.msra.mxu0 0.0
  %1970 = vmatprep.subr.mxu0 0.0
  %1971 = vmatpush2.msra.mxu0 0.0
  %1972 = vmatprep.subr.mxu0 0.0
  %1973 = vmatpush2.msra.mxu0 0.0
  %1974 = vmatprep.subr.mxu0 0.0
  %1975 = vmatpush2.msra.mxu0 0.0
  %1976 = vmatprep.subr.mxu0 0.0
  %1977 = vmatpush2.msra.mxu0 0.0
  %1978 = vmatprep.subr.mxu0 0.0
  %1979 = vmatpush2.msra.mxu0 0.0
  %1980 = vmatprep.subr.mxu0 0.0
  %1981 = vmatpush2.msra.mxu0 0.0
  %1982 = vmatprep.mubr.f32.mxu0 0.0
  %1983 = vmatmul.mubr.f32.gmra.mxu0 %v1916
  %v1984 = vpop.f32.mrf.mxu0
  %v1985 = vadd.f32 0.0, %v1984
  %v1986 = vpop.f32.mrf.mxu0
  %1987 = vdwg.mxu0
  %v1988 = vadd.f32 %v1912, %v1985
  %v1989 = vxor.u32 %v1988, 2147483648
  %v1990 = vmul.f32 %v1989, 1.442695
  %v1991 = vpow.pop %v1990
  %v1992 = vadd.f32 %v1991, 1.0
  %v1993 = vrcp.pop %v1992
  %v1994 = vmul.f32 1.0, %v1993
  %v1995 = vtanh.pop %v1988
  %1997 = vrot.lane.b32.xlu0 %v1914, 32
  %v1998 = vpop.permute.xlu0 %1997
  %v2000 = vmul.f32 %v1994, %v1998
  %2002 = vrot.lane.b32.xlu0 %v1995, 64
  %v2003 = vpop.permute.xlu0 %2002
  %v2005 = vmul.f32 %v1994, %v2003
  %2007 = vrot.lane.b32.xlu0 %v2005, 32
  %v2008 = vpop.permute.xlu0 %2007
  %v2010 = vadd.f32 %v2000, %v2008
  %v2011 = vtanh.pop %v2010
  %2013 = vrot.lane.b32.xlu0 %v2011, 64
  %v2014 = vpop.permute.xlu0 %2013
  %v2016 = vmul.f32 %v1994, %v2014
  %v2017 = vstv %s1910
  %vm2018 = vcmp.lt.s32.totalorder %v2017, %v67
  %v2019 = vsel %vm2018, 1, 0
  %2020 = vset.pattern.permute.xlu0 0
  %2021 = vperm.xlu0 %2020, %v2019
  %v2022 = vpop.permute.xlu0 %2021
  %vm2023 = vcmp.eq.s32.totalorder %v2022, 1
  %2024 = vrot.lane.b32.xlu0 %v1913, 96
  %v2025 = vpop.permute.xlu0 %2024
  %v2027 = vsel %vm2023, %v2016, %v2025
  %2029 = vrot.lane.b32.xlu0 %v2027, 32
  %v2030 = vpop.permute.xlu0 %2029
  %2032 = vst.msk [vmem:[#allocation4] sm:$0xff] %vm80, %v2030
  %v2033 = vld [vmem:[#allocation5] sm:$0xff]
  %2035 = vrot.lane.b32.xlu0 %v2033, 32
  %v2036 = vpop.permute.xlu0 %2035
  %v2038 = vsel %vm2023, %v2010, %v2036
  %2040 = vrot.lane.b32.xlu0 %v2038, 96
  %v2041 = vpop.permute.xlu0 %2040
  %2043 = vst.msk [vmem:[#allocation5] sm:$0xff] %vm80, %v2041
  %v2044 = vsel %vm2023, %v2016, 0.0
  %2046 = vrot.lane.b32.xlu0 %v2044, 32
  %v2047 = vpop.permute.xlu0 %2046
  %s2049 = scalar_lea.vmem %s55, 8
  %2050 = vst.msk [vmem:[%s2049] sm:$0xff] %vm80, %v2047
  %s2051 = sadd.s32 %s76, 7
  %s2052 = scalar_lea.vmem %s1, 56
  %v2053 = vld [vmem:[%s2052] sm:$0xff]
  %v2054 = vld [vmem:[#allocation2] sm:$0xff]
  %v2055 = vld [vmem:[#allocation3] sm:$0xff]
  %v2057 = vsel %vm80, %v2054, 0
  %2059 = vmatprep.subr.mxu0 0.0
  %2060 = vmatpush1.msra.mxu0 0.0
  %2061 = vmatprep.subr.mxu0 0.0
  %2062 = vmatpush1.msra.mxu0 0.0
  %2063 = vmatprep.subr.mxu0 0.0
  %2064 = vmatpush1.msra.mxu0 0.0
  %2065 = vmatprep.subr.mxu0 0.0
  %2066 = vmatpush1.msra.mxu0 0.0
  %2067 = vmatprep.subr.mxu0 0.0
  %2068 = vmatpush1.msra.mxu0 0.0
  %2069 = vmatprep.subr.mxu0 0.0
  %2070 = vmatpush1.msra.mxu0 0.0
  %2071 = vmatprep.subr.mxu0 0.0
  %2072 = vmatpush1.msra.mxu0 0.0
  %2073 = vmatprep.subr.mxu0 0.0
  %2074 = vmatpush1.msra.mxu0 0.0
  %2075 = vmatprep.subr.mxu0 0.0
  %2076 = vmatpush1.msra.mxu0 0.0
  %2077 = vmatprep.subr.mxu0 0.0
  %2078 = vmatpush1.msra.mxu0 0.0
  %2079 = vmatprep.subr.mxu0 0.0
  %2080 = vmatpush1.msra.mxu0 0.0
  %2081 = vmatprep.subr.mxu0 0.0
  %2082 = vmatpush1.msra.mxu0 0.0
  %2083 = vmatprep.subr.mxu0 0.0
  %2084 = vmatpush1.msra.mxu0 %v71
  %2085 = vmatprep.subr.mxu0 0.0
  %2086 = vmatpush1.msra.mxu0 %v70
  %2087 = vmatprep.subr.mxu0 0.0
  %2088 = vmatpush1.msra.mxu0 %v69
  %2089 = vmatprep.subr.mxu0 0.0
  %2090 = vmatpush1.msra.mxu0 %v68
  %2091 = vmatprep.subr.mxu0 0.0
  %2092 = vmatpush2.msra.mxu0 0.0
  %2093 = vmatprep.subr.mxu0 0.0
  %2094 = vmatpush2.msra.mxu0 0.0
  %2095 = vmatprep.subr.mxu0 0.0
  %2096 = vmatpush2.msra.mxu0 0.0
  %2097 = vmatprep.subr.mxu0 0.0
  %2098 = vmatpush2.msra.mxu0 0.0
  %2099 = vmatprep.subr.mxu0 0.0
  %2100 = vmatpush2.msra.mxu0 0.0
  %2101 = vmatprep.subr.mxu0 0.0
  %2102 = vmatpush2.msra.mxu0 0.0
  %2103 = vmatprep.subr.mxu0 0.0
  %2104 = vmatpush2.msra.mxu0 0.0
  %2105 = vmatprep.subr.mxu0 0.0
  %2106 = vmatpush2.msra.mxu0 0.0
  %2107 = vmatprep.subr.mxu0 0.0
  %2108 = vmatpush2.msra.mxu0 0.0
  %2109 = vmatprep.subr.mxu0 0.0
  %2110 = vmatpush2.msra.mxu0 0.0
  %2111 = vmatprep.subr.mxu0 0.0
  %2112 = vmatpush2.msra.mxu0 0.0
  %2113 = vmatprep.subr.mxu0 0.0
  %2114 = vmatpush2.msra.mxu0 0.0
  %2115 = vmatprep.subr.mxu0 0.0
  %2116 = vmatpush2.msra.mxu0 0.0
  %2117 = vmatprep.subr.mxu0 0.0
  %2118 = vmatpush2.msra.mxu0 0.0
  %2119 = vmatprep.subr.mxu0 0.0
  %2120 = vmatpush2.msra.mxu0 0.0
  %2121 = vmatprep.subr.mxu0 0.0
  %2122 = vmatpush2.msra.mxu0 0.0
  %2123 = vmatprep.mubr.f32.mxu0 0.0
  %2124 = vmatmul.mubr.f32.gmra.mxu0 %v2057
  %v2125 = vpop.f32.mrf.mxu0
  %v2126 = vadd.f32 0.0, %v2125
  %v2127 = vpop.f32.mrf.mxu0
  %2128 = vdwg.mxu0
  %v2129 = vadd.f32 %v2053, %v2126
  %v2130 = vxor.u32 %v2129, 2147483648
  %v2131 = vmul.f32 %v2130, 1.442695
  %v2132 = vpow.pop %v2131
  %v2133 = vadd.f32 %v2132, 1.0
  %v2134 = vrcp.pop %v2133
  %v2135 = vmul.f32 1.0, %v2134
  %v2136 = vtanh.pop %v2129
  %2138 = vrot.lane.b32.xlu0 %v2055, 32
  %v2139 = vpop.permute.xlu0 %2138
  %v2141 = vmul.f32 %v2135, %v2139
  %2143 = vrot.lane.b32.xlu0 %v2136, 64
  %v2144 = vpop.permute.xlu0 %2143
  %v2146 = vmul.f32 %v2135, %v2144
  %2148 = vrot.lane.b32.xlu0 %v2146, 32
  %v2149 = vpop.permute.xlu0 %2148
  %v2151 = vadd.f32 %v2141, %v2149
  %v2152 = vtanh.pop %v2151
  %2154 = vrot.lane.b32.xlu0 %v2152, 64
  %v2155 = vpop.permute.xlu0 %2154
  %v2157 = vmul.f32 %v2135, %v2155
  %v2158 = vstv %s2051
  %vm2159 = vcmp.lt.s32.totalorder %v2158, %v67
  %v2160 = vsel %vm2159, 1, 0
  %2161 = vset.pattern.permute.xlu0 0
  %2162 = vperm.xlu0 %2161, %v2160
  %v2163 = vpop.permute.xlu0 %2162
  %vm2164 = vcmp.eq.s32.totalorder %v2163, 1
  %2165 = vrot.lane.b32.xlu0 %v2054, 96
  %v2166 = vpop.permute.xlu0 %2165
  %v2168 = vsel %vm2164, %v2157, %v2166
  %2170 = vrot.lane.b32.xlu0 %v2168, 32
  %v2171 = vpop.permute.xlu0 %2170
  %2173 = vst.msk [vmem:[#allocation2] sm:$0xff] %vm80, %v2171
  %v2174 = vld [vmem:[#allocation3] sm:$0xff]
  %2176 = vrot.lane.b32.xlu0 %v2174, 32
  %v2177 = vpop.permute.xlu0 %2176
  %v2179 = vsel %vm2164, %v2151, %v2177
  %2181 = vrot.lane.b32.xlu0 %v2179, 96
  %v2182 = vpop.permute.xlu0 %2181
  %2184 = vst.msk [vmem:[#allocation3] sm:$0xff] %vm80, %v2182
  %v2185 = vsel %vm2164, %v2157, 0.0
  %2187 = vrot.lane.b32.xlu0 %v2185, 32
  %v2188 = vpop.permute.xlu0 %2187
  %s2190 = scalar_lea.vmem %s5, 56
  %2191 = vst.msk [vmem:[%s2190] sm:$0xff] %vm80, %v2188
  %v2192 = vld [vmem:[%s47] sm:$0xff]
  %v2193 = vld [vmem:[#allocation4] sm:$0xff]
  %v2194 = vld [vmem:[#allocation5] sm:$0xff]
  %v2196 = vsel %vm80, %v2193, 0
  %2198 = vmatprep.subr.mxu0 0.0
  %2199 = vmatpush1.msra.mxu0 0.0
  %2200 = vmatprep.subr.mxu0 0.0
  %2201 = vmatpush1.msra.mxu0 0.0
  %2202 = vmatprep.subr.mxu0 0.0
  %2203 = vmatpush1.msra.mxu0 0.0
  %2204 = vmatprep.subr.mxu0 0.0
  %2205 = vmatpush1.msra.mxu0 0.0
  %2206 = vmatprep.subr.mxu0 0.0
  %2207 = vmatpush1.msra.mxu0 0.0
  %2208 = vmatprep.subr.mxu0 0.0
  %2209 = vmatpush1.msra.mxu0 0.0
  %2210 = vmatprep.subr.mxu0 0.0
  %2211 = vmatpush1.msra.mxu0 0.0
  %2212 = vmatprep.subr.mxu0 0.0
  %2213 = vmatpush1.msra.mxu0 0.0
  %2214 = vmatprep.subr.mxu0 0.0
  %2215 = vmatpush1.msra.mxu0 0.0
  %2216 = vmatprep.subr.mxu0 0.0
  %2217 = vmatpush1.msra.mxu0 0.0
  %2218 = vmatprep.subr.mxu0 0.0
  %2219 = vmatpush1.msra.mxu0 0.0
  %2220 = vmatprep.subr.mxu0 0.0
  %2221 = vmatpush1.msra.mxu0 0.0
  %2222 = vmatprep.subr.mxu0 0.0
  %2223 = vmatpush1.msra.mxu0 %v75
  %2224 = vmatprep.subr.mxu0 0.0
  %2225 = vmatpush1.msra.mxu0 %v74
  %2226 = vmatprep.subr.mxu0 0.0
  %2227 = vmatpush1.msra.mxu0 %v73
  %2228 = vmatprep.subr.mxu0 0.0
  %2229 = vmatpush1.msra.mxu0 %v72
  %2230 = vmatprep.subr.mxu0 0.0
  %2231 = vmatpush2.msra.mxu0 0.0
  %2232 = vmatprep.subr.mxu0 0.0
  %2233 = vmatpush2.msra.mxu0 0.0
  %2234 = vmatprep.subr.mxu0 0.0
  %2235 = vmatpush2.msra.mxu0 0.0
  %2236 = vmatprep.subr.mxu0 0.0
  %2237 = vmatpush2.msra.mxu0 0.0
  %2238 = vmatprep.subr.mxu0 0.0
  %2239 = vmatpush2.msra.mxu0 0.0
  %2240 = vmatprep.subr.mxu0 0.0
  %2241 = vmatpush2.msra.mxu0 0.0
  %2242 = vmatprep.subr.mxu0 0.0
  %2243 = vmatpush2.msra.mxu0 0.0
  %2244 = vmatprep.subr.mxu0 0.0
  %2245 = vmatpush2.msra.mxu0 0.0
  %2246 = vmatprep.subr.mxu0 0.0
  %2247 = vmatpush2.msra.mxu0 0.0
  %2248 = vmatprep.subr.mxu0 0.0
  %2249 = vmatpush2.msra.mxu0 0.0
  %2250 = vmatprep.subr.mxu0 0.0
  %2251 = vmatpush2.msra.mxu0 0.0
  %2252 = vmatprep.subr.mxu0 0.0
  %2253 = vmatpush2.msra.mxu0 0.0
  %2254 = vmatprep.subr.mxu0 0.0
  %2255 = vmatpush2.msra.mxu0 0.0
  %2256 = vmatprep.subr.mxu0 0.0
  %2257 = vmatpush2.msra.mxu0 0.0
  %2258 = vmatprep.subr.mxu0 0.0
  %2259 = vmatpush2.msra.mxu0 0.0
  %2260 = vmatprep.subr.mxu0 0.0
  %2261 = vmatpush2.msra.mxu0 0.0
  %2262 = vmatprep.mubr.f32.mxu0 0.0
  %2263 = vmatmul.mubr.f32.gmra.mxu0 %v2196
  %v2264 = vpop.f32.mrf.mxu0
  %v2265 = vadd.f32 0.0, %v2264
  %v2266 = vpop.f32.mrf.mxu0
  %2267 = vdwg.mxu0
  %v2268 = vadd.f32 %v2192, %v2265
  %v2269 = vxor.u32 %v2268, 2147483648
  %v2270 = vmul.f32 %v2269, 1.442695
  %v2271 = vpow.pop %v2270
  %v2272 = vadd.f32 %v2271, 1.0
  %v2273 = vrcp.pop %v2272
  %v2274 = vmul.f32 1.0, %v2273
  %v2275 = vtanh.pop %v2268
  %2277 = vrot.lane.b32.xlu0 %v2194, 32
  %v2278 = vpop.permute.xlu0 %2277
  %v2280 = vmul.f32 %v2274, %v2278
  %2282 = vrot.lane.b32.xlu0 %v2275, 64
  %v2283 = vpop.permute.xlu0 %2282
  %v2285 = vmul.f32 %v2274, %v2283
  %2287 = vrot.lane.b32.xlu0 %v2285, 32
  %v2288 = vpop.permute.xlu0 %2287
  %v2290 = vadd.f32 %v2280, %v2288
  %v2291 = vtanh.pop %v2290
  %2293 = vrot.lane.b32.xlu0 %v2291, 64
  %v2294 = vpop.permute.xlu0 %2293
  %v2296 = vmul.f32 %v2274, %v2294
  %v2297 = vstv %s217
  %vm2298 = vcmp.lt.s32.totalorder %v2297, %v67
  %v2299 = vsel %vm2298, 1, 0
  %2300 = vset.pattern.permute.xlu0 0
  %2301 = vperm.xlu0 %2300, %v2299
  %v2302 = vpop.permute.xlu0 %2301
  %vm2303 = vcmp.eq.s32.totalorder %v2302, 1
  %2304 = vrot.lane.b32.xlu0 %v2193, 96
  %v2305 = vpop.permute.xlu0 %2304
  %v2307 = vsel %vm2303, %v2296, %v2305
  %2309 = vrot.lane.b32.xlu0 %v2307, 32
  %v2310 = vpop.permute.xlu0 %2309
  %2312 = vst.msk [vmem:[#allocation4] sm:$0xff] %vm80, %v2310
  %v2313 = vld [vmem:[#allocation5] sm:$0xff]
  %2315 = vrot.lane.b32.xlu0 %v2313, 32
  %v2316 = vpop.permute.xlu0 %2315
  %v2318 = vsel %vm2303, %v2290, %v2316
  %2320 = vrot.lane.b32.xlu0 %v2318, 96
  %v2321 = vpop.permute.xlu0 %2320
  %2323 = vst.msk [vmem:[#allocation5] sm:$0xff] %vm80, %v2321
  %v2324 = vsel %vm2303, %v2296, 0.0
  %2326 = vrot.lane.b32.xlu0 %v2324, 32
  %v2327 = vpop.permute.xlu0 %2326
  %2329 = vst.msk [vmem:[%s55] sm:$0xff] %vm80, %v2327
  %s2330 = ssub.s32 0, 0
  %s2331 = smul.u32 8, %s2330
  %p2332 = scmp.lt.s32.totalorder %s2331, 7
  %s2333 = scalar_select %p2332, %s2331, 7
  %s2334 = smul.addr %s2333, 8
  %s2335 = scalar_lea.vmem %s6, %s2334
  // Predicated region
  $region26: #{bi_lstm_forward.6} parent=0 // pred_check
    _
  $region27: #{bi_lstm_forward.6} parent=0 // pred_check_branch
    %2337 = sbr.rel (0) target = $region29
  $region28: #{bi_lstm_forward.6} parent=0 // pred_region
    _
  $region29: #{bi_lstm_forward.6} parent=0 // pred_fallthru
    _
  // Predicated region
  $region30: #{bi_lstm_forward.6} parent=0 // pred_check
    _
  $region31: #{bi_lstm_forward.6} parent=0 // pred_check_branch
    %2339 = sbr.rel (0) target = $region33
  $region32: #{bi_lstm_forward.6} parent=0 // pred_region
    %s2340 = ssub.s32 0, 0
    %s2341 = smul.u32 8, %s2340
  $region33: #{bi_lstm_forward.6} parent=0 // pred_fallthru
    _
  // Predicated region
  $region34: #{bi_lstm_forward.6} parent=0 // pred_check
    _
  $region35: #{bi_lstm_forward.6} parent=0 // pred_check_branch
    %2343 = sbr.rel (0) target = $region37
  $region36: #{bi_lstm_forward.6} parent=0 // pred_region
    _
  $region37: #{bi_lstm_forward.6} parent=0 // pred_fallthru
    _
  // Predicated region
  $region38: #{bi_lstm_forward.6} parent=0 // pred_check
    _
  $region39: #{bi_lstm_forward.6} parent=0 // pred_check_branch
    %2345 = sbr.rel (0) target = $region41
  $region40: #{bi_lstm_forward.6} parent=0 // pred_region
    %s2346 = ssub.s32 0, 0
    %s2347 = smul.u32 8, %s2346
    %p2348 = scmp.lt.s32.totalorder %s2347, 7
    %s2349 = scalar_select %p2348, %s2347, 7
    %s2350 = smul.addr %s2349, 8
    %s2351 = scalar_lea.vmem %s6, %s2350
  $region41: #{bi_lstm_forward.6} parent=0 // pred_fallthru
    _

</llo_original>
